<compile_context>
chip_gen: v7x
topology: tpu7x:2x2x1
jax: 0.10.0
libtpu: 0.0.40
codegen_flags: <defaults>
</compile_context>

<pallas_src>
import functools

import jax
import jax.numpy as jnp
from jax.experimental import pallas as pl
from jax.experimental.pallas import tpu as pltpu

# ----------------------------- model hyper-params ---------------------------
BATCH = 2
IN_CH = 3
IMG = 16
PATCH = 4
NUM_PATCHES = (IMG // PATCH) ** 2          # 16
NUM_TOKENS = NUM_PATCHES + 1               # 17 (patches + CLS)
EMBED_DIM = 128                            # lane-dense small-scale stand-in for ViT-B's 768
DEPTH = 2                                  # small-scale stand-in for ViT-B's 12
NUM_HEADS = 4
HEAD_DIM = EMBED_DIM // NUM_HEADS          # 32
MLP_DIM = 4 * EMBED_DIM                    # 512
NUM_CLASSES = 10
NC_PAD = 128                               # classifier output padded lane-dense; sliced to 10 outside
CPP = IN_CH * PATCH * PATCH                # 48 pixels per patch
CPP_PAD = 128                              # patch pixels padded lane-dense (zero rows in patch_w)
EMBED_MAG = 16.0
VAR_MIN = 0.1
LN_EPS = 1e-6
W_DTYPE = jnp.bfloat16                     # matmul-weight storage dtype (f32 accumulation)

_GLOBAL_PRE = ('patch_w', 'patch_b', 'cls_token', 'pos_embed')
_LAYER = ('ln1_w', 'ln1_b', 'wqkv', 'bqkv', 'wo', 'bo',
          'ln2_w', 'ln2_b', 'fc1_w', 'fc1_b', 'fc2_w', 'fc2_b')
_GLOBAL_POST = ('norm_w', 'norm_b', 'clf_wt', 'clf_b', 'clf_w', 'deltas')


# ------------------------------- kernel helpers -----------------------------
def _layernorm(x, w, b, eps=LN_EPS):
    mu = jnp.mean(x, axis=-1, keepdims=True)
    var = jnp.mean(jnp.square(x - mu), axis=-1, keepdims=True)
    return (x - mu) * jax.lax.rsqrt(var + eps) * w + b


def _gelu(x):
    # TODO(synk): PyTorch nn.GELU uses exact erf; tanh approximation used here
    # (EUP-friendly, numerically very close).
    return 0.5 * x * (1.0 + jnp.tanh(0.7978845608028654 * (x + 0.044715 * x * x * x)))


# --------------------------------- fused kernel ------------------------------
def _dino_ccg_kernel(patches_ref,
                     patch_w, patch_b, cls_tok, pos_emb,
                     ln1_w, ln1_b, wqkv, bqkv, wo, bo,
                     ln2_w, ln2_b, fc1_w, fc1_b, fc2_w, fc2_b,
                     norm_w, norm_b, clf_wt, clf_b, clf_w, deltas,
                     sigma_sm,
                     logits_ref, nemb_ref, means_ref, sig2_ref,
                     xb_ref,
                     *, batch, n_tok, num_heads, embed_mag, var_min):
    l = pl.program_id(0)
    n_layers = pl.num_programs(0)
    B, T, H = batch, n_tok, num_heads
    D = xb_ref.shape[-1]
    hd = D // H
    npatch = T - 1
    scale = 1.0 / float(hd) ** 0.5

    # ---------- step-0 prologue: patch embed + CLS + positional embedding ----------
    @pl.when(l == 0)
    def _():
        tok = jnp.dot(patches_ref[...], patch_w[...],
                      preferred_element_type=jnp.float32) + patch_b[...]  # (B*NP, D)
        rows = []
        for b in range(B):
            rows.append(cls_tok[...])
            rows.append(tok[b * npatch:(b + 1) * npatch, :])
        x0 = jnp.concatenate(rows, axis=0)                                # (B*T, D)
        pos = jnp.concatenate([pos_emb[...]] * B, axis=0)                 # (B*T, D)
        xb_ref[...] = x0 + pos

    x = xb_ref[...]                                                       # (B*T, D)

    # ---------- transformer block `l` (batch fused into the token dim) -------------
    h1 = _layernorm(x, ln1_w[...], ln1_b[...])
    qkv = jnp.dot(h1.astype(W_DTYPE), wqkv[...],
                  preferred_element_type=jnp.float32) + bqkv[...]         # (B*T, 3D)

    def to_heads(m):                                                      # (B*T, D) -> (B*H, T, hd)
        parts = []
        for b in range(B):
            blk = m[b * T:(b + 1) * T, :]
            for h in range(H):
                parts.append(blk[:, h * hd:(h + 1) * hd])
        return jnp.stack(parts, axis=0)

    q = to_heads(qkv[:, 0:D])
    k = to_heads(qkv[:, D:2 * D])
    v = to_heads(qkv[:, 2 * D:3 * D])

    s = jnp.einsum('bqe,bke->bqk', q, k,
                   preferred_element_type=jnp.float32) * scale            # (B*H, T, T)
    s = s - jnp.max(s, axis=-1, keepdims=True)
    p = jnp.exp(s)
    p = p * pl.reciprocal(jnp.sum(p, axis=-1, keepdims=True), approx=True)
    o = jnp.einsum('bqk,bke->bqe', p, v,
                   preferred_element_type=jnp.float32)                    # (B*H, T, hd)

    # heads back to lanes: (B*H, T, hd) -> (B*T, D), one lane-dense output projection
    ctx = jnp.concatenate(
        [jnp.concatenate([o[b * H + h] for h in range(H)], axis=-1)
         for b in range(B)], axis=0)                                      # (B*T, D)

    x = x + jnp.dot(ctx.astype(W_DTYPE), wo[...],
                    preferred_element_type=jnp.float32) + bo[...]

    # ---------------- MLP (pre-LN) ----------------
    h2 = _layernorm(x, ln2_w[...], ln2_b[...])
    mid = _gelu(jnp.dot(h2.astype(W_DTYPE), fc1_w[...],
                        preferred_element_type=jnp.float32) + fc1_b[...])
    x = x + jnp.dot(mid.astype(W_DTYPE), fc2_w[...],
                    preferred_element_type=jnp.float32) + fc2_b[...]

    xb_ref[...] = x

    # ---------- last-step epilogue: final LN on CLS rows + CCG head ----------
    @pl.when(l == n_layers - 1)
    def _():
        cls_all = jnp.concatenate([x[b * T:b * T + 1, :] for b in range(B)], axis=0)  # (B, D)
        # DINO returns norm(x)[:, 0]; LayerNorm is per-token so LN the CLS rows only.
        e = _layernorm(cls_all, norm_w[...], norm_b[...])
        # norm_embeds = embed_mag * F.normalize(e, dim=1)  (eps=1e-12; exact divide)
        nrm = jnp.sqrt(jnp.sum(e * e, axis=-1, keepdims=True))
        ne = embed_mag * e / jnp.maximum(nrm, 1e-12)
        nemb_ref[...] = ne
        # logits = classifier(norm_embeds); classifier weight pre-transposed (D, NC_PAD)
        logits_ref[...] = jnp.dot(ne, clf_wt[...],
                                  preferred_element_type=jnp.float32) + clf_b[...]
        # gaussian_params: sigma2s = (sigma + deltas)**2 + var_min ; means = W * sigma2s
        sig2 = jnp.square(sigma_sm[0, 0] + deltas[...]) + var_min          # (1, D)
        sig2_ref[...] = sig2
        means_ref[...] = clf_w[...] * sig2                                 # (NC, D)


# ------------------------------ pallas wrapper -------------------------------
@jax.jit
def dino_ccg_forward(params, x):
    # layout: x is NCHW (B, 3, 16, 16)
    b, c, hgt, wid = x.shape
    p = PATCH
    nh, nw = hgt // p, wid // p
    # patchify (glue): non-overlapping PxP patches, (c, i, j)-major to match Conv2d weights
    patches = x.reshape(b, c, nh, p, nw, p).transpose(0, 2, 4, 1, 3, 5)
    patches = patches.reshape(b * nh * nw, c * p * p)
    patches = jnp.pad(patches, ((0, 0), (0, CPP_PAD - c * p * p)))        # lane-dense K
    patches = patches.astype(W_DTYPE)

    n_tok = nh * nw + 1
    bt = b * n_tok

    def global_spec(a):  # full array, resident across all grid steps (fetched once)
        return pl.BlockSpec(a.shape, lambda l, _n=a.ndim: (0,) * _n)

    def layer_spec(a):   # per-layer weight block, prefetched for step l+1 behind step l
        return pl.BlockSpec((None,) + a.shape[1:],
                            lambda l, _n=a.ndim - 1: (l,) + (0,) * _n)

    args = ([patches]
            + [params[n] for n in _GLOBAL_PRE]
            + [params[n] for n in _LAYER]
            + [params[n] for n in _GLOBAL_POST]
            + [params['sigma']])
    in_specs = ([global_spec(patches)]
                + [global_spec(params[n]) for n in _GLOBAL_PRE]
                + [layer_spec(params[n]) for n in _LAYER]
                + [global_spec(params[n]) for n in _GLOBAL_POST]
                + [pl.BlockSpec(memory_space=pltpu.MemorySpace.SMEM)])    # sigma scalar

    kernel = functools.partial(
        _dino_ccg_kernel, batch=b, n_tok=n_tok, num_heads=NUM_HEADS,
        embed_mag=EMBED_MAG, var_min=VAR_MIN)

    logits_pad, norm_embeds, means, sig2 = pl.pallas_call(
        kernel,
        out_shape=(jax.ShapeDtypeStruct((b, NC_PAD), jnp.float32),
                   jax.ShapeDtypeStruct((b, EMBED_DIM), jnp.float32),
                   jax.ShapeDtypeStruct((NUM_CLASSES, EMBED_DIM), jnp.float32),
                   jax.ShapeDtypeStruct((1, EMBED_DIM), jnp.float32)),
        grid=(DEPTH,),
        in_specs=in_specs,
        out_specs=(pl.BlockSpec((b, NC_PAD), lambda l: (0, 0)),
                   pl.BlockSpec((b, EMBED_DIM), lambda l: (0, 0)),
                   pl.BlockSpec((NUM_CLASSES, EMBED_DIM), lambda l: (0, 0)),
                   pl.BlockSpec((1, EMBED_DIM), lambda l: (0, 0))),
        scratch_shapes=[pltpu.VMEM((bt, EMBED_DIM), jnp.float32)],        # token carry
        compiler_params=pltpu.CompilerParams(
            dimension_semantics=("arbitrary",)),
    )(*args)

    return (logits_pad[:, :NUM_CLASSES], norm_embeds, means, sig2.reshape(-1))


# ----------------------------- params (synthetic) -----------------------------
def init_params(key):
    d, nc, t, dm = EMBED_DIM, NUM_CLASSES, NUM_TOKENS, MLP_DIM
    ks = iter(jax.random.split(key, 16))

    def nrm(shape):
        return 0.02 * jax.random.normal(next(ks), shape, dtype=jnp.float32)

    # Patch-embed Conv2d(3, D, P, P) flattened, stored (K, N), zero-padded to lane-dense K.
    patch_w = jnp.zeros((CPP_PAD, d), jnp.float32).at[:CPP].set(nrm((CPP, d)))
    clf_w = nrm((nc, d))                                      # PyTorch Linear layout (NC, D)
    clf_wt = jnp.zeros((d, NC_PAD), jnp.float32).at[:, :nc].set(clf_w.T)

    params = {
        'patch_w': patch_w.astype(W_DTYPE),
        'patch_b': jnp.zeros((1, d), jnp.float32),
        'cls_token': nrm((1, d)),
        'pos_embed': nrm((t, d)),
        # per-block weights stacked along DEPTH; QKV fused (D, 3D); all matmul weights
        # in MXU-native (K, N) layout, big ones stored bf16 (f32 accumulation in-kernel)
        'ln1_w': jnp.ones((DEPTH, 1, d), jnp.float32),
        'ln1_b': jnp.zeros((DEPTH, 1, d), jnp.float32),
        'wqkv': nrm((DEPTH, d, 3 * d)).astype(W_DTYPE),
        'bqkv': jnp.zeros((DEPTH, 1, 3 * d), jnp.float32),
        'wo': nrm((DEPTH, d, d)).astype(W_DTYPE),
        'bo': jnp.zeros((DEPTH, 1, d), jnp.float32),
        'ln2_w': jnp.ones((DEPTH, 1, d), jnp.float32),
        'ln2_b': jnp.zeros((DEPTH, 1, d), jnp.float32),
        'fc1_w': nrm((DEPTH, d, dm)).astype(W_DTYPE),
        'fc1_b': jnp.zeros((DEPTH, 1, dm), jnp.float32),
        'fc2_w': nrm((DEPTH, dm, d)).astype(W_DTYPE),
        'fc2_b': jnp.zeros((DEPTH, 1, d), jnp.float32),
        'norm_w': jnp.ones((1, d), jnp.float32),              # final backbone LN
        'norm_b': jnp.zeros((1, d), jnp.float32),
        'clf_wt': clf_wt,                                     # logits matmul (K, N), padded
        'clf_b': jnp.zeros((1, NC_PAD), jnp.float32),
        'clf_w': clf_w,                                       # for means (elementwise)
        'sigma': jnp.ones((1, 1), jnp.float32),               # torch.ones((1,)) -> SMEM scalar
        'deltas': jnp.zeros((1, d), jnp.float32),             # torch.zeros((embed_len,))
    }
    return params


# ---------------------------------- main -------------------------------------
if __name__ == "__main__":
    key = jax.random.PRNGKey(0)
    pkey, xkey = jax.random.split(key)
    params = init_params(pkey)
    x = jax.random.normal(xkey, (BATCH, IN_CH, IMG, IMG), dtype=jnp.float32)

    logits, norm_embeds, means, sigma2s = dino_ccg_forward(params, x)
    jax.block_until_ready((logits, norm_embeds, means, sigma2s))

    assert logits.shape == (BATCH, NUM_CLASSES)
    assert norm_embeds.shape == (BATCH, EMBED_DIM)
    assert means.shape == (NUM_CLASSES, EMBED_DIM)
    assert sigma2s.shape == (EMBED_DIM,)
    print("KERNEL_OK")
</pallas_src>

<mosaic_0001>
module attributes {stable_mosaic.version = 11 : i64} {
  func.func @_dino_ccg_kernel(%arg0: i32, %arg1: memref<32x128xbf16, #tpu.memory_space<vmem>>, %arg2: memref<128x128xbf16, #tpu.memory_space<vmem>>, %arg3: memref<1x128xf32, #tpu.memory_space<vmem>>, %arg4: memref<1x128xf32, #tpu.memory_space<vmem>>, %arg5: memref<17x128xf32, #tpu.memory_space<vmem>>, %arg6: memref<1x1x128xf32, #tpu.memory_space<vmem>>, %arg7: memref<1x1x128xf32, #tpu.memory_space<vmem>>, %arg8: memref<1x128x384xbf16, #tpu.memory_space<vmem>>, %arg9: memref<1x1x384xf32, #tpu.memory_space<vmem>>, %arg10: memref<1x128x128xbf16, #tpu.memory_space<vmem>>, %arg11: memref<1x1x128xf32, #tpu.memory_space<vmem>>, %arg12: memref<1x1x128xf32, #tpu.memory_space<vmem>>, %arg13: memref<1x1x128xf32, #tpu.memory_space<vmem>>, %arg14: memref<1x128x512xbf16, #tpu.memory_space<vmem>>, %arg15: memref<1x1x512xf32, #tpu.memory_space<vmem>>, %arg16: memref<1x512x128xbf16, #tpu.memory_space<vmem>>, %arg17: memref<1x1x128xf32, #tpu.memory_space<vmem>>, %arg18: memref<1x128xf32, #tpu.memory_space<vmem>>, %arg19: memref<1x128xf32, #tpu.memory_space<vmem>>, %arg20: memref<128x128xf32, #tpu.memory_space<vmem>>, %arg21: memref<1x128xf32, #tpu.memory_space<vmem>>, %arg22: memref<10x128xf32, #tpu.memory_space<vmem>>, %arg23: memref<1x128xf32, #tpu.memory_space<vmem>>, %arg24: memref<1x1xf32, #tpu.memory_space<smem>>, %arg25: memref<2x128xf32, #tpu.memory_space<vmem>>, %arg26: memref<2x128xf32, #tpu.memory_space<vmem>>, %arg27: memref<10x128xf32, #tpu.memory_space<vmem>>, %arg28: memref<1x128xf32, #tpu.memory_space<vmem>>, %arg29: memref<34x128xf32, #tpu.memory_space<vmem>>) attributes {dimension_semantics = [#tpu.dimension_semantics<arbitrary>], iteration_bounds = array<i64: 2>, scalar_prefetch = 0 : i64, scratch_operands = 1 : i64, tpu.core_type = #tpu.core_type<tc>, window_params = [{pipeline_mode = #tpu.pipeline_mode<synchronous>, transform_indices = @transform_0, window_bounds = array<i64: 32, 128>}, {pipeline_mode = #tpu.pipeline_mode<synchronous>, transform_indices = @transform_1, window_bounds = array<i64: 128, 128>}, {pipeline_mode = #tpu.pipeline_mode<synchronous>, transform_indices = @transform_2, window_bounds = array<i64: 1, 128>}, {pipeline_mode = #tpu.pipeline_mode<synchronous>, transform_indices = @transform_3, window_bounds = array<i64: 1, 128>}, {pipeline_mode = #tpu.pipeline_mode<synchronous>, transform_indices = @transform_4, window_bounds = array<i64: 17, 128>}, {transform_indices = @transform_5, window_bounds = array<i64: 1, 1, 128>}, {transform_indices = @transform_6, window_bounds = array<i64: 1, 1, 128>}, {transform_indices = @transform_7, window_bounds = array<i64: 1, 128, 384>}, {transform_indices = @transform_8, window_bounds = array<i64: 1, 1, 384>}, {transform_indices = @transform_9, window_bounds = array<i64: 1, 128, 128>}, {transform_indices = @transform_10, window_bounds = array<i64: 1, 1, 128>}, {transform_indices = @transform_11, window_bounds = array<i64: 1, 1, 128>}, {transform_indices = @transform_12, window_bounds = array<i64: 1, 1, 128>}, {transform_indices = @transform_13, window_bounds = array<i64: 1, 128, 512>}, {transform_indices = @transform_14, window_bounds = array<i64: 1, 1, 512>}, {transform_indices = @transform_15, window_bounds = array<i64: 1, 512, 128>}, {transform_indices = @transform_16, window_bounds = array<i64: 1, 1, 128>}, {pipeline_mode = #tpu.pipeline_mode<synchronous>, transform_indices = @transform_17, window_bounds = array<i64: 1, 128>}, {pipeline_mode = #tpu.pipeline_mode<synchronous>, transform_indices = @transform_18, window_bounds = array<i64: 1, 128>}, {pipeline_mode = #tpu.pipeline_mode<synchronous>, transform_indices = @transform_19, window_bounds = array<i64: 128, 128>}, {pipeline_mode = #tpu.pipeline_mode<synchronous>, transform_indices = @transform_20, window_bounds = array<i64: 1, 128>}, {pipeline_mode = #tpu.pipeline_mode<synchronous>, transform_indices = @transform_21, window_bounds = array<i64: 10, 128>}, {pipeline_mode = #tpu.pipeline_mode<synchronous>, transform_indices = @transform_22, window_bounds = array<i64: 1, 128>}, {transform_indices = @transform_23, window_bounds = array<i64: 1, 1>}, {pipeline_mode = #tpu.pipeline_mode<synchronous>, transform_indices = @transform_24, window_bounds = array<i64: 2, 128>}, {pipeline_mode = #tpu.pipeline_mode<synchronous>, transform_indices = @transform_25, window_bounds = array<i64: 2, 128>}, {pipeline_mode = #tpu.pipeline_mode<synchronous>, transform_indices = @transform_26, window_bounds = array<i64: 10, 128>}, {pipeline_mode = #tpu.pipeline_mode<synchronous>, transform_indices = @transform_27, window_bounds = array<i64: 1, 128>}]} {
    %c0_i32 = arith.constant 0 : i32
    %0 = arith.cmpi eq, %arg0, %c0_i32 : i32
    %1 = arith.extui %0 : i1 to i32
    %c0_i32_0 = arith.constant 0 : i32
    %2 = arith.cmpi ne, %1, %c0_i32_0 : i32
    scf.if %2 {
      %c0_63 = arith.constant 0 : index
      %c0_64 = arith.constant 0 : index
      %200 = vector.load %arg1[%c0_63, %c0_64] : memref<32x128xbf16, #tpu.memory_space<vmem>>, vector<32x128xbf16>
      %c0_65 = arith.constant 0 : index
      %c0_66 = arith.constant 0 : index
      %201 = vector.load %arg2[%c0_65, %c0_66] : memref<128x128xbf16, #tpu.memory_space<vmem>>, vector<128x128xbf16>
      %cst_67 = arith.constant dense<0.000000e+00> : vector<32x128xf32>
      %202 = tpu.matmul %200, %201, %cst_67 {dimension_numbers = #tpu.dot_dimension_numbers<[1], [0], [0], [1], [0, 0, 1, 1], [], []>} : vector<32x128xbf16>, vector<128x128xbf16>, vector<32x128xf32> -> vector<32x128xf32>
      %c0_68 = arith.constant 0 : index
      %c0_69 = arith.constant 0 : index
      %203 = vector.load %arg3[%c0_68, %c0_69] : memref<1x128xf32, #tpu.memory_space<vmem>>, vector<1x128xf32>
      %204 = vector.broadcast %203 : vector<1x128xf32> to vector<32x128xf32>
      %205 = arith.addf %202, %204 : vector<32x128xf32>
      %c0_70 = arith.constant 0 : index
      %c0_71 = arith.constant 0 : index
      %206 = vector.load %arg4[%c0_70, %c0_71] : memref<1x128xf32, #tpu.memory_space<vmem>>, vector<1x128xf32>
      %207 = vector.extract_strided_slice %205 {offsets = [0, 0], sizes = [16, 128], strides = [1, 1]} : vector<32x128xf32> to vector<16x128xf32>
      %c0_72 = arith.constant 0 : index
      %c0_73 = arith.constant 0 : index
      %208 = vector.load %arg4[%c0_72, %c0_73] : memref<1x128xf32, #tpu.memory_space<vmem>>, vector<1x128xf32>
      %209 = vector.extract_strided_slice %205 {offsets = [16, 0], sizes = [16, 128], strides = [1, 1]} : vector<32x128xf32> to vector<16x128xf32>
      %210 = tpu.concatenate %206, %207, %208, %209 in 0 : vector<1x128xf32>, vector<16x128xf32>, vector<1x128xf32>, vector<16x128xf32> -> vector<34x128xf32>
      %c0_74 = arith.constant 0 : index
      %c0_75 = arith.constant 0 : index
      %211 = vector.load %arg5[%c0_74, %c0_75] : memref<17x128xf32, #tpu.memory_space<vmem>>, vector<17x128xf32>
      %212 = tpu.concatenate %211, %211 in 0 : vector<17x128xf32>, vector<17x128xf32> -> vector<34x128xf32>
      %213 = arith.addf %210, %212 : vector<34x128xf32>
      %c0_76 = arith.constant 0 : index
      %c0_77 = arith.constant 0 : index
      %214 = vector.load %arg29[%c0_76, %c0_77] : memref<34x128xf32, #tpu.memory_space<vmem>>, vector<34x128xf32>
      tpu.vector_store %arg29[%c0_76, %c0_77], %213 {strides = array<i32>} : memref<34x128xf32, #tpu.memory_space<vmem>>, vector<34x128xf32>,
    } else {
    }
    %c0 = arith.constant 0 : index
    %c0_1 = arith.constant 0 : index
    %3 = vector.load %arg29[%c0, %c0_1] : memref<34x128xf32, #tpu.memory_space<vmem>>, vector<34x128xf32>
    %c0_2 = arith.constant 0 : index
    %c0_3 = arith.constant 0 : index
    %c0_4 = arith.constant 0 : index
    %4 = vector.load %arg6[%c0_2, %c0_3, %c0_4] : memref<1x1x128xf32, #tpu.memory_space<vmem>>, vector<1x1x128xf32>
    %5 = vector.shape_cast %4 : vector<1x1x128xf32> to vector<1x128xf32>
    %c0_5 = arith.constant 0 : index
    %c0_6 = arith.constant 0 : index
    %c0_7 = arith.constant 0 : index
    %6 = vector.load %arg7[%c0_5, %c0_6, %c0_7] : memref<1x1x128xf32, #tpu.memory_space<vmem>>, vector<1x1x128xf32>
    %7 = vector.shape_cast %6 : vector<1x1x128xf32> to vector<1x128xf32>
    %cst = arith.constant dense<0.000000e+00> : vector<34xf32>
    %8 = vector.multi_reduction <add>, %3, %cst [1] : vector<34x128xf32> to vector<34xf32>
    %9 = vector.shape_cast %8 : vector<34xf32> to vector<34x1xf32>
    %cst_8 = arith.constant 1.280000e+02 : f32
    %10 = vector.broadcast %cst_8 : f32 to vector<34x1xf32>
    %11 = arith.divf %9, %10 : vector<34x1xf32>
    %12 = vector.broadcast %11 : vector<34x1xf32> to vector<34x128xf32>
    %13 = arith.subf %3, %12 : vector<34x128xf32>
    %14 = arith.mulf %13, %13 : vector<34x128xf32>
    %cst_9 = arith.constant dense<0.000000e+00> : vector<34xf32>
    %15 = vector.multi_reduction <add>, %14, %cst_9 [1] : vector<34x128xf32> to vector<34xf32>
    %16 = vector.shape_cast %15 : vector<34xf32> to vector<34x1xf32>
    %cst_10 = arith.constant 1.280000e+02 : f32
    %17 = vector.broadcast %cst_10 : f32 to vector<34x1xf32>
    %18 = arith.divf %16, %17 : vector<34x1xf32>
    %19 = vector.broadcast %11 : vector<34x1xf32> to vector<34x128xf32>
    %20 = arith.subf %3, %19 : vector<34x128xf32>
    %cst_11 = arith.constant 9.99999997E-7 : f32
    %21 = vector.broadcast %cst_11 : f32 to vector<34x1xf32>
    %22 = arith.addf %18, %21 : vector<34x1xf32>
    %23 = math.rsqrt %22 : vector<34x1xf32>
    %24 = vector.broadcast %23 : vector<34x1xf32> to vector<34x128xf32>
    %25 = arith.mulf %20, %24 : vector<34x128xf32>
    %26 = vector.broadcast %5 : vector<1x128xf32> to vector<34x128xf32>
    %27 = arith.mulf %25, %26 : vector<34x128xf32>
    %28 = vector.broadcast %7 : vector<1x128xf32> to vector<34x128xf32>
    %29 = arith.addf %27, %28 : vector<34x128xf32>
    %30 = arith.truncf %29 : vector<34x128xf32> to vector<34x128xbf16>
    %c0_12 = arith.constant 0 : index
    %c0_13 = arith.constant 0 : index
    %c0_14 = arith.constant 0 : index
    %31 = vector.load %arg8[%c0_12, %c0_13, %c0_14] : memref<1x128x384xbf16, #tpu.memory_space<vmem>>, vector<1x128x384xbf16>
    %32 = vector.shape_cast %31 : vector<1x128x384xbf16> to vector<128x384xbf16>
    %cst_15 = arith.constant dense<0.000000e+00> : vector<34x384xf32>
    %33 = tpu.matmul %30, %32, %cst_15 {dimension_numbers = #tpu.dot_dimension_numbers<[1], [0], [0], [1], [0, 0, 1, 1], [], []>} : vector<34x128xbf16>, vector<128x384xbf16>, vector<34x384xf32> -> vector<34x384xf32>
    %c0_16 = arith.constant 0 : index
    %c0_17 = arith.constant 0 : index
    %c0_18 = arith.constant 0 : index
    %34 = vector.load %arg9[%c0_16, %c0_17, %c0_18] : memref<1x1x384xf32, #tpu.memory_space<vmem>>, vector<1x1x384xf32>
    %35 = vector.shape_cast %34 : vector<1x1x384xf32> to vector<1x384xf32>
    %36 = vector.broadcast %35 : vector<1x384xf32> to vector<34x384xf32>
    %37 = arith.addf %33, %36 : vector<34x384xf32>
    %38 = vector.extract_strided_slice %37 {offsets = [0, 0], sizes = [34, 128], strides = [1, 1]} : vector<34x384xf32> to vector<34x128xf32>
    %39 = vector.extract_strided_slice %38 {offsets = [0, 0], sizes = [17, 128], strides = [1, 1]} : vector<34x128xf32> to vector<17x128xf32>
    %40 = vector.extract_strided_slice %39 {offsets = [0, 0], sizes = [17, 32], strides = [1, 1]} : vector<17x128xf32> to vector<17x32xf32>
    %41 = vector.extract_strided_slice %39 {offsets = [0, 32], sizes = [17, 32], strides = [1, 1]} : vector<17x128xf32> to vector<17x32xf32>
    %42 = vector.extract_strided_slice %39 {offsets = [0, 64], sizes = [17, 32], strides = [1, 1]} : vector<17x128xf32> to vector<17x32xf32>
    %43 = vector.extract_strided_slice %39 {offsets = [0, 96], sizes = [17, 32], strides = [1, 1]} : vector<17x128xf32> to vector<17x32xf32>
    %44 = vector.extract_strided_slice %38 {offsets = [17, 0], sizes = [17, 128], strides = [1, 1]} : vector<34x128xf32> to vector<17x128xf32>
    %45 = vector.extract_strided_slice %44 {offsets = [0, 0], sizes = [17, 32], strides = [1, 1]} : vector<17x128xf32> to vector<17x32xf32>
    %46 = vector.extract_strided_slice %44 {offsets = [0, 32], sizes = [17, 32], strides = [1, 1]} : vector<17x128xf32> to vector<17x32xf32>
    %47 = vector.extract_strided_slice %44 {offsets = [0, 64], sizes = [17, 32], strides = [1, 1]} : vector<17x128xf32> to vector<17x32xf32>
    %48 = vector.extract_strided_slice %44 {offsets = [0, 96], sizes = [17, 32], strides = [1, 1]} : vector<17x128xf32> to vector<17x32xf32>
    %49 = vector.shape_cast %40 : vector<17x32xf32> to vector<1x17x32xf32>
    %50 = vector.shape_cast %41 : vector<17x32xf32> to vector<1x17x32xf32>
    %51 = vector.shape_cast %42 : vector<17x32xf32> to vector<1x17x32xf32>
    %52 = vector.shape_cast %43 : vector<17x32xf32> to vector<1x17x32xf32>
    %53 = vector.shape_cast %45 : vector<17x32xf32> to vector<1x17x32xf32>
    %54 = vector.shape_cast %46 : vector<17x32xf32> to vector<1x17x32xf32>
    %55 = vector.shape_cast %47 : vector<17x32xf32> to vector<1x17x32xf32>
    %56 = vector.shape_cast %48 : vector<17x32xf32> to vector<1x17x32xf32>
    %57 = tpu.concatenate %49, %50, %51, %52, %53, %54, %55, %56 in 0 : vector<1x17x32xf32>, vector<1x17x32xf32>, vector<1x17x32xf32>, vector<1x17x32xf32>, vector<1x17x32xf32>, vector<1x17x32xf32>, vector<1x17x32xf32>, vector<1x17x32xf32> -> vector<8x17x32xf32>
    %58 = vector.extract_strided_slice %37 {offsets = [0, 128], sizes = [34, 128], strides = [1, 1]} : vector<34x384xf32> to vector<34x128xf32>
    %59 = vector.extract_strided_slice %58 {offsets = [0, 0], sizes = [17, 128], strides = [1, 1]} : vector<34x128xf32> to vector<17x128xf32>
    %60 = vector.extract_strided_slice %59 {offsets = [0, 0], sizes = [17, 32], strides = [1, 1]} : vector<17x128xf32> to vector<17x32xf32>
    %61 = vector.extract_strided_slice %59 {offsets = [0, 32], sizes = [17, 32], strides = [1, 1]} : vector<17x128xf32> to vector<17x32xf32>
    %62 = vector.extract_strided_slice %59 {offsets = [0, 64], sizes = [17, 32], strides = [1, 1]} : vector<17x128xf32> to vector<17x32xf32>
    %63 = vector.extract_strided_slice %59 {offsets = [0, 96], sizes = [17, 32], strides = [1, 1]} : vector<17x128xf32> to vector<17x32xf32>
    %64 = vector.extract_strided_slice %58 {offsets = [17, 0], sizes = [17, 128], strides = [1, 1]} : vector<34x128xf32> to vector<17x128xf32>
    %65 = vector.extract_strided_slice %64 {offsets = [0, 0], sizes = [17, 32], strides = [1, 1]} : vector<17x128xf32> to vector<17x32xf32>
    %66 = vector.extract_strided_slice %64 {offsets = [0, 32], sizes = [17, 32], strides = [1, 1]} : vector<17x128xf32> to vector<17x32xf32>
    %67 = vector.extract_strided_slice %64 {offsets = [0, 64], sizes = [17, 32], strides = [1, 1]} : vector<17x128xf32> to vector<17x32xf32>
    %68 = vector.extract_strided_slice %64 {offsets = [0, 96], sizes = [17, 32], strides = [1, 1]} : vector<17x128xf32> to vector<17x32xf32>
    %69 = vector.shape_cast %60 : vector<17x32xf32> to vector<1x17x32xf32>
    %70 = vector.shape_cast %61 : vector<17x32xf32> to vector<1x17x32xf32>
    %71 = vector.shape_cast %62 : vector<17x32xf32> to vector<1x17x32xf32>
    %72 = vector.shape_cast %63 : vector<17x32xf32> to vector<1x17x32xf32>
    %73 = vector.shape_cast %65 : vector<17x32xf32> to vector<1x17x32xf32>
    %74 = vector.shape_cast %66 : vector<17x32xf32> to vector<1x17x32xf32>
    %75 = vector.shape_cast %67 : vector<17x32xf32> to vector<1x17x32xf32>
    %76 = vector.shape_cast %68 : vector<17x32xf32> to vector<1x17x32xf32>
    %77 = tpu.concatenate %69, %70, %71, %72, %73, %74, %75, %76 in 0 : vector<1x17x32xf32>, vector<1x17x32xf32>, vector<1x17x32xf32>, vector<1x17x32xf32>, vector<1x17x32xf32>, vector<1x17x32xf32>, vector<1x17x32xf32>, vector<1x17x32xf32> -> vector<8x17x32xf32>
    %78 = vector.extract_strided_slice %37 {offsets = [0, 256], sizes = [34, 128], strides = [1, 1]} : vector<34x384xf32> to vector<34x128xf32>
    %79 = vector.extract_strided_slice %78 {offsets = [0, 0], sizes = [17, 128], strides = [1, 1]} : vector<34x128xf32> to vector<17x128xf32>
    %80 = vector.extract_strided_slice %79 {offsets = [0, 0], sizes = [17, 32], strides = [1, 1]} : vector<17x128xf32> to vector<17x32xf32>
    %81 = vector.extract_strided_slice %79 {offsets = [0, 32], sizes = [17, 32], strides = [1, 1]} : vector<17x128xf32> to vector<17x32xf32>
    %82 = vector.extract_strided_slice %79 {offsets = [0, 64], sizes = [17, 32], strides = [1, 1]} : vector<17x128xf32> to vector<17x32xf32>
    %83 = vector.extract_strided_slice %79 {offsets = [0, 96], sizes = [17, 32], strides = [1, 1]} : vector<17x128xf32> to vector<17x32xf32>
    %84 = vector.extract_strided_slice %78 {offsets = [17, 0], sizes = [17, 128], strides = [1, 1]} : vector<34x128xf32> to vector<17x128xf32>
    %85 = vector.extract_strided_slice %84 {offsets = [0, 0], sizes = [17, 32], strides = [1, 1]} : vector<17x128xf32> to vector<17x32xf32>
    %86 = vector.extract_strided_slice %84 {offsets = [0, 32], sizes = [17, 32], strides = [1, 1]} : vector<17x128xf32> to vector<17x32xf32>
    %87 = vector.extract_strided_slice %84 {offsets = [0, 64], sizes = [17, 32], strides = [1, 1]} : vector<17x128xf32> to vector<17x32xf32>
    %88 = vector.extract_strided_slice %84 {offsets = [0, 96], sizes = [17, 32], strides = [1, 1]} : vector<17x128xf32> to vector<17x32xf32>
    %89 = vector.shape_cast %80 : vector<17x32xf32> to vector<1x17x32xf32>
    %90 = vector.shape_cast %81 : vector<17x32xf32> to vector<1x17x32xf32>
    %91 = vector.shape_cast %82 : vector<17x32xf32> to vector<1x17x32xf32>
    %92 = vector.shape_cast %83 : vector<17x32xf32> to vector<1x17x32xf32>
    %93 = vector.shape_cast %85 : vector<17x32xf32> to vector<1x17x32xf32>
    %94 = vector.shape_cast %86 : vector<17x32xf32> to vector<1x17x32xf32>
    %95 = vector.shape_cast %87 : vector<17x32xf32> to vector<1x17x32xf32>
    %96 = vector.shape_cast %88 : vector<17x32xf32> to vector<1x17x32xf32>
    %97 = tpu.concatenate %89, %90, %91, %92, %93, %94, %95, %96 in 0 : vector<1x17x32xf32>, vector<1x17x32xf32>, vector<1x17x32xf32>, vector<1x17x32xf32>, vector<1x17x32xf32>, vector<1x17x32xf32>, vector<1x17x32xf32>, vector<1x17x32xf32> -> vector<8x17x32xf32>
    "tpu.trace_start"() <{level = 10 : i32, message = "bqe,bke->bqk"}> : () -> ()
    %cst_19 = arith.constant dense<0.000000e+00> : vector<8x17x17xf32>
    %98 = tpu.matmul %57, %77, %cst_19 {dimension_numbers = #tpu.dot_dimension_numbers<[2], [2], [1], [1], [0, 0, 0, 1, 1, 1], [0], [0]>} : vector<8x17x32xf32>, vector<8x17x32xf32>, vector<8x17x17xf32> -> vector<8x17x17xf32>
    "tpu.trace_stop"() : () -> ()
    %cst_20 = arith.constant 0.176776692 : f32
    %99 = vector.broadcast %cst_20 : f32 to vector<8x17x17xf32>
    %100 = arith.mulf %98, %99 : vector<8x17x17xf32>
    %cst_21 = arith.constant dense<0xFF800000> : vector<8x17xf32>
    %101 = vector.multi_reduction <maximumf>, %100, %cst_21 [2] : vector<8x17x17xf32> to vector<8x17xf32>
    %102 = vector.shape_cast %101 : vector<8x17xf32> to vector<8x17x1xf32>
    %103 = vector.broadcast %102 : vector<8x17x1xf32> to vector<8x17x17xf32>
    %104 = arith.subf %100, %103 : vector<8x17x17xf32>
    %105 = math.exp %104 : vector<8x17x17xf32>
    %cst_22 = arith.constant dense<0.000000e+00> : vector<8x17xf32>
    %106 = vector.multi_reduction <add>, %105, %cst_22 [2] : vector<8x17x17xf32> to vector<8x17xf32>
    %107 = vector.shape_cast %106 : vector<8x17xf32> to vector<8x17x1xf32>
    %108 = tpu.reciprocal %107 {approx = true} : vector<8x17x1xf32> -> vector<8x17x1xf32>
    %109 = vector.broadcast %108 : vector<8x17x1xf32> to vector<8x17x17xf32>
    %110 = arith.mulf %105, %109 : vector<8x17x17xf32>
    "tpu.trace_start"() <{level = 10 : i32, message = "bqk,bke->bqe"}> : () -> ()
    %cst_23 = arith.constant dense<0.000000e+00> : vector<8x17x32xf32>
    %111 = tpu.matmul %110, %97, %cst_23 {dimension_numbers = #tpu.dot_dimension_numbers<[2], [1], [1], [2], [0, 0, 0, 1, 1, 2], [0], [0]>} : vector<8x17x17xf32>, vector<8x17x32xf32>, vector<8x17x32xf32> -> vector<8x17x32xf32>
    "tpu.trace_stop"() : () -> ()
    %112 = vector.extract_strided_slice %111 {offsets = [0, 0, 0], sizes = [1, 17, 32], strides = [1, 1, 1]} : vector<8x17x32xf32> to vector<1x17x32xf32>
    %113 = vector.shape_cast %112 : vector<1x17x32xf32> to vector<17x32xf32>
    %114 = vector.extract_strided_slice %111 {offsets = [1, 0, 0], sizes = [1, 17, 32], strides = [1, 1, 1]} : vector<8x17x32xf32> to vector<1x17x32xf32>
    %115 = vector.shape_cast %114 : vector<1x17x32xf32> to vector<17x32xf32>
    %116 = vector.extract_strided_slice %111 {offsets = [2, 0, 0], sizes = [1, 17, 32], strides = [1, 1, 1]} : vector<8x17x32xf32> to vector<1x17x32xf32>
    %117 = vector.shape_cast %116 : vector<1x17x32xf32> to vector<17x32xf32>
    %118 = vector.extract_strided_slice %111 {offsets = [3, 0, 0], sizes = [1, 17, 32], strides = [1, 1, 1]} : vector<8x17x32xf32> to vector<1x17x32xf32>
    %119 = vector.shape_cast %118 : vector<1x17x32xf32> to vector<17x32xf32>
    %120 = tpu.concatenate %113, %115, %117, %119 in 1 : vector<17x32xf32>, vector<17x32xf32>, vector<17x32xf32>, vector<17x32xf32> -> vector<17x128xf32>
    %121 = vector.extract_strided_slice %111 {offsets = [4, 0, 0], sizes = [1, 17, 32], strides = [1, 1, 1]} : vector<8x17x32xf32> to vector<1x17x32xf32>
    %122 = vector.shape_cast %121 : vector<1x17x32xf32> to vector<17x32xf32>
    %123 = vector.extract_strided_slice %111 {offsets = [5, 0, 0], sizes = [1, 17, 32], strides = [1, 1, 1]} : vector<8x17x32xf32> to vector<1x17x32xf32>
    %124 = vector.shape_cast %123 : vector<1x17x32xf32> to vector<17x32xf32>
    %125 = vector.extract_strided_slice %111 {offsets = [6, 0, 0], sizes = [1, 17, 32], strides = [1, 1, 1]} : vector<8x17x32xf32> to vector<1x17x32xf32>
    %126 = vector.shape_cast %125 : vector<1x17x32xf32> to vector<17x32xf32>
    %127 = vector.extract_strided_slice %111 {offsets = [7, 0, 0], sizes = [1, 17, 32], strides = [1, 1, 1]} : vector<8x17x32xf32> to vector<1x17x32xf32>
    %128 = vector.shape_cast %127 : vector<1x17x32xf32> to vector<17x32xf32>
    %129 = tpu.concatenate %122, %124, %126, %128 in 1 : vector<17x32xf32>, vector<17x32xf32>, vector<17x32xf32>, vector<17x32xf32> -> vector<17x128xf32>
    %130 = tpu.concatenate %120, %129 in 0 : vector<17x128xf32>, vector<17x128xf32> -> vector<34x128xf32>
    %131 = arith.truncf %130 : vector<34x128xf32> to vector<34x128xbf16>
    %c0_24 = arith.constant 0 : index
    %c0_25 = arith.constant 0 : index
    %c0_26 = arith.constant 0 : index
    %132 = vector.load %arg10[%c0_24, %c0_25, %c0_26] : memref<1x128x128xbf16, #tpu.memory_space<vmem>>, vector<1x128x128xbf16>
    %133 = vector.shape_cast %132 : vector<1x128x128xbf16> to vector<128x128xbf16>
    %cst_27 = arith.constant dense<0.000000e+00> : vector<34x128xf32>
    %134 = tpu.matmul %131, %133, %cst_27 {dimension_numbers = #tpu.dot_dimension_numbers<[1], [0], [0], [1], [0, 0, 1, 1], [], []>} : vector<34x128xbf16>, vector<128x128xbf16>, vector<34x128xf32> -> vector<34x128xf32>
    %135 = arith.addf %3, %134 : vector<34x128xf32>
    %c0_28 = arith.constant 0 : index
    %c0_29 = arith.constant 0 : index
    %c0_30 = arith.constant 0 : index
    %136 = vector.load %arg11[%c0_28, %c0_29, %c0_30] : memref<1x1x128xf32, #tpu.memory_space<vmem>>, vector<1x1x128xf32>
    %137 = vector.shape_cast %136 : vector<1x1x128xf32> to vector<1x128xf32>
    %138 = vector.broadcast %137 : vector<1x128xf32> to vector<34x128xf32>
    %139 = arith.addf %135, %138 : vector<34x128xf32>
    %c0_31 = arith.constant 0 : index
    %c0_32 = arith.constant 0 : index
    %c0_33 = arith.constant 0 : index
    %140 = vector.load %arg12[%c0_31, %c0_32, %c0_33] : memref<1x1x128xf32, #tpu.memory_space<vmem>>, vector<1x1x128xf32>
    %141 = vector.shape_cast %140 : vector<1x1x128xf32> to vector<1x128xf32>
    %c0_34 = arith.constant 0 : index
    %c0_35 = arith.constant 0 : index
    %c0_36 = arith.constant 0 : index
    %142 = vector.load %arg13[%c0_34, %c0_35, %c0_36] : memref<1x1x128xf32, #tpu.memory_space<vmem>>, vector<1x1x128xf32>
    %143 = vector.shape_cast %142 : vector<1x1x128xf32> to vector<1x128xf32>
    %cst_37 = arith.constant dense<0.000000e+00> : vector<34xf32>
    %144 = vector.multi_reduction <add>, %139, %cst_37 [1] : vector<34x128xf32> to vector<34xf32>
    %145 = vector.shape_cast %144 : vector<34xf32> to vector<34x1xf32>
    %cst_38 = arith.constant 1.280000e+02 : f32
    %146 = vector.broadcast %cst_38 : f32 to vector<34x1xf32>
    %147 = arith.divf %145, %146 : vector<34x1xf32>
    %148 = vector.broadcast %147 : vector<34x1xf32> to vector<34x128xf32>
    %149 = arith.subf %139, %148 : vector<34x128xf32>
    %150 = arith.mulf %149, %149 : vector<34x128xf32>
    %cst_39 = arith.constant dense<0.000000e+00> : vector<34xf32>
    %151 = vector.multi_reduction <add>, %150, %cst_39 [1] : vector<34x128xf32> to vector<34xf32>
    %152 = vector.shape_cast %151 : vector<34xf32> to vector<34x1xf32>
    %cst_40 = arith.constant 1.280000e+02 : f32
    %153 = vector.broadcast %cst_40 : f32 to vector<34x1xf32>
    %154 = arith.divf %152, %153 : vector<34x1xf32>
    %155 = vector.broadcast %147 : vector<34x1xf32> to vector<34x128xf32>
    %156 = arith.subf %139, %155 : vector<34x128xf32>
    %cst_41 = arith.constant 9.99999997E-7 : f32
    %157 = vector.broadcast %cst_41 : f32 to vector<34x1xf32>
    %158 = arith.addf %154, %157 : vector<34x1xf32>
    %159 = math.rsqrt %158 : vector<34x1xf32>
    %160 = vector.broadcast %159 : vector<34x1xf32> to vector<34x128xf32>
    %161 = arith.mulf %156, %160 : vector<34x128xf32>
    %162 = vector.broadcast %141 : vector<1x128xf32> to vector<34x128xf32>
    %163 = arith.mulf %161, %162 : vector<34x128xf32>
    %164 = vector.broadcast %143 : vector<1x128xf32> to vector<34x128xf32>
    %165 = arith.addf %163, %164 : vector<34x128xf32>
    %166 = arith.truncf %165 : vector<34x128xf32> to vector<34x128xbf16>
    %c0_42 = arith.constant 0 : index
    %c0_43 = arith.constant 0 : index
    %c0_44 = arith.constant 0 : index
    %167 = vector.load %arg14[%c0_42, %c0_43, %c0_44] : memref<1x128x512xbf16, #tpu.memory_space<vmem>>, vector<1x128x512xbf16>
    %168 = vector.shape_cast %167 : vector<1x128x512xbf16> to vector<128x512xbf16>
    %cst_45 = arith.constant dense<0.000000e+00> : vector<34x512xf32>
    %169 = tpu.matmul %166, %168, %cst_45 {dimension_numbers = #tpu.dot_dimension_numbers<[1], [0], [0], [1], [0, 0, 1, 1], [], []>} : vector<34x128xbf16>, vector<128x512xbf16>, vector<34x512xf32> -> vector<34x512xf32>
    %c0_46 = arith.constant 0 : index
    %c0_47 = arith.constant 0 : index
    %c0_48 = arith.constant 0 : index
    %170 = vector.load %arg15[%c0_46, %c0_47, %c0_48] : memref<1x1x512xf32, #tpu.memory_space<vmem>>, vector<1x1x512xf32>
    %171 = vector.shape_cast %170 : vector<1x1x512xf32> to vector<1x512xf32>
    %172 = vector.broadcast %171 : vector<1x512xf32> to vector<34x512xf32>
    %173 = arith.addf %169, %172 : vector<34x512xf32>
    %cst_49 = arith.constant 5.000000e-01 : f32
    %174 = vector.broadcast %cst_49 : f32 to vector<34x512xf32>
    %175 = arith.mulf %174, %173 : vector<34x512xf32>
    %cst_50 = arith.constant 4.471500e-02 : f32
    %176 = vector.broadcast %cst_50 : f32 to vector<34x512xf32>
    %177 = arith.mulf %176, %173 : vector<34x512xf32>
    %178 = arith.mulf %177, %173 : vector<34x512xf32>
    %179 = arith.mulf %178, %173 : vector<34x512xf32>
    %180 = arith.addf %173, %179 : vector<34x512xf32>
    %cst_51 = arith.constant 0.797884583 : f32
    %181 = vector.broadcast %cst_51 : f32 to vector<34x512xf32>
    %182 = arith.mulf %181, %180 : vector<34x512xf32>
    %183 = math.tanh %182 : vector<34x512xf32>
    %cst_52 = arith.constant 1.000000e+00 : f32
    %184 = vector.broadcast %cst_52 : f32 to vector<34x512xf32>
    %185 = arith.addf %184, %183 : vector<34x512xf32>
    %186 = arith.mulf %175, %185 : vector<34x512xf32>
    %187 = arith.truncf %186 : vector<34x512xf32> to vector<34x512xbf16>
    %c0_53 = arith.constant 0 : index
    %c0_54 = arith.constant 0 : index
    %c0_55 = arith.constant 0 : index
    %188 = vector.load %arg16[%c0_53, %c0_54, %c0_55] : memref<1x512x128xbf16, #tpu.memory_space<vmem>>, vector<1x512x128xbf16>
    %189 = vector.shape_cast %188 : vector<1x512x128xbf16> to vector<512x128xbf16>
    %cst_56 = arith.constant dense<0.000000e+00> : vector<34x128xf32>
    %190 = tpu.matmul %187, %189, %cst_56 {dimension_numbers = #tpu.dot_dimension_numbers<[1], [0], [0], [1], [0, 0, 1, 1], [], []>} : vector<34x512xbf16>, vector<512x128xbf16>, vector<34x128xf32> -> vector<34x128xf32>
    %191 = arith.addf %139, %190 : vector<34x128xf32>
    %c0_57 = arith.constant 0 : index
    %c0_58 = arith.constant 0 : index
    %c0_59 = arith.constant 0 : index
    %192 = vector.load %arg17[%c0_57, %c0_58, %c0_59] : memref<1x1x128xf32, #tpu.memory_space<vmem>>, vector<1x1x128xf32>
    %193 = vector.shape_cast %192 : vector<1x1x128xf32> to vector<1x128xf32>
    %194 = vector.broadcast %193 : vector<1x128xf32> to vector<34x128xf32>
    %195 = arith.addf %191, %194 : vector<34x128xf32>
    %c0_60 = arith.constant 0 : index
    %c0_61 = arith.constant 0 : index
    %196 = vector.load %arg29[%c0_60, %c0_61] : memref<34x128xf32, #tpu.memory_space<vmem>>, vector<34x128xf32>
    tpu.vector_store %arg29[%c0_60, %c0_61], %195 {strides = array<i32>} : memref<34x128xf32, #tpu.memory_space<vmem>>, vector<34x128xf32>,
    %c1_i32 = arith.constant 1 : i32
    %197 = arith.cmpi eq, %arg0, %c1_i32 : i32
    %198 = arith.extui %197 : i1 to i32
    %c0_i32_62 = arith.constant 0 : i32
    %199 = arith.cmpi ne, %198, %c0_i32_62 : i32
    scf.if %199 {
      %200 = vector.extract_strided_slice %195 {offsets = [0, 0], sizes = [1, 128], strides = [1, 1]} : vector<34x128xf32> to vector<1x128xf32>
      %201 = vector.extract_strided_slice %195 {offsets = [17, 0], sizes = [1, 128], strides = [1, 1]} : vector<34x128xf32> to vector<1x128xf32>
      %202 = tpu.concatenate %200, %201 in 0 : vector<1x128xf32>, vector<1x128xf32> -> vector<2x128xf32>
      %c0_63 = arith.constant 0 : index
      %c0_64 = arith.constant 0 : index
      %203 = vector.load %arg18[%c0_63, %c0_64] : memref<1x128xf32, #tpu.memory_space<vmem>>, vector<1x128xf32>
      %c0_65 = arith.constant 0 : index
      %c0_66 = arith.constant 0 : index
      %204 = vector.load %arg19[%c0_65, %c0_66] : memref<1x128xf32, #tpu.memory_space<vmem>>, vector<1x128xf32>
      %cst_67 = arith.constant dense<0.000000e+00> : vector<2xf32>
      %205 = vector.multi_reduction <add>, %202, %cst_67 [1] : vector<2x128xf32> to vector<2xf32>
      %206 = vector.shape_cast %205 : vector<2xf32> to vector<2x1xf32>
      %cst_68 = arith.constant 1.280000e+02 : f32
      %207 = vector.broadcast %cst_68 : f32 to vector<2x1xf32>
      %208 = arith.divf %206, %207 : vector<2x1xf32>
      %209 = vector.broadcast %208 : vector<2x1xf32> to vector<2x128xf32>
      %210 = arith.subf %202, %209 : vector<2x128xf32>
      %211 = arith.mulf %210, %210 : vector<2x128xf32>
      %cst_69 = arith.constant dense<0.000000e+00> : vector<2xf32>
      %212 = vector.multi_reduction <add>, %211, %cst_69 [1] : vector<2x128xf32> to vector<2xf32>
      %213 = vector.shape_cast %212 : vector<2xf32> to vector<2x1xf32>
      %cst_70 = arith.constant 1.280000e+02 : f32
      %214 = vector.broadcast %cst_70 : f32 to vector<2x1xf32>
      %215 = arith.divf %213, %214 : vector<2x1xf32>
      %216 = vector.broadcast %208 : vector<2x1xf32> to vector<2x128xf32>
      %217 = arith.subf %202, %216 : vector<2x128xf32>
      %cst_71 = arith.constant 9.99999997E-7 : f32
      %218 = vector.broadcast %cst_71 : f32 to vector<2x1xf32>
      %219 = arith.addf %215, %218 : vector<2x1xf32>
      %220 = math.rsqrt %219 : vector<2x1xf32>
      %221 = vector.broadcast %220 : vector<2x1xf32> to vector<2x128xf32>
      %222 = arith.mulf %217, %221 : vector<2x128xf32>
      %223 = vector.broadcast %203 : vector<1x128xf32> to vector<2x128xf32>
      %224 = arith.mulf %222, %223 : vector<2x128xf32>
      %225 = vector.broadcast %204 : vector<1x128xf32> to vector<2x128xf32>
      %226 = arith.addf %224, %225 : vector<2x128xf32>
      %227 = arith.mulf %226, %226 : vector<2x128xf32>
      %cst_72 = arith.constant dense<0.000000e+00> : vector<2xf32>
      %228 = vector.multi_reduction <add>, %227, %cst_72 [1] : vector<2x128xf32> to vector<2xf32>
      %229 = vector.shape_cast %228 : vector<2xf32> to vector<2x1xf32>
      %230 = math.sqrt %229 : vector<2x1xf32>
      %cst_73 = arith.constant 1.600000e+01 : f32
      %231 = vector.broadcast %cst_73 : f32 to vector<2x128xf32>
      %232 = arith.mulf %231, %226 : vector<2x128xf32>
      %cst_74 = arith.constant 9.99999996E-13 : f32
      %233 = vector.broadcast %cst_74 : f32 to vector<2x1xf32>
      %234 = arith.maximumf %230, %233 : vector<2x1xf32>
      %235 = vector.broadcast %234 : vector<2x1xf32> to vector<2x128xf32>
      %236 = arith.divf %232, %235 : vector<2x128xf32>
      %c0_75 = arith.constant 0 : index
      %c0_76 = arith.constant 0 : index
      %237 = vector.load %arg26[%c0_75, %c0_76] : memref<2x128xf32, #tpu.memory_space<vmem>>, vector<2x128xf32>
      tpu.vector_store %arg26[%c0_75, %c0_76], %236 {strides = array<i32>} : memref<2x128xf32, #tpu.memory_space<vmem>>, vector<2x128xf32>,
      %c0_77 = arith.constant 0 : index
      %c0_78 = arith.constant 0 : index
      %238 = vector.load %arg20[%c0_77, %c0_78] : memref<128x128xf32, #tpu.memory_space<vmem>>, vector<128x128xf32>
      %cst_79 = arith.constant dense<0.000000e+00> : vector<2x128xf32>
      %239 = tpu.matmul %236, %238, %cst_79 {dimension_numbers = #tpu.dot_dimension_numbers<[1], [0], [0], [1], [0, 0, 1, 1], [], []>} : vector<2x128xf32>, vector<128x128xf32>, vector<2x128xf32> -> vector<2x128xf32>
      %c0_80 = arith.constant 0 : index
      %c0_81 = arith.constant 0 : index
      %240 = vector.load %arg21[%c0_80, %c0_81] : memref<1x128xf32, #tpu.memory_space<vmem>>, vector<1x128xf32>
      %241 = vector.broadcast %240 : vector<1x128xf32> to vector<2x128xf32>
      %242 = arith.addf %239, %241 : vector<2x128xf32>
      %c0_82 = arith.constant 0 : index
      %c0_83 = arith.constant 0 : index
      %243 = vector.load %arg25[%c0_82, %c0_83] : memref<2x128xf32, #tpu.memory_space<vmem>>, vector<2x128xf32>
      tpu.vector_store %arg25[%c0_82, %c0_83], %242 {strides = array<i32>} : memref<2x128xf32, #tpu.memory_space<vmem>>, vector<2x128xf32>,
      %c0_84 = arith.constant 0 : index
      %c0_85 = arith.constant 0 : index
      %244 = memref.load %arg24[%c0_84, %c0_85] : memref<1x1xf32, #tpu.memory_space<smem>>
      %c0_86 = arith.constant 0 : index
      %c0_87 = arith.constant 0 : index
      %245 = vector.load %arg23[%c0_86, %c0_87] : memref<1x128xf32, #tpu.memory_space<vmem>>, vector<1x128xf32>
      %246 = vector.broadcast %244 : f32 to vector<1x128xf32>
      %247 = arith.addf %246, %245 : vector<1x128xf32>
      %248 = arith.mulf %247, %247 : vector<1x128xf32>
      %cst_88 = arith.constant 1.000000e-01 : f32
      %249 = vector.broadcast %cst_88 : f32 to vector<1x128xf32>
      %250 = arith.addf %248, %249 : vector<1x128xf32>
      %c0_89 = arith.constant 0 : index
      %c0_90 = arith.constant 0 : index
      %251 = vector.load %arg28[%c0_89, %c0_90] : memref<1x128xf32, #tpu.memory_space<vmem>>, vector<1x128xf32>
      tpu.vector_store %arg28[%c0_89, %c0_90], %250 {strides = array<i32>} : memref<1x128xf32, #tpu.memory_space<vmem>>, vector<1x128xf32>,
      %c0_91 = arith.constant 0 : index
      %c0_92 = arith.constant 0 : index
      %252 = vector.load %arg22[%c0_91, %c0_92] : memref<10x128xf32, #tpu.memory_space<vmem>>, vector<10x128xf32>
      %253 = vector.broadcast %250 : vector<1x128xf32> to vector<10x128xf32>
      %254 = arith.mulf %252, %253 : vector<10x128xf32>
      %c0_93 = arith.constant 0 : index
      %c0_94 = arith.constant 0 : index
      %255 = vector.load %arg27[%c0_93, %c0_94] : memref<10x128xf32, #tpu.memory_space<vmem>>, vector<10x128xf32>
      tpu.vector_store %arg27[%c0_93, %c0_94], %254 {strides = array<i32>} : memref<10x128xf32, #tpu.memory_space<vmem>>, vector<10x128xf32>,
    } else {
    }
    return
  }
  func.func @transform_0(%arg0: i32) -> (i32, i32) {
    %c0_i32 = arith.constant 0 : i32
    %c0_i32_0 = arith.constant 0 : i32
    %c0_i32_1 = arith.constant 0 : i32
    return %c0_i32, %c0_i32_0 : i32, i32
  }
  func.func @transform_1(%arg0: i32) -> (i32, i32) {
    %c0_i32 = arith.constant 0 : i32
    %c0_i32_0 = arith.constant 0 : i32
    %c0_i32_1 = arith.constant 0 : i32
    return %c0_i32, %c0_i32_0 : i32, i32
  }
  func.func @transform_2(%arg0: i32) -> (i32, i32) {
    %c0_i32 = arith.constant 0 : i32
    %c0_i32_0 = arith.constant 0 : i32
    %c0_i32_1 = arith.constant 0 : i32
    return %c0_i32, %c0_i32_0 : i32, i32
  }
  func.func @transform_3(%arg0: i32) -> (i32, i32) {
    %c0_i32 = arith.constant 0 : i32
    %c0_i32_0 = arith.constant 0 : i32
    %c0_i32_1 = arith.constant 0 : i32
    return %c0_i32, %c0_i32_0 : i32, i32
  }
  func.func @transform_4(%arg0: i32) -> (i32, i32) {
    %c0_i32 = arith.constant 0 : i32
    %c0_i32_0 = arith.constant 0 : i32
    %c0_i32_1 = arith.constant 0 : i32
    return %c0_i32, %c0_i32_0 : i32, i32
  }
  func.func @transform_5(%arg0: i32) -> (i32, i32, i32) {
    %c0_i32 = arith.constant 0 : i32
    %c0_i32_0 = arith.constant 0 : i32
    %c0_i32_1 = arith.constant 0 : i32
    return %arg0, %c0_i32, %c0_i32_0 : i32, i32, i32
  }
  func.func @transform_6(%arg0: i32) -> (i32, i32, i32) {
    %c0_i32 = arith.constant 0 : i32
    %c0_i32_0 = arith.constant 0 : i32
    %c0_i32_1 = arith.constant 0 : i32
    return %arg0, %c0_i32, %c0_i32_0 : i32, i32, i32
  }
  func.func @transform_7(%arg0: i32) -> (i32, i32, i32) {
    %c0_i32 = arith.constant 0 : i32
    %c0_i32_0 = arith.constant 0 : i32
    %c0_i32_1 = arith.constant 0 : i32
    return %arg0, %c0_i32, %c0_i32_0 : i32, i32, i32
  }
  func.func @transform_8(%arg0: i32) -> (i32, i32, i32) {
    %c0_i32 = arith.constant 0 : i32
    %c0_i32_0 = arith.constant 0 : i32
    %c0_i32_1 = arith.constant 0 : i32
    return %arg0, %c0_i32, %c0_i32_0 : i32, i32, i32
  }
  func.func @transform_9(%arg0: i32) -> (i32, i32, i32) {
    %c0_i32 = arith.constant 0 : i32
    %c0_i32_0 = arith.constant 0 : i32
    %c0_i32_1 = arith.constant 0 : i32
    return %arg0, %c0_i32, %c0_i32_0 : i32, i32, i32
  }
  func.func @transform_10(%arg0: i32) -> (i32, i32, i32) {
    %c0_i32 = arith.constant 0 : i32
    %c0_i32_0 = arith.constant 0 : i32
    %c0_i32_1 = arith.constant 0 : i32
    return %arg0, %c0_i32, %c0_i32_0 : i32, i32, i32
  }
  func.func @transform_11(%arg0: i32) -> (i32, i32, i32) {
    %c0_i32 = arith.constant 0 : i32
    %c0_i32_0 = arith.constant 0 : i32
    %c0_i32_1 = arith.constant 0 : i32
    return %arg0, %c0_i32, %c0_i32_0 : i32, i32, i32
  }
  func.func @transform_12(%arg0: i32) -> (i32, i32, i32) {
    %c0_i32 = arith.constant 0 : i32
    %c0_i32_0 = arith.constant 0 : i32
    %c0_i32_1 = arith.constant 0 : i32
    return %arg0, %c0_i32, %c0_i32_0 : i32, i32, i32
  }
  func.func @transform_13(%arg0: i32) -> (i32, i32, i32) {
    %c0_i32 = arith.constant 0 : i32
    %c0_i32_0 = arith.constant 0 : i32
    %c0_i32_1 = arith.constant 0 : i32
    return %arg0, %c0_i32, %c0_i32_0 : i32, i32, i32
  }
  func.func @transform_14(%arg0: i32) -> (i32, i32, i32) {
    %c0_i32 = arith.constant 0 : i32
    %c0_i32_0 = arith.constant 0 : i32
    %c0_i32_1 = arith.constant 0 : i32
    return %arg0, %c0_i32, %c0_i32_0 : i32, i32, i32
  }
  func.func @transform_15(%arg0: i32) -> (i32, i32, i32) {
    %c0_i32 = arith.constant 0 : i32
    %c0_i32_0 = arith.constant 0 : i32
    %c0_i32_1 = arith.constant 0 : i32
    return %arg0, %c0_i32, %c0_i32_0 : i32, i32, i32
  }
  func.func @transform_16(%arg0: i32) -> (i32, i32, i32) {
    %c0_i32 = arith.constant 0 : i32
    %c0_i32_0 = arith.constant 0 : i32
    %c0_i32_1 = arith.constant 0 : i32
    return %arg0, %c0_i32, %c0_i32_0 : i32, i32, i32
  }
  func.func @transform_17(%arg0: i32) -> (i32, i32) {
    %c0_i32 = arith.constant 0 : i32
    %c0_i32_0 = arith.constant 0 : i32
    %c0_i32_1 = arith.constant 0 : i32
    return %c0_i32, %c0_i32_0 : i32, i32
  }
  func.func @transform_18(%arg0: i32) -> (i32, i32) {
    %c0_i32 = arith.constant 0 : i32
    %c0_i32_0 = arith.constant 0 : i32
    %c0_i32_1 = arith.constant 0 : i32
    return %c0_i32, %c0_i32_0 : i32, i32
  }
  func.func @transform_19(%arg0: i32) -> (i32, i32) {
    %c0_i32 = arith.constant 0 : i32
    %c0_i32_0 = arith.constant 0 : i32
    %c0_i32_1 = arith.constant 0 : i32
    return %c0_i32, %c0_i32_0 : i32, i32
  }
  func.func @transform_20(%arg0: i32) -> (i32, i32) {
    %c0_i32 = arith.constant 0 : i32
    %c0_i32_0 = arith.constant 0 : i32
    %c0_i32_1 = arith.constant 0 : i32
    return %c0_i32, %c0_i32_0 : i32, i32
  }
  func.func @transform_21(%arg0: i32) -> (i32, i32) {
    %c0_i32 = arith.constant 0 : i32
    %c0_i32_0 = arith.constant 0 : i32
    %c0_i32_1 = arith.constant 0 : i32
    return %c0_i32, %c0_i32_0 : i32, i32
  }
  func.func @transform_22(%arg0: i32) -> (i32, i32) {
    %c0_i32 = arith.constant 0 : i32
    %c0_i32_0 = arith.constant 0 : i32
    %c0_i32_1 = arith.constant 0 : i32
    return %c0_i32, %c0_i32_0 : i32, i32
  }
  func.func @transform_23(%arg0: i32) -> (i32, i32) {
    %c0_i32 = arith.constant 0 : i32
    %c0_i32_0 = arith.constant 0 : i32
    %c0_i32_1 = arith.constant 0 : i32
    return %c0_i32, %c0_i32_0 : i32, i32
  }
  func.func @transform_24(%arg0: i32) -> (i32, i32) {
    %c0_i32 = arith.constant 0 : i32
    %c0_i32_0 = arith.constant 0 : i32
    %c0_i32_1 = arith.constant 0 : i32
    return %c0_i32, %c0_i32_0 : i32, i32
  }
  func.func @transform_25(%arg0: i32) -> (i32, i32) {
    %c0_i32 = arith.constant 0 : i32
    %c0_i32_0 = arith.constant 0 : i32
    %c0_i32_1 = arith.constant 0 : i32
    return %c0_i32, %c0_i32_0 : i32, i32
  }
  func.func @transform_26(%arg0: i32) -> (i32, i32) {
    %c0_i32 = arith.constant 0 : i32
    %c0_i32_0 = arith.constant 0 : i32
    %c0_i32_1 = arith.constant 0 : i32
    return %c0_i32, %c0_i32_0 : i32, i32
  }
  func.func @transform_27(%arg0: i32) -> (i32, i32) {
    %c0_i32 = arith.constant 0 : i32
    %c0_i32_0 = arith.constant 0 : i32
    %c0_i32_1 = arith.constant 0 : i32
    return %c0_i32, %c0_i32_0 : i32, i32
  }
}

</mosaic_0001>

<llo_original>
// kernel: dino_ccg_forward.1
$region0: #{dino_ccg_forward.1}
  #allocation0 [shape = 'u32[]', space=smem, size = 0x4, offset = 0x4, fixed_abs, tag = 'smem constant byte address 0x4 - core index']
  #allocation1 [shape = 'u32[144,128]{1,0:T(1,128)}', space=vmem, size = 0x12000, scoped, tag = 'internal scratch']
  #allocation2 [shape = 'f32[34,128]{1,0:T(8,128)}', space=vmem, size = 0x5000, scoped, tag = 'scratch operand']
  #allocation3 [shape = 'f32[1,1]{1,0:T(1,128)S(6)}', space=smem, size = 0x200, scoped, tag = 'scoped memory for dino_ccg_forward.1']
  %s0 = inlined_call_operand.vmem [shape: bf16[32,128], index: 0, kind: input, shape index: {}]
  %s1 = inlined_call_operand.hbm [shape: bf16[128,128], index: 1, kind: input, shape index: {}]
  %s2 = inlined_call_operand.hbm [shape: f32[1,128], index: 2, kind: input, shape index: {}]
  %s3 = inlined_call_operand.vmem [shape: f32[1,128], index: 3, kind: input, shape index: {}]
  %s4 = inlined_call_operand.hbm [shape: f32[17,128], index: 4, kind: input, shape index: {}]
  %s5 = inlined_call_operand.hbm [shape: f32[2,1,128], index: 5, kind: input, shape index: {}]
  %s6 = inlined_call_operand.hbm [shape: f32[2,1,128], index: 6, kind: input, shape index: {}]
  %s7 = inlined_call_operand.hbm [shape: bf16[2,128,384], index: 7, kind: input, shape index: {}]
  %s8 = inlined_call_operand.vmem [shape: f32[2,1,384], index: 8, kind: input, shape index: {}]
  %s9 = inlined_call_operand.hbm [shape: bf16[2,128,128], index: 9, kind: input, shape index: {}]
  %s10 = inlined_call_operand.vmem [shape: f32[2,1,128], index: 10, kind: input, shape index: {}]
  %s11 = inlined_call_operand.hbm [shape: f32[2,1,128], index: 11, kind: input, shape index: {}]
  %s12 = inlined_call_operand.hbm [shape: f32[2,1,128], index: 12, kind: input, shape index: {}]
  %s13 = inlined_call_operand.vmem [shape: bf16[2,128,512], index: 13, kind: input, shape index: {}]
  %s14 = inlined_call_operand.vmem [shape: f32[2,1,512], index: 14, kind: input, shape index: {}]
  %s15 = inlined_call_operand.vmem [shape: bf16[2,512,128], index: 15, kind: input, shape index: {}]
  %s16 = inlined_call_operand.vmem [shape: f32[2,1,128], index: 16, kind: input, shape index: {}]
  %s17 = inlined_call_operand.hbm [shape: f32[1,128], index: 17, kind: input, shape index: {}]
  %s18 = inlined_call_operand.hbm [shape: f32[1,128], index: 18, kind: input, shape index: {}]
  %s19 = inlined_call_operand.hbm [shape: f32[128,128], index: 19, kind: input, shape index: {}]
  %s20 = inlined_call_operand.vmem [shape: f32[1,128], index: 20, kind: input, shape index: {}]
  %s21 = inlined_call_operand.vmem [shape: f32[10,128], index: 21, kind: input, shape index: {}]
  %s22 = inlined_call_operand.vmem [shape: f32[1,128], index: 22, kind: input, shape index: {}]
  %s23 = inlined_call_operand.<no memory space> [shape: f32[1,1], index: 23, kind: input, shape index: {}]
  %s24 = inlined_call_operand.hbm [shape: f32[2,128], index: 24, kind: output, shape index: {0}]
  %s25 = inlined_call_operand.hbm [shape: f32[2,128], index: 25, kind: output, shape index: {1}]
  %s26 = inlined_call_operand.hbm [shape: f32[10,128], index: 26, kind: output, shape index: {2}]
  %s27 = inlined_call_operand.hbm [shape: f32[1,128], index: 27, kind: output, shape index: {3}]
  %28 = xla_tuple %s24, %s25, %s26, %s27
  %s29 = sld [smem:[#allocation0]]
  $region209: #{dino_ccg_forward.1} parent=0
    _
  %s31 = ssub.s32 1, %s29
  %s32 = scalar_select 0, %s31, %s29
  %33 = sst [smem:[#allocation3]] %s23
  $region1: #{dino_ccg_forward.1} parent=0
    #allocation4 [shape = 'u8[32768]{0}', space=vmem, size = 0x8000, scoped, tag = 'input window, operand 1, single buffered']
    #allocation5 [shape = 's32[2]{0}', space=sflag, size = 0x8, scoped, tag = 'scoped memory for dino_ccg_forward.1']
    #allocation6 [shape = 's32[2]{0}', space=sflag, size = 0x8, scoped, tag = 'scoped memory for dino_ccg_forward.1']
    #allocation7 [shape = 'u8[512]{0}', space=vmem, size = 0x400, scoped, tag = 'input window, operand 2, single buffered']
    #allocation8 [shape = 's32[1]{0}', space=sflag, size = 0x4, scoped, tag = 'scoped memory for dino_ccg_forward.1']
    #allocation9 [shape = 'u8[12288]{0}', space=vmem, size = 0x3000, scoped, tag = 'input window, operand 4, single buffered']
    #allocation10 [shape = 'u8[1024]{0}', space=vmem, size = 0x400, scoped, tag = 'input window, operand 5']
    #allocation11 [shape = 's32[2]{0}', space=sflag, size = 0x8, scoped, tag = 'scoped memory for dino_ccg_forward.1']
    #allocation12 [shape = 'u8[1024]{0}', space=vmem, size = 0x400, scoped, tag = 'input window, operand 6']
    #allocation13 [shape = 'u8[196608]{0}', space=vmem, size = 0x30000, scoped, tag = 'input window, operand 7']
    #allocation14 [shape = 's32[2]{0}', space=sflag, size = 0x8, scoped, tag = 'scoped memory for dino_ccg_forward.1']
    #allocation15 [shape = 'u8[65536]{0}', space=vmem, size = 0x10000, scoped, tag = 'input window, operand 9']
    #allocation16 [shape = 'u8[1024]{0}', space=vmem, size = 0x400, scoped, tag = 'input window, operand 11']
    #allocation17 [shape = 's32[2]{0}', space=sflag, size = 0x8, scoped, tag = 'scoped memory for dino_ccg_forward.1']
    #allocation18 [shape = 'u8[1024]{0}', space=vmem, size = 0x400, scoped, tag = 'input window, operand 12']
    #allocation19 [shape = 'u8[512]{0}', space=vmem, size = 0x400, scoped, tag = 'input window, operand 17, single buffered']
    #allocation20 [shape = 's32[1]{0}', space=sflag, size = 0x4, scoped, tag = 'scoped memory for dino_ccg_forward.1']
    #allocation21 [shape = 'u8[512]{0}', space=vmem, size = 0x400, scoped, tag = 'input window, operand 18, single buffered']
    #allocation22 [shape = 'u8[65536]{0}', space=vmem, size = 0x10000, scoped, tag = 'input window, operand 19, single buffered']
    #allocation23 [shape = 's32[1]{0}', space=sflag, size = 0x4, scoped, tag = 'scoped memory for dino_ccg_forward.1']
    #allocation24 [shape = 'u8[1024]{0}', space=vmem, size = 0x400, scoped, tag = 'output window, operand 0, single buffered']
    #allocation25 [shape = 'u8[1024]{0}', space=vmem, size = 0x400, scoped, tag = 'output window, operand 1, single buffered']
    #allocation26 [shape = 's32[1]{0}', space=sflag, size = 0x4, scoped, tag = 'scoped memory for dino_ccg_forward.1']
    #allocation27 [shape = 'u8[8192]{0}', space=vmem, size = 0x2000, scoped, tag = 'output window, operand 2, single buffered']
    #allocation28 [shape = 'u8[512]{0}', space=vmem, size = 0x400, scoped, tag = 'output window, operand 3, single buffered']
    #allocation29 [shape = 's32[1]{0}', space=sflag, size = 0x4, scoped, tag = 'scoped memory for dino_ccg_forward.1']
    %34 = vsyncpa [#allocation5], 0
    %35 = vsyncpa [#allocation8], 0
    %36 = vsyncpa [#allocation11], 0
    %s37 = scalar_lea.sflag [#allocation11], 1
    %38 = vsyncpa %s37, 0
    %39 = vsyncpa [#allocation14], 0
    %s40 = scalar_lea.sflag [#allocation14], 1
    %41 = vsyncpa %s40, 0
    %42 = vsyncpa [#allocation17], 0
    %s43 = scalar_lea.sflag [#allocation17], 1
    %44 = vsyncpa %s43, 0
    %45 = vsyncpa [#allocation20], 0
    %46 = vsyncpa [#allocation23], 0
    %47 = vsyncpa [#allocation6], 0
    %48 = vsyncpa [#allocation26], 0
    %49 = vsyncpa [#allocation29], 0
    loop: start=0, step=1, limit=4
    $region2: #{dino_ccg_forward.1} parent=1 // loop_pre_header
      _
    $region3: #{dino_ccg_forward.1} parent=1 // loop_header
      %s51 = sphi 0, %s55
      %p52 = scmp.ge.s32.totalorder %s51, 4
      %s59 = sphi 0, %s59
      %s61 = sphi 0, %s59
      %s62 = sphi 0, %s61
      %s76 = sphi 0, %s62
      %s80 = sphi 0, %s80
      %s82 = sphi 0, %s80
      %s83 = sphi 0, %s82
      %s97 = sphi 0, %s83
      %s101 = sphi 0, %s101
      %s103 = sphi 0, %s101
      %s104 = sphi 0, %s103
      %s118 = sphi 0, %s104
      %s122 = sphi 0, %s122
      %s124 = sphi 0, %s122
      %s125 = sphi 0, %s124
      %s139 = sphi 0, %s125
      %s143 = sphi 0, %s143
      %s145 = sphi 0, %s143
      %s146 = sphi 0, %s145
      %s160 = sphi 0, %s146
      %s166 = sphi 0, %s168
      %s169 = sphi 0, %s166
      %s170 = sphi 0, %s169
      %s186 = sphi 0, %s170
      %s192 = sphi 0, %s194
      %s195 = sphi 0, %s192
      %s196 = sphi 0, %s195
      %s212 = sphi 0, %s196
      %s218 = sphi 0, %s220
      %s221 = sphi 0, %s218
      %s222 = sphi 0, %s221
      %s238 = sphi 0, %s222
      %s244 = sphi 0, %s246
      %s247 = sphi 0, %s244
      %s248 = sphi 0, %s247
      %s264 = sphi 0, %s248
      %s270 = sphi 0, %s272
      %s273 = sphi 0, %s270
      %s274 = sphi 0, %s273
      %s290 = sphi 0, %s274
      %s296 = sphi 0, %s298
      %s299 = sphi 0, %s296
      %s300 = sphi 0, %s299
      %s316 = sphi 0, %s300
      %s322 = sphi 0, %s324
      %s325 = sphi 0, %s322
      %s326 = sphi 0, %s325
      %s342 = sphi 0, %s326
      %s348 = sphi 0, %s350
      %s351 = sphi 0, %s348
      %s352 = sphi 0, %s351
      %s368 = sphi 0, %s352
      %s374 = sphi 0, %s376
      %s377 = sphi 0, %s374
      %s378 = sphi 0, %s377
      %s394 = sphi 0, %s378
      %s400 = sphi 0, %s402
      %s403 = sphi 0, %s400
      %s404 = sphi 0, %s403
      %s420 = sphi 0, %s404
      %s426 = sphi 0, %s428
      %s429 = sphi 0, %s426
      %s430 = sphi 0, %s429
      %s446 = sphi 0, %s430
      %s452 = sphi 0, %s454
      %s455 = sphi 0, %s452
      %s456 = sphi 0, %s455
      %s472 = sphi 0, %s456
      %s476 = sphi 0, %s476
      %s478 = sphi 0, %s476
      %s479 = sphi 0, %s478
      %s493 = sphi 0, %s479
      %s497 = sphi 0, %s497
      %s499 = sphi 0, %s497
      %s500 = sphi 0, %s499
      %s514 = sphi 0, %s500
      %s518 = sphi 0, %s518
      %s520 = sphi 0, %s518
      %s521 = sphi 0, %s520
      %s535 = sphi 0, %s521
      %s539 = sphi 0, %s539
      %s541 = sphi 0, %s539
      %s542 = sphi 0, %s541
      %s556 = sphi 0, %s542
      %s560 = sphi 0, %s560
      %s562 = sphi 0, %s560
      %s563 = sphi 0, %s562
      %s577 = sphi 0, %s563
      %s581 = sphi 0, %s581
      %s583 = sphi 0, %s581
      %s584 = sphi 0, %s583
      %s598 = sphi 0, %s584
      %s602 = sphi 0, %s602
      %s604 = sphi 0, %s602
      %s605 = sphi 0, %s604
      %s619 = sphi 0, %s605
      %s623 = sphi 0, %s623
      %s625 = sphi 0, %s623
      %s626 = sphi 0, %s625
      %s640 = sphi 0, %s626
      %s644 = sphi 0, %s644
      %s646 = sphi 0, %s644
      %s647 = sphi 0, %s646
      %s661 = sphi 0, %s647
      %s665 = sphi 0, %s665
      %s667 = sphi 0, %s665
      %s668 = sphi 0, %s667
      %s682 = sphi 0, %s668
      %s686 = sphi 0, %s686
      %s688 = sphi 0, %s686
      %s689 = sphi 0, %s688
      %s703 = sphi 0, %s689
    $region4: #{dino_ccg_forward.1} parent=1 // loop_header_branch
      %54 = sbr.rel (%p52) target = $region8
    $region5: #{dino_ccg_forward.1} parent=1 // loop_body
      %s56 = ssub.s32 %s51, 1
      %s57 = ssub.s32 %s51, 2
      %s58 = sadd.s32 %s51, 1
      %s60 = sadd.s32 %s59, 1
      %p63 = scmp.eq.s32.totalorder %s51, 1
      %p64 = scmp.ne.s32.totalorder %s59, %s61
      %p65 = scmp.eq.s32.totalorder %s51, 0
      %p66 = por %p64, %p65
      %p67 = scmp.ne.s32.totalorder %s59, %s61
      %p68 = scmp.eq.s32.totalorder %s56, 1
      %p69 = por %p67, %p68
      %p70 = scmp.ne.s32.totalorder %s61, %s62
      %p71 = scmp.eq.s32.totalorder %s56, 0
      %p72 = por %p70, %p71
      %p73 = scmp.ne.s32.totalorder %s61, %s62
      %p74 = scmp.eq.s32.totalorder %s57, 1
      %p75 = por %p73, %p74
      %p77 = scmp.ne.s32.totalorder %s62, %s76
      %p78 = scmp.eq.s32.totalorder %s57, 0
      %p79 = por %p77, %p78
      %s81 = sadd.s32 %s80, 1
      %p84 = scmp.eq.s32.totalorder %s51, 1
      %p85 = scmp.ne.s32.totalorder %s80, %s82
      %p86 = scmp.eq.s32.totalorder %s51, 0
      %p87 = por %p85, %p86
      %p88 = scmp.ne.s32.totalorder %s80, %s82
      %p89 = scmp.eq.s32.totalorder %s56, 1
      %p90 = por %p88, %p89
      %p91 = scmp.ne.s32.totalorder %s82, %s83
      %p92 = scmp.eq.s32.totalorder %s56, 0
      %p93 = por %p91, %p92
      %p94 = scmp.ne.s32.totalorder %s82, %s83
      %p95 = scmp.eq.s32.totalorder %s57, 1
      %p96 = por %p94, %p95
      %p98 = scmp.ne.s32.totalorder %s83, %s97
      %p99 = scmp.eq.s32.totalorder %s57, 0
      %p100 = por %p98, %p99
      %s102 = sadd.s32 %s101, 1
      %p105 = scmp.eq.s32.totalorder %s51, 1
      %p106 = scmp.ne.s32.totalorder %s101, %s103
      %p107 = scmp.eq.s32.totalorder %s51, 0
      %p108 = por %p106, %p107
      %p109 = scmp.ne.s32.totalorder %s101, %s103
      %p110 = scmp.eq.s32.totalorder %s56, 1
      %p111 = por %p109, %p110
      %p112 = scmp.ne.s32.totalorder %s103, %s104
      %p113 = scmp.eq.s32.totalorder %s56, 0
      %p114 = por %p112, %p113
      %p115 = scmp.ne.s32.totalorder %s103, %s104
      %p116 = scmp.eq.s32.totalorder %s57, 1
      %p117 = por %p115, %p116
      %p119 = scmp.ne.s32.totalorder %s104, %s118
      %p120 = scmp.eq.s32.totalorder %s57, 0
      %p121 = por %p119, %p120
      %s123 = sadd.s32 %s122, 1
      %p126 = scmp.eq.s32.totalorder %s51, 1
      %p127 = scmp.ne.s32.totalorder %s122, %s124
      %p128 = scmp.eq.s32.totalorder %s51, 0
      %p129 = por %p127, %p128
      %p130 = scmp.ne.s32.totalorder %s122, %s124
      %p131 = scmp.eq.s32.totalorder %s56, 1
      %p132 = por %p130, %p131
      %p133 = scmp.ne.s32.totalorder %s124, %s125
      %p134 = scmp.eq.s32.totalorder %s56, 0
      %p135 = por %p133, %p134
      %p136 = scmp.ne.s32.totalorder %s124, %s125
      %p137 = scmp.eq.s32.totalorder %s57, 1
      %p138 = por %p136, %p137
      %p140 = scmp.ne.s32.totalorder %s125, %s139
      %p141 = scmp.eq.s32.totalorder %s57, 0
      %p142 = por %p140, %p141
      %s144 = sadd.s32 %s143, 1
      %p147 = scmp.eq.s32.totalorder %s51, 1
      %p148 = scmp.ne.s32.totalorder %s143, %s145
      %p149 = scmp.eq.s32.totalorder %s51, 0
      %p150 = por %p148, %p149
      %p151 = scmp.ne.s32.totalorder %s143, %s145
      %p152 = scmp.eq.s32.totalorder %s56, 1
      %p153 = por %p151, %p152
      %p154 = scmp.ne.s32.totalorder %s145, %s146
      %p155 = scmp.eq.s32.totalorder %s56, 0
      %p156 = por %p154, %p155
      %p157 = scmp.ne.s32.totalorder %s145, %s146
      %p158 = scmp.eq.s32.totalorder %s57, 1
      %p159 = por %p157, %p158
      %p161 = scmp.ne.s32.totalorder %s146, %s160
      %p162 = scmp.eq.s32.totalorder %s57, 0
      %p163 = por %p161, %p162
      %s164 = ssub.s32 %s51, %s58
      %p165 = scmp.eq.s32.totalorder %s164, 0
      %s167 = sadd.s32 %s166, 1
      %s168 = scalar_select %p165, %s166, %s167
      %p171 = pneg %p165
      %p172 = scmp.eq.s32.totalorder %s51, 1
      %p173 = por %p171, %p172
      %p174 = scmp.ne.s32.totalorder %s166, %s169
      %p175 = scmp.eq.s32.totalorder %s51, 0
      %p176 = por %p174, %p175
      %p177 = scmp.ne.s32.totalorder %s166, %s169
      %p178 = scmp.eq.s32.totalorder %s56, 1
      %p179 = por %p177, %p178
      %p180 = scmp.ne.s32.totalorder %s169, %s170
      %p181 = scmp.eq.s32.totalorder %s56, 0
      %p182 = por %p180, %p181
      %p183 = scmp.ne.s32.totalorder %s169, %s170
      %p184 = scmp.eq.s32.totalorder %s57, 1
      %p185 = por %p183, %p184
      %p187 = scmp.ne.s32.totalorder %s170, %s186
      %p188 = scmp.eq.s32.totalorder %s57, 0
      %p189 = por %p187, %p188
      %s190 = ssub.s32 %s51, %s58
      %p191 = scmp.eq.s32.totalorder %s190, 0
      %s193 = sadd.s32 %s192, 1
      %s194 = scalar_select %p191, %s192, %s193
      %p197 = pneg %p191
      %p198 = scmp.eq.s32.totalorder %s51, 1
      %p199 = por %p197, %p198
      %p200 = scmp.ne.s32.totalorder %s192, %s195
      %p201 = scmp.eq.s32.totalorder %s51, 0
      %p202 = por %p200, %p201
      %p203 = scmp.ne.s32.totalorder %s192, %s195
      %p204 = scmp.eq.s32.totalorder %s56, 1
      %p205 = por %p203, %p204
      %p206 = scmp.ne.s32.totalorder %s195, %s196
      %p207 = scmp.eq.s32.totalorder %s56, 0
      %p208 = por %p206, %p207
      %p209 = scmp.ne.s32.totalorder %s195, %s196
      %p210 = scmp.eq.s32.totalorder %s57, 1
      %p211 = por %p209, %p210
      %p213 = scmp.ne.s32.totalorder %s196, %s212
      %p214 = scmp.eq.s32.totalorder %s57, 0
      %p215 = por %p213, %p214
      %s216 = ssub.s32 %s51, %s58
      %p217 = scmp.eq.s32.totalorder %s216, 0
      %s219 = sadd.s32 %s218, 1
      %s220 = scalar_select %p217, %s218, %s219
      %p223 = pneg %p217
      %p224 = scmp.eq.s32.totalorder %s51, 1
      %p225 = por %p223, %p224
      %p226 = scmp.ne.s32.totalorder %s218, %s221
      %p227 = scmp.eq.s32.totalorder %s51, 0
      %p228 = por %p226, %p227
      %p229 = scmp.ne.s32.totalorder %s218, %s221
      %p230 = scmp.eq.s32.totalorder %s56, 1
      %p231 = por %p229, %p230
      %p232 = scmp.ne.s32.totalorder %s221, %s222
      %p233 = scmp.eq.s32.totalorder %s56, 0
      %p234 = por %p232, %p233
      %p235 = scmp.ne.s32.totalorder %s221, %s222
      %p236 = scmp.eq.s32.totalorder %s57, 1
      %p237 = por %p235, %p236
      %p239 = scmp.ne.s32.totalorder %s222, %s238
      %p240 = scmp.eq.s32.totalorder %s57, 0
      %p241 = por %p239, %p240
      %s242 = ssub.s32 %s51, %s58
      %p243 = scmp.eq.s32.totalorder %s242, 0
      %s245 = sadd.s32 %s244, 1
      %s246 = scalar_select %p243, %s244, %s245
      %p249 = pneg %p243
      %p250 = scmp.eq.s32.totalorder %s51, 1
      %p251 = por %p249, %p250
      %p252 = scmp.ne.s32.totalorder %s244, %s247
      %p253 = scmp.eq.s32.totalorder %s51, 0
      %p254 = por %p252, %p253
      %p255 = scmp.ne.s32.totalorder %s244, %s247
      %p256 = scmp.eq.s32.totalorder %s56, 1
      %p257 = por %p255, %p256
      %p258 = scmp.ne.s32.totalorder %s247, %s248
      %p259 = scmp.eq.s32.totalorder %s56, 0
      %p260 = por %p258, %p259
      %p261 = scmp.ne.s32.totalorder %s247, %s248
      %p262 = scmp.eq.s32.totalorder %s57, 1
      %p263 = por %p261, %p262
      %p265 = scmp.ne.s32.totalorder %s248, %s264
      %p266 = scmp.eq.s32.totalorder %s57, 0
      %p267 = por %p265, %p266
      %s268 = ssub.s32 %s51, %s58
      %p269 = scmp.eq.s32.totalorder %s268, 0
      %s271 = sadd.s32 %s270, 1
      %s272 = scalar_select %p269, %s270, %s271
      %p275 = pneg %p269
      %p276 = scmp.eq.s32.totalorder %s51, 1
      %p277 = por %p275, %p276
      %p278 = scmp.ne.s32.totalorder %s270, %s273
      %p279 = scmp.eq.s32.totalorder %s51, 0
      %p280 = por %p278, %p279
      %p281 = scmp.ne.s32.totalorder %s270, %s273
      %p282 = scmp.eq.s32.totalorder %s56, 1
      %p283 = por %p281, %p282
      %p284 = scmp.ne.s32.totalorder %s273, %s274
      %p285 = scmp.eq.s32.totalorder %s56, 0
      %p286 = por %p284, %p285
      %p287 = scmp.ne.s32.totalorder %s273, %s274
      %p288 = scmp.eq.s32.totalorder %s57, 1
      %p289 = por %p287, %p288
      %p291 = scmp.ne.s32.totalorder %s274, %s290
      %p292 = scmp.eq.s32.totalorder %s57, 0
      %p293 = por %p291, %p292
      %s294 = ssub.s32 %s51, %s58
      %p295 = scmp.eq.s32.totalorder %s294, 0
      %s297 = sadd.s32 %s296, 1
      %s298 = scalar_select %p295, %s296, %s297
      %p301 = pneg %p295
      %p302 = scmp.eq.s32.totalorder %s51, 1
      %p303 = por %p301, %p302
      %p304 = scmp.ne.s32.totalorder %s296, %s299
      %p305 = scmp.eq.s32.totalorder %s51, 0
      %p306 = por %p304, %p305
      %p307 = scmp.ne.s32.totalorder %s296, %s299
      %p308 = scmp.eq.s32.totalorder %s56, 1
      %p309 = por %p307, %p308
      %p310 = scmp.ne.s32.totalorder %s299, %s300
      %p311 = scmp.eq.s32.totalorder %s56, 0
      %p312 = por %p310, %p311
      %p313 = scmp.ne.s32.totalorder %s299, %s300
      %p314 = scmp.eq.s32.totalorder %s57, 1
      %p315 = por %p313, %p314
      %p317 = scmp.ne.s32.totalorder %s300, %s316
      %p318 = scmp.eq.s32.totalorder %s57, 0
      %p319 = por %p317, %p318
      %s320 = ssub.s32 %s51, %s58
      %p321 = scmp.eq.s32.totalorder %s320, 0
      %s323 = sadd.s32 %s322, 1
      %s324 = scalar_select %p321, %s322, %s323
      %p327 = pneg %p321
      %p328 = scmp.eq.s32.totalorder %s51, 1
      %p329 = por %p327, %p328
      %p330 = scmp.ne.s32.totalorder %s322, %s325
      %p331 = scmp.eq.s32.totalorder %s51, 0
      %p332 = por %p330, %p331
      %p333 = scmp.ne.s32.totalorder %s322, %s325
      %p334 = scmp.eq.s32.totalorder %s56, 1
      %p335 = por %p333, %p334
      %p336 = scmp.ne.s32.totalorder %s325, %s326
      %p337 = scmp.eq.s32.totalorder %s56, 0
      %p338 = por %p336, %p337
      %p339 = scmp.ne.s32.totalorder %s325, %s326
      %p340 = scmp.eq.s32.totalorder %s57, 1
      %p341 = por %p339, %p340
      %p343 = scmp.ne.s32.totalorder %s326, %s342
      %p344 = scmp.eq.s32.totalorder %s57, 0
      %p345 = por %p343, %p344
      %s346 = ssub.s32 %s51, %s58
      %p347 = scmp.eq.s32.totalorder %s346, 0
      %s349 = sadd.s32 %s348, 1
      %s350 = scalar_select %p347, %s348, %s349
      %p353 = pneg %p347
      %p354 = scmp.eq.s32.totalorder %s51, 1
      %p355 = por %p353, %p354
      %p356 = scmp.ne.s32.totalorder %s348, %s351
      %p357 = scmp.eq.s32.totalorder %s51, 0
      %p358 = por %p356, %p357
      %p359 = scmp.ne.s32.totalorder %s348, %s351
      %p360 = scmp.eq.s32.totalorder %s56, 1
      %p361 = por %p359, %p360
      %p362 = scmp.ne.s32.totalorder %s351, %s352
      %p363 = scmp.eq.s32.totalorder %s56, 0
      %p364 = por %p362, %p363
      %p365 = scmp.ne.s32.totalorder %s351, %s352
      %p366 = scmp.eq.s32.totalorder %s57, 1
      %p367 = por %p365, %p366
      %p369 = scmp.ne.s32.totalorder %s352, %s368
      %p370 = scmp.eq.s32.totalorder %s57, 0
      %p371 = por %p369, %p370
      %s372 = ssub.s32 %s51, %s58
      %p373 = scmp.eq.s32.totalorder %s372, 0
      %s375 = sadd.s32 %s374, 1
      %s376 = scalar_select %p373, %s374, %s375
      %p379 = pneg %p373
      %p380 = scmp.eq.s32.totalorder %s51, 1
      %p381 = por %p379, %p380
      %p382 = scmp.ne.s32.totalorder %s374, %s377
      %p383 = scmp.eq.s32.totalorder %s51, 0
      %p384 = por %p382, %p383
      %p385 = scmp.ne.s32.totalorder %s374, %s377
      %p386 = scmp.eq.s32.totalorder %s56, 1
      %p387 = por %p385, %p386
      %p388 = scmp.ne.s32.totalorder %s377, %s378
      %p389 = scmp.eq.s32.totalorder %s56, 0
      %p390 = por %p388, %p389
      %p391 = scmp.ne.s32.totalorder %s377, %s378
      %p392 = scmp.eq.s32.totalorder %s57, 1
      %p393 = por %p391, %p392
      %p395 = scmp.ne.s32.totalorder %s378, %s394
      %p396 = scmp.eq.s32.totalorder %s57, 0
      %p397 = por %p395, %p396
      %s398 = ssub.s32 %s51, %s58
      %p399 = scmp.eq.s32.totalorder %s398, 0
      %s401 = sadd.s32 %s400, 1
      %s402 = scalar_select %p399, %s400, %s401
      %p405 = pneg %p399
      %p406 = scmp.eq.s32.totalorder %s51, 1
      %p407 = por %p405, %p406
      %p408 = scmp.ne.s32.totalorder %s400, %s403
      %p409 = scmp.eq.s32.totalorder %s51, 0
      %p410 = por %p408, %p409
      %p411 = scmp.ne.s32.totalorder %s400, %s403
      %p412 = scmp.eq.s32.totalorder %s56, 1
      %p413 = por %p411, %p412
      %p414 = scmp.ne.s32.totalorder %s403, %s404
      %p415 = scmp.eq.s32.totalorder %s56, 0
      %p416 = por %p414, %p415
      %p417 = scmp.ne.s32.totalorder %s403, %s404
      %p418 = scmp.eq.s32.totalorder %s57, 1
      %p419 = por %p417, %p418
      %p421 = scmp.ne.s32.totalorder %s404, %s420
      %p422 = scmp.eq.s32.totalorder %s57, 0
      %p423 = por %p421, %p422
      %s424 = ssub.s32 %s51, %s58
      %p425 = scmp.eq.s32.totalorder %s424, 0
      %s427 = sadd.s32 %s426, 1
      %s428 = scalar_select %p425, %s426, %s427
      %p431 = pneg %p425
      %p432 = scmp.eq.s32.totalorder %s51, 1
      %p433 = por %p431, %p432
      %p434 = scmp.ne.s32.totalorder %s426, %s429
      %p435 = scmp.eq.s32.totalorder %s51, 0
      %p436 = por %p434, %p435
      %p437 = scmp.ne.s32.totalorder %s426, %s429
      %p438 = scmp.eq.s32.totalorder %s56, 1
      %p439 = por %p437, %p438
      %p440 = scmp.ne.s32.totalorder %s429, %s430
      %p441 = scmp.eq.s32.totalorder %s56, 0
      %p442 = por %p440, %p441
      %p443 = scmp.ne.s32.totalorder %s429, %s430
      %p444 = scmp.eq.s32.totalorder %s57, 1
      %p445 = por %p443, %p444
      %p447 = scmp.ne.s32.totalorder %s430, %s446
      %p448 = scmp.eq.s32.totalorder %s57, 0
      %p449 = por %p447, %p448
      %s450 = ssub.s32 %s51, %s58
      %p451 = scmp.eq.s32.totalorder %s450, 0
      %s453 = sadd.s32 %s452, 1
      %s454 = scalar_select %p451, %s452, %s453
      %p457 = pneg %p451
      %p458 = scmp.eq.s32.totalorder %s51, 1
      %p459 = por %p457, %p458
      %p460 = scmp.ne.s32.totalorder %s452, %s455
      %p461 = scmp.eq.s32.totalorder %s51, 0
      %p462 = por %p460, %p461
      %p463 = scmp.ne.s32.totalorder %s452, %s455
      %p464 = scmp.eq.s32.totalorder %s56, 1
      %p465 = por %p463, %p464
      %p466 = scmp.ne.s32.totalorder %s455, %s456
      %p467 = scmp.eq.s32.totalorder %s56, 0
      %p468 = por %p466, %p467
      %p469 = scmp.ne.s32.totalorder %s455, %s456
      %p470 = scmp.eq.s32.totalorder %s57, 1
      %p471 = por %p469, %p470
      %p473 = scmp.ne.s32.totalorder %s456, %s472
      %p474 = scmp.eq.s32.totalorder %s57, 0
      %p475 = por %p473, %p474
      %s477 = sadd.s32 %s476, 1
      %p480 = scmp.eq.s32.totalorder %s51, 1
      %p481 = scmp.ne.s32.totalorder %s476, %s478
      %p482 = scmp.eq.s32.totalorder %s51, 0
      %p483 = por %p481, %p482
      %p484 = scmp.ne.s32.totalorder %s476, %s478
      %p485 = scmp.eq.s32.totalorder %s56, 1
      %p486 = por %p484, %p485
      %p487 = scmp.ne.s32.totalorder %s478, %s479
      %p488 = scmp.eq.s32.totalorder %s56, 0
      %p489 = por %p487, %p488
      %p490 = scmp.ne.s32.totalorder %s478, %s479
      %p491 = scmp.eq.s32.totalorder %s57, 1
      %p492 = por %p490, %p491
      %p494 = scmp.ne.s32.totalorder %s479, %s493
      %p495 = scmp.eq.s32.totalorder %s57, 0
      %p496 = por %p494, %p495
      %s498 = sadd.s32 %s497, 1
      %p501 = scmp.eq.s32.totalorder %s51, 1
      %p502 = scmp.ne.s32.totalorder %s497, %s499
      %p503 = scmp.eq.s32.totalorder %s51, 0
      %p504 = por %p502, %p503
      %p505 = scmp.ne.s32.totalorder %s497, %s499
      %p506 = scmp.eq.s32.totalorder %s56, 1
      %p507 = por %p505, %p506
      %p508 = scmp.ne.s32.totalorder %s499, %s500
      %p509 = scmp.eq.s32.totalorder %s56, 0
      %p510 = por %p508, %p509
      %p511 = scmp.ne.s32.totalorder %s499, %s500
      %p512 = scmp.eq.s32.totalorder %s57, 1
      %p513 = por %p511, %p512
      %p515 = scmp.ne.s32.totalorder %s500, %s514
      %p516 = scmp.eq.s32.totalorder %s57, 0
      %p517 = por %p515, %p516
      %s519 = sadd.s32 %s518, 1
      %p522 = scmp.eq.s32.totalorder %s51, 1
      %p523 = scmp.ne.s32.totalorder %s518, %s520
      %p524 = scmp.eq.s32.totalorder %s51, 0
      %p525 = por %p523, %p524
      %p526 = scmp.ne.s32.totalorder %s518, %s520
      %p527 = scmp.eq.s32.totalorder %s56, 1
      %p528 = por %p526, %p527
      %p529 = scmp.ne.s32.totalorder %s520, %s521
      %p530 = scmp.eq.s32.totalorder %s56, 0
      %p531 = por %p529, %p530
      %p532 = scmp.ne.s32.totalorder %s520, %s521
      %p533 = scmp.eq.s32.totalorder %s57, 1
      %p534 = por %p532, %p533
      %p536 = scmp.ne.s32.totalorder %s521, %s535
      %p537 = scmp.eq.s32.totalorder %s57, 0
      %p538 = por %p536, %p537
      %s540 = sadd.s32 %s539, 1
      %p543 = scmp.eq.s32.totalorder %s51, 1
      %p544 = scmp.ne.s32.totalorder %s539, %s541
      %p545 = scmp.eq.s32.totalorder %s51, 0
      %p546 = por %p544, %p545
      %p547 = scmp.ne.s32.totalorder %s539, %s541
      %p548 = scmp.eq.s32.totalorder %s56, 1
      %p549 = por %p547, %p548
      %p550 = scmp.ne.s32.totalorder %s541, %s542
      %p551 = scmp.eq.s32.totalorder %s56, 0
      %p552 = por %p550, %p551
      %p553 = scmp.ne.s32.totalorder %s541, %s542
      %p554 = scmp.eq.s32.totalorder %s57, 1
      %p555 = por %p553, %p554
      %p557 = scmp.ne.s32.totalorder %s542, %s556
      %p558 = scmp.eq.s32.totalorder %s57, 0
      %p559 = por %p557, %p558
      %s561 = sadd.s32 %s560, 1
      %p564 = scmp.eq.s32.totalorder %s51, 1
      %p565 = scmp.ne.s32.totalorder %s560, %s562
      %p566 = scmp.eq.s32.totalorder %s51, 0
      %p567 = por %p565, %p566
      %p568 = scmp.ne.s32.totalorder %s560, %s562
      %p569 = scmp.eq.s32.totalorder %s56, 1
      %p570 = por %p568, %p569
      %p571 = scmp.ne.s32.totalorder %s562, %s563
      %p572 = scmp.eq.s32.totalorder %s56, 0
      %p573 = por %p571, %p572
      %p574 = scmp.ne.s32.totalorder %s562, %s563
      %p575 = scmp.eq.s32.totalorder %s57, 1
      %p576 = por %p574, %p575
      %p578 = scmp.ne.s32.totalorder %s563, %s577
      %p579 = scmp.eq.s32.totalorder %s57, 0
      %p580 = por %p578, %p579
      %s582 = sadd.s32 %s581, 1
      %p585 = scmp.eq.s32.totalorder %s51, 1
      %p586 = scmp.ne.s32.totalorder %s581, %s583
      %p587 = scmp.eq.s32.totalorder %s51, 0
      %p588 = por %p586, %p587
      %p589 = scmp.ne.s32.totalorder %s581, %s583
      %p590 = scmp.eq.s32.totalorder %s56, 1
      %p591 = por %p589, %p590
      %p592 = scmp.ne.s32.totalorder %s583, %s584
      %p593 = scmp.eq.s32.totalorder %s56, 0
      %p594 = por %p592, %p593
      %p595 = scmp.ne.s32.totalorder %s583, %s584
      %p596 = scmp.eq.s32.totalorder %s57, 1
      %p597 = por %p595, %p596
      %p599 = scmp.ne.s32.totalorder %s584, %s598
      %p600 = scmp.eq.s32.totalorder %s57, 0
      %p601 = por %p599, %p600
      %s603 = sadd.s32 %s602, 1
      %p606 = scmp.eq.s32.totalorder %s51, 1
      %p607 = scmp.ne.s32.totalorder %s602, %s604
      %p608 = scmp.eq.s32.totalorder %s51, 0
      %p609 = por %p607, %p608
      %p610 = scmp.ne.s32.totalorder %s602, %s604
      %p611 = scmp.eq.s32.totalorder %s56, 1
      %p612 = por %p610, %p611
      %p613 = scmp.ne.s32.totalorder %s604, %s605
      %p614 = scmp.eq.s32.totalorder %s56, 0
      %p615 = por %p613, %p614
      %p616 = scmp.ne.s32.totalorder %s604, %s605
      %p617 = scmp.eq.s32.totalorder %s57, 1
      %p618 = por %p616, %p617
      %p620 = scmp.ne.s32.totalorder %s605, %s619
      %p621 = scmp.eq.s32.totalorder %s57, 0
      %p622 = por %p620, %p621
      %s624 = sadd.s32 %s623, 1
      %p627 = scmp.eq.s32.totalorder %s51, 1
      %p628 = scmp.ne.s32.totalorder %s623, %s625
      %p629 = scmp.eq.s32.totalorder %s51, 0
      %p630 = por %p628, %p629
      %p631 = scmp.ne.s32.totalorder %s623, %s625
      %p632 = scmp.eq.s32.totalorder %s56, 1
      %p633 = por %p631, %p632
      %p634 = scmp.ne.s32.totalorder %s625, %s626
      %p635 = scmp.eq.s32.totalorder %s56, 0
      %p636 = por %p634, %p635
      %p637 = scmp.ne.s32.totalorder %s625, %s626
      %p638 = scmp.eq.s32.totalorder %s57, 1
      %p639 = por %p637, %p638
      %p641 = scmp.ne.s32.totalorder %s626, %s640
      %p642 = scmp.eq.s32.totalorder %s57, 0
      %p643 = por %p641, %p642
      %s645 = sadd.s32 %s644, 1
      %p648 = scmp.eq.s32.totalorder %s51, 1
      %p649 = scmp.ne.s32.totalorder %s644, %s646
      %p650 = scmp.eq.s32.totalorder %s51, 0
      %p651 = por %p649, %p650
      %p652 = scmp.ne.s32.totalorder %s644, %s646
      %p653 = scmp.eq.s32.totalorder %s56, 1
      %p654 = por %p652, %p653
      %p655 = scmp.ne.s32.totalorder %s646, %s647
      %p656 = scmp.eq.s32.totalorder %s56, 0
      %p657 = por %p655, %p656
      %p658 = scmp.ne.s32.totalorder %s646, %s647
      %p659 = scmp.eq.s32.totalorder %s57, 1
      %p660 = por %p658, %p659
      %p662 = scmp.ne.s32.totalorder %s647, %s661
      %p663 = scmp.eq.s32.totalorder %s57, 0
      %p664 = por %p662, %p663
      %s666 = sadd.s32 %s665, 1
      %p669 = scmp.eq.s32.totalorder %s51, 1
      %p670 = scmp.ne.s32.totalorder %s665, %s667
      %p671 = scmp.eq.s32.totalorder %s51, 0
      %p672 = por %p670, %p671
      %p673 = scmp.ne.s32.totalorder %s665, %s667
      %p674 = scmp.eq.s32.totalorder %s56, 1
      %p675 = por %p673, %p674
      %p676 = scmp.ne.s32.totalorder %s667, %s668
      %p677 = scmp.eq.s32.totalorder %s56, 0
      %p678 = por %p676, %p677
      %p679 = scmp.ne.s32.totalorder %s667, %s668
      %p680 = scmp.eq.s32.totalorder %s57, 1
      %p681 = por %p679, %p680
      %p683 = scmp.ne.s32.totalorder %s668, %s682
      %p684 = scmp.eq.s32.totalorder %s57, 0
      %p685 = por %p683, %p684
      %s687 = sadd.s32 %s686, 1
      %p690 = scmp.eq.s32.totalorder %s51, 1
      %p691 = scmp.ne.s32.totalorder %s686, %s688
      %p692 = scmp.eq.s32.totalorder %s51, 0
      %p693 = por %p691, %p692
      %p694 = scmp.ne.s32.totalorder %s686, %s688
      %p695 = scmp.eq.s32.totalorder %s56, 1
      %p696 = por %p694, %p695
      %p697 = scmp.ne.s32.totalorder %s688, %s689
      %p698 = scmp.eq.s32.totalorder %s56, 0
      %p699 = por %p697, %p698
      %p700 = scmp.ne.s32.totalorder %s688, %s689
      %p701 = scmp.eq.s32.totalorder %s57, 1
      %p702 = por %p700, %p701
      %p704 = scmp.ne.s32.totalorder %s689, %s703
      %p705 = scmp.eq.s32.totalorder %s57, 0
      %p706 = por %p704, %p705
      %p707 = scmp.le.s32.totalorder 1, %s51
      %p708 = scmp.lt.s32.totalorder %s51, 3
      %p709 = pnand %p707, %p708
      %p710 = pneg %p709
      // Predicated region
      $region9: #{dino_ccg_forward.1} parent=5 // pred_check
        _
      $region10: #{dino_ccg_forward.1} parent=5 // pred_check_branch
        %712 = sbr.rel (%p709) target = $region12
      $region11: #{dino_ccg_forward.1} parent=5 // pred_region
        %s713 = ssub.s32 %s51, 1
        // Predicated region
        $region13: #{dino_ccg_forward.1} parent=11 // pred_check
          %p714 = pneg %p72
        $region14: #{dino_ccg_forward.1} parent=11 // pred_check_branch
          %716 = sbr.rel (%p714) target = $region16
        $region15: #{dino_ccg_forward.1} parent=11 // pred_region
          _
        $region16: #{dino_ccg_forward.1} parent=11 // pred_fallthru
          _
        // Predicated region
        $region17: #{dino_ccg_forward.1} parent=11 // pred_check
          %p717 = pneg %p93
        $region18: #{dino_ccg_forward.1} parent=11 // pred_check_branch
          %719 = sbr.rel (%p717) target = $region20
        $region19: #{dino_ccg_forward.1} parent=11 // pred_region
          %s721 = ssub.s32 1024, 1024
          %722 = vsyncadd [#allocation5], %s721
          %s723 = sshll.u32 [#allocation4], 4
          %s724 = int_to_ptr.vmem [resolvable:$true] %s723
          %729 = dma.hbm_to_vmem [thread:$0]  %s1, 1024, %s724, [#allocation5], 64, 64, 4
        $region20: #{dino_ccg_forward.1} parent=11 // pred_fallthru
          _
        // Predicated region
        $region21: #{dino_ccg_forward.1} parent=11 // pred_check
          %p730 = pneg %p114
        $region22: #{dino_ccg_forward.1} parent=11 // pred_check_branch
          %732 = sbr.rel (%p730) target = $region24
        $region23: #{dino_ccg_forward.1} parent=11 // pred_region
          %s734 = ssub.s32 16, 16
          %735 = vsyncadd [#allocation8], %s734
          %s737 = sshll.u32 [#allocation7], 4
          %s738 = int_to_ptr.vmem [resolvable:$true] %s737
          %740 = dma.hbm_to_vmem [thread:$0]  %s2, 16, %s738, [#allocation8]
        $region24: #{dino_ccg_forward.1} parent=11 // pred_fallthru
          _
        // Predicated region
        $region25: #{dino_ccg_forward.1} parent=11 // pred_check
          %p741 = pneg %p135
        $region26: #{dino_ccg_forward.1} parent=11 // pred_check_branch
          %743 = sbr.rel (%p741) target = $region28
        $region27: #{dino_ccg_forward.1} parent=11 // pred_region
          _
        $region28: #{dino_ccg_forward.1} parent=11 // pred_fallthru
          _
        // Predicated region
        $region29: #{dino_ccg_forward.1} parent=11 // pred_check
          %p744 = pneg %p156
        $region30: #{dino_ccg_forward.1} parent=11 // pred_check_branch
          %746 = sbr.rel (%p744) target = $region32
        $region31: #{dino_ccg_forward.1} parent=11 // pred_region
          %s748 = ssub.s32 384, 384
          %749 = vsyncadd [#allocation8], %s748
          %s750 = sshll.u32 [#allocation9], 4
          %s751 = int_to_ptr.vmem [resolvable:$true] %s750
          %756 = dma.hbm_to_vmem [thread:$0]  %s4, 384, %s751, [#allocation8], 128, 128, 8
        $region32: #{dino_ccg_forward.1} parent=11 // pred_fallthru
          _
        // Predicated region
        $region33: #{dino_ccg_forward.1} parent=11 // pred_check
          %p757 = pneg %p489
        $region34: #{dino_ccg_forward.1} parent=11 // pred_check_branch
          %759 = sbr.rel (%p757) target = $region36
        $region35: #{dino_ccg_forward.1} parent=11 // pred_region
          %s761 = ssub.s32 16, 16
          %762 = vsyncadd [#allocation20], %s761
          %s764 = sshll.u32 [#allocation19], 4
          %s765 = int_to_ptr.vmem [resolvable:$true] %s764
          %767 = dma.hbm_to_vmem [thread:$0]  %s17, 16, %s765, [#allocation20]
        $region36: #{dino_ccg_forward.1} parent=11 // pred_fallthru
          _
        // Predicated region
        $region37: #{dino_ccg_forward.1} parent=11 // pred_check
          %p768 = pneg %p510
        $region38: #{dino_ccg_forward.1} parent=11 // pred_check_branch
          %770 = sbr.rel (%p768) target = $region40
        $region39: #{dino_ccg_forward.1} parent=11 // pred_region
          %s772 = ssub.s32 16, 16
          %773 = vsyncadd [#allocation20], %s772
          %s775 = sshll.u32 [#allocation21], 4
          %s776 = int_to_ptr.vmem [resolvable:$true] %s775
          %778 = dma.hbm_to_vmem [thread:$0]  %s18, 16, %s776, [#allocation20]
        $region40: #{dino_ccg_forward.1} parent=11 // pred_fallthru
          _
        // Predicated region
        $region41: #{dino_ccg_forward.1} parent=11 // pred_check
          %p779 = pneg %p531
        $region42: #{dino_ccg_forward.1} parent=11 // pred_check_branch
          %781 = sbr.rel (%p779) target = $region44
        $region43: #{dino_ccg_forward.1} parent=11 // pred_region
          %s783 = ssub.s32 2048, 2048
          %784 = vsyncadd [#allocation23], %s783
          %s785 = sshll.u32 [#allocation22], 4
          %s786 = int_to_ptr.vmem [resolvable:$true] %s785
          %791 = dma.hbm_to_vmem [thread:$0]  %s19, 2048, %s786, [#allocation23], 128, 128, 8
        $region44: #{dino_ccg_forward.1} parent=11 // pred_fallthru
          _
        // Predicated region
        $region45: #{dino_ccg_forward.1} parent=11 // pred_check
          %p792 = pneg %p552
        $region46: #{dino_ccg_forward.1} parent=11 // pred_check_branch
          %794 = sbr.rel (%p792) target = $region48
        $region47: #{dino_ccg_forward.1} parent=11 // pred_region
          _
        $region48: #{dino_ccg_forward.1} parent=11 // pred_fallthru
          _
        // Predicated region
        $region49: #{dino_ccg_forward.1} parent=11 // pred_check
          %p795 = pneg %p573
        $region50: #{dino_ccg_forward.1} parent=11 // pred_check_branch
          %797 = sbr.rel (%p795) target = $region52
        $region51: #{dino_ccg_forward.1} parent=11 // pred_region
          _
        $region52: #{dino_ccg_forward.1} parent=11 // pred_fallthru
          _
        // Predicated region
        $region53: #{dino_ccg_forward.1} parent=11 // pred_check
          %p798 = pneg %p594
        $region54: #{dino_ccg_forward.1} parent=11 // pred_check_branch
          %800 = sbr.rel (%p798) target = $region56
        $region55: #{dino_ccg_forward.1} parent=11 // pred_region
          _
        $region56: #{dino_ccg_forward.1} parent=11 // pred_fallthru
          _
        // Predicated region
        $region57: #{dino_ccg_forward.1} parent=11 // pred_check
          %p801 = pneg %p615
        $region58: #{dino_ccg_forward.1} parent=11 // pred_check_branch
          %803 = sbr.rel (%p801) target = $region60
        $region59: #{dino_ccg_forward.1} parent=11 // pred_region
          _
        $region60: #{dino_ccg_forward.1} parent=11 // pred_fallthru
          _
      $region12: #{dino_ccg_forward.1} parent=5 // pred_fallthru
        _
      %p804 = scmp.lt.s32.totalorder %s51, 2
      // Predicated region
      $region61: #{dino_ccg_forward.1} parent=5 // pred_check
        %p805 = pneg %p804
      $region62: #{dino_ccg_forward.1} parent=5 // pred_check_branch
        %807 = sbr.rel (%p805) target = $region64
      $region63: #{dino_ccg_forward.1} parent=5 // pred_region
        // Predicated region
        $region65: #{dino_ccg_forward.1} parent=63 // pred_check
          %p808 = pneg %p176
        $region66: #{dino_ccg_forward.1} parent=63 // pred_check_branch
          %810 = sbr.rel (%p808) target = $region68
        $region67: #{dino_ccg_forward.1} parent=63 // pred_region
          %s811 = sand.u32 %s51, 1
          %s812 = scalar_lea.sflag [#allocation11], %s811
          %s813 = sand.u32 %s166, 1
          %s814 = scalar_lea.vmem [#allocation10], %s813
          %s816 = ssub.s32 16, 16
          %817 = vsyncadd %s812, %s816
          %s818 = smul.addr %s51, 16
          %s819 = scalar_lea.hbm %s5, %s818
          %s821 = sshll.u32 %s814, 4
          %s822 = int_to_ptr.vmem [resolvable:$true] %s821
          %824 = dma.hbm_to_vmem [thread:$0]  %s819, 16, %s822, %s812
        $region68: #{dino_ccg_forward.1} parent=63 // pred_fallthru
          _
        // Predicated region
        $region69: #{dino_ccg_forward.1} parent=63 // pred_check
          %p825 = pneg %p202
        $region70: #{dino_ccg_forward.1} parent=63 // pred_check_branch
          %827 = sbr.rel (%p825) target = $region72
        $region71: #{dino_ccg_forward.1} parent=63 // pred_region
          %s828 = sand.u32 %s51, 1
          %s829 = scalar_lea.sflag [#allocation11], %s828
          %s830 = sand.u32 %s192, 1
          %s831 = scalar_lea.vmem [#allocation12], %s830
          %s833 = ssub.s32 16, 16
          %834 = vsyncadd %s829, %s833
          %s835 = smul.addr %s51, 16
          %s836 = scalar_lea.hbm %s6, %s835
          %s838 = sshll.u32 %s831, 4
          %s839 = int_to_ptr.vmem [resolvable:$true] %s838
          %841 = dma.hbm_to_vmem [thread:$0]  %s836, 16, %s839, %s829
        $region72: #{dino_ccg_forward.1} parent=63 // pred_fallthru
          _
        // Predicated region
        $region73: #{dino_ccg_forward.1} parent=63 // pred_check
          %p842 = pneg %p228
        $region74: #{dino_ccg_forward.1} parent=63 // pred_check_branch
          %844 = sbr.rel (%p842) target = $region76
        $region75: #{dino_ccg_forward.1} parent=63 // pred_region
          %s845 = sand.u32 %s51, 1
          %s846 = scalar_lea.sflag [#allocation14], %s845
          %s847 = sand.u32 %s218, 1
          %s848 = smul.addr %s847, 192
          %s849 = scalar_lea.vmem [#allocation13], %s848
          %s851 = ssub.s32 3072, 3072
          %852 = vsyncadd %s846, %s851
          %s853 = smul.addr %s51, 48
          %s854 = smul.addr %s853, 64
          %s855 = scalar_lea.hbm %s7, %s854
          %s856 = sshll.u32 %s849, 4
          %s857 = int_to_ptr.vmem [resolvable:$true] %s856
          %862 = dma.hbm_to_vmem [thread:$0]  %s855, 3072, %s857, %s846, 192, 192, 12
        $region76: #{dino_ccg_forward.1} parent=63 // pred_fallthru
          _
        // Predicated region
        $region77: #{dino_ccg_forward.1} parent=63 // pred_check
          %p863 = pneg %p254
        $region78: #{dino_ccg_forward.1} parent=63 // pred_check_branch
          %865 = sbr.rel (%p863) target = $region80
        $region79: #{dino_ccg_forward.1} parent=63 // pred_region
          %p866 = scmp.lt.s32.totalorder %s51, 1
          %s867 = scalar_select %p866, %s51, 1
          %s868 = smul.addr %s867, 3
          %s869 = scalar_lea.vmem %s8, %s868
        $region80: #{dino_ccg_forward.1} parent=63 // pred_fallthru
          _
        // Predicated region
        $region81: #{dino_ccg_forward.1} parent=63 // pred_check
          %p870 = pneg %p280
        $region82: #{dino_ccg_forward.1} parent=63 // pred_check_branch
          %872 = sbr.rel (%p870) target = $region84
        $region83: #{dino_ccg_forward.1} parent=63 // pred_region
          %s873 = sand.u32 %s51, 1
          %s874 = scalar_lea.sflag [#allocation14], %s873
          %s875 = sand.u32 %s270, 1
          %s876 = smul.addr %s875, 64
          %s877 = scalar_lea.vmem [#allocation15], %s876
          %s879 = ssub.s32 1024, 1024
          %880 = vsyncadd %s874, %s879
          %s881 = smul.addr %s51, 16
          %s882 = smul.addr %s881, 64
          %s883 = scalar_lea.hbm %s9, %s882
          %s884 = sshll.u32 %s877, 4
          %s885 = int_to_ptr.vmem [resolvable:$true] %s884
          %890 = dma.hbm_to_vmem [thread:$0]  %s883, 1024, %s885, %s874, 64, 64, 4
        $region84: #{dino_ccg_forward.1} parent=63 // pred_fallthru
          _
        // Predicated region
        $region85: #{dino_ccg_forward.1} parent=63 // pred_check
          %p891 = pneg %p306
        $region86: #{dino_ccg_forward.1} parent=63 // pred_check_branch
          %893 = sbr.rel (%p891) target = $region88
        $region87: #{dino_ccg_forward.1} parent=63 // pred_region
          %p894 = scmp.lt.s32.totalorder %s51, 1
          %s895 = scalar_select %p894, %s51, 1
          %s896 = scalar_lea.vmem %s10, %s895
        $region88: #{dino_ccg_forward.1} parent=63 // pred_fallthru
          _
        // Predicated region
        $region89: #{dino_ccg_forward.1} parent=63 // pred_check
          %p897 = pneg %p332
        $region90: #{dino_ccg_forward.1} parent=63 // pred_check_branch
          %899 = sbr.rel (%p897) target = $region92
        $region91: #{dino_ccg_forward.1} parent=63 // pred_region
          %s900 = sand.u32 %s51, 1
          %s901 = scalar_lea.sflag [#allocation17], %s900
          %s902 = sand.u32 %s322, 1
          %s903 = scalar_lea.vmem [#allocation16], %s902
          %s905 = ssub.s32 16, 16
          %906 = vsyncadd %s901, %s905
          %s907 = smul.addr %s51, 16
          %s908 = scalar_lea.hbm %s11, %s907
          %s910 = sshll.u32 %s903, 4
          %s911 = int_to_ptr.vmem [resolvable:$true] %s910
          %913 = dma.hbm_to_vmem [thread:$0]  %s908, 16, %s911, %s901
        $region92: #{dino_ccg_forward.1} parent=63 // pred_fallthru
          _
        // Predicated region
        $region93: #{dino_ccg_forward.1} parent=63 // pred_check
          %p914 = pneg %p358
        $region94: #{dino_ccg_forward.1} parent=63 // pred_check_branch
          %916 = sbr.rel (%p914) target = $region96
        $region95: #{dino_ccg_forward.1} parent=63 // pred_region
          %s917 = sand.u32 %s51, 1
          %s918 = scalar_lea.sflag [#allocation17], %s917
          %s919 = sand.u32 %s348, 1
          %s920 = scalar_lea.vmem [#allocation18], %s919
          %s922 = ssub.s32 16, 16
          %923 = vsyncadd %s918, %s922
          %s924 = smul.addr %s51, 16
          %s925 = scalar_lea.hbm %s12, %s924
          %s927 = sshll.u32 %s920, 4
          %s928 = int_to_ptr.vmem [resolvable:$true] %s927
          %930 = dma.hbm_to_vmem [thread:$0]  %s925, 16, %s928, %s918
        $region96: #{dino_ccg_forward.1} parent=63 // pred_fallthru
          _
        // Predicated region
        $region97: #{dino_ccg_forward.1} parent=63 // pred_check
          %p931 = pneg %p384
        $region98: #{dino_ccg_forward.1} parent=63 // pred_check_branch
          %933 = sbr.rel (%p931) target = $region100
        $region99: #{dino_ccg_forward.1} parent=63 // pred_region
          %p934 = scmp.lt.s32.totalorder %s51, 1
          %s935 = scalar_select %p934, %s51, 1
          %s936 = smul.addr %s935, 64
          %s937 = smul.addr %s936, 4
          %s938 = scalar_lea.vmem %s13, %s937
        $region100: #{dino_ccg_forward.1} parent=63 // pred_fallthru
          _
        // Predicated region
        $region101: #{dino_ccg_forward.1} parent=63 // pred_check
          %p939 = pneg %p410
        $region102: #{dino_ccg_forward.1} parent=63 // pred_check_branch
          %941 = sbr.rel (%p939) target = $region104
        $region103: #{dino_ccg_forward.1} parent=63 // pred_region
          %p942 = scmp.lt.s32.totalorder %s51, 1
          %s943 = scalar_select %p942, %s51, 1
          %s944 = smul.addr %s943, 4
          %s945 = scalar_lea.vmem %s14, %s944
        $region104: #{dino_ccg_forward.1} parent=63 // pred_fallthru
          _
        // Predicated region
        $region105: #{dino_ccg_forward.1} parent=63 // pred_check
          %p946 = pneg %p436
        $region106: #{dino_ccg_forward.1} parent=63 // pred_check_branch
          %948 = sbr.rel (%p946) target = $region108
        $region107: #{dino_ccg_forward.1} parent=63 // pred_region
          %p949 = scmp.lt.s32.totalorder %s51, 1
          %s950 = scalar_select %p949, %s51, 1
          %s951 = smul.addr %s950, 64
          %s952 = smul.addr %s951, 4
          %s953 = scalar_lea.vmem %s15, %s952
        $region108: #{dino_ccg_forward.1} parent=63 // pred_fallthru
          _
        // Predicated region
        $region109: #{dino_ccg_forward.1} parent=63 // pred_check
          %p954 = pneg %p462
        $region110: #{dino_ccg_forward.1} parent=63 // pred_check_branch
          %956 = sbr.rel (%p954) target = $region112
        $region111: #{dino_ccg_forward.1} parent=63 // pred_region
          %p957 = scmp.lt.s32.totalorder %s51, 1
          %s958 = scalar_select %p957, %s51, 1
          %s959 = scalar_lea.vmem %s16, %s958
        $region112: #{dino_ccg_forward.1} parent=63 // pred_fallthru
          _
      $region64: #{dino_ccg_forward.1} parent=5 // pred_fallthru
        _
      %p960 = scmp.le.s32.totalorder 1, %s51
      %p961 = scmp.lt.s32.totalorder %s51, 3
      %p962 = pnand %p960, %p961
      %p963 = pneg %p962
      // Predicated region
      $region113: #{dino_ccg_forward.1} parent=5 // pred_check
        _
      $region114: #{dino_ccg_forward.1} parent=5 // pred_check_branch
        %965 = sbr.rel (%p962) target = $region116
      $region115: #{dino_ccg_forward.1} parent=5 // pred_region
        %s966 = ssub.s32 %s51, 1
        // Predicated region
        $region117: #{dino_ccg_forward.1} parent=115 // pred_check
          %p967 = pneg %p93
        $region118: #{dino_ccg_forward.1} parent=115 // pred_check_branch
          %969 = sbr.rel (%p967) target = $region120
        $region119: #{dino_ccg_forward.1} parent=115 // pred_region
          %970 = dma.done [#allocation5], 1024
        $region120: #{dino_ccg_forward.1} parent=115 // pred_fallthru
          _
        // Predicated region
        $region121: #{dino_ccg_forward.1} parent=115 // pred_check
          %p971 = pneg %p114
        $region122: #{dino_ccg_forward.1} parent=115 // pred_check_branch
          %973 = sbr.rel (%p971) target = $region124
        $region123: #{dino_ccg_forward.1} parent=115 // pred_region
          %974 = dma.done [#allocation8], 16
        $region124: #{dino_ccg_forward.1} parent=115 // pred_fallthru
          _
        // Predicated region
        $region125: #{dino_ccg_forward.1} parent=115 // pred_check
          %p975 = pneg %p156
        $region126: #{dino_ccg_forward.1} parent=115 // pred_check_branch
          %977 = sbr.rel (%p975) target = $region128
        $region127: #{dino_ccg_forward.1} parent=115 // pred_region
          %978 = dma.done [#allocation8], 384
        $region128: #{dino_ccg_forward.1} parent=115 // pred_fallthru
          _
        %s979 = sand.u32 %s56, 1
        %s980 = scalar_lea.sflag [#allocation11], %s979
        %s981 = sand.u32 %s169, 1
        %s982 = scalar_lea.vmem [#allocation10], %s981
        // Predicated region
        $region129: #{dino_ccg_forward.1} parent=115 // pred_check
          %p983 = pneg %p182
        $region130: #{dino_ccg_forward.1} parent=115 // pred_check_branch
          %985 = sbr.rel (%p983) target = $region132
        $region131: #{dino_ccg_forward.1} parent=115 // pred_region
          %986 = dma.done %s980, 16
        $region132: #{dino_ccg_forward.1} parent=115 // pred_fallthru
          _
        %s987 = sand.u32 %s56, 1
        %s988 = scalar_lea.sflag [#allocation11], %s987
        %s989 = sand.u32 %s195, 1
        %s990 = scalar_lea.vmem [#allocation12], %s989
        // Predicated region
        $region133: #{dino_ccg_forward.1} parent=115 // pred_check
          %p991 = pneg %p208
        $region134: #{dino_ccg_forward.1} parent=115 // pred_check_branch
          %993 = sbr.rel (%p991) target = $region136
        $region135: #{dino_ccg_forward.1} parent=115 // pred_region
          %994 = dma.done %s988, 16
        $region136: #{dino_ccg_forward.1} parent=115 // pred_fallthru
          _
        %s995 = sand.u32 %s56, 1
        %s996 = scalar_lea.sflag [#allocation14], %s995
        %s997 = sand.u32 %s221, 1
        %s998 = smul.addr %s997, 192
        %s999 = scalar_lea.vmem [#allocation13], %s998
        // Predicated region
        $region137: #{dino_ccg_forward.1} parent=115 // pred_check
          %p1000 = pneg %p234
        $region138: #{dino_ccg_forward.1} parent=115 // pred_check_branch
          %1002 = sbr.rel (%p1000) target = $region140
        $region139: #{dino_ccg_forward.1} parent=115 // pred_region
          %1003 = dma.done %s996, 3072
        $region140: #{dino_ccg_forward.1} parent=115 // pred_fallthru
          _
        %s1004 = sand.u32 %s56, 1
        %s1005 = scalar_lea.sflag [#allocation14], %s1004
        %s1006 = sand.u32 %s273, 1
        %s1007 = smul.addr %s1006, 64
        %s1008 = scalar_lea.vmem [#allocation15], %s1007
        // Predicated region
        $region141: #{dino_ccg_forward.1} parent=115 // pred_check
          %p1009 = pneg %p286
        $region142: #{dino_ccg_forward.1} parent=115 // pred_check_branch
          %1011 = sbr.rel (%p1009) target = $region144
        $region143: #{dino_ccg_forward.1} parent=115 // pred_region
          %1012 = dma.done %s1005, 1024
        $region144: #{dino_ccg_forward.1} parent=115 // pred_fallthru
          _
        %s1013 = sand.u32 %s56, 1
        %s1014 = scalar_lea.sflag [#allocation17], %s1013
        %s1015 = sand.u32 %s325, 1
        %s1016 = scalar_lea.vmem [#allocation16], %s1015
        // Predicated region
        $region145: #{dino_ccg_forward.1} parent=115 // pred_check
          %p1017 = pneg %p338
        $region146: #{dino_ccg_forward.1} parent=115 // pred_check_branch
          %1019 = sbr.rel (%p1017) target = $region148
        $region147: #{dino_ccg_forward.1} parent=115 // pred_region
          %1020 = dma.done %s1014, 16
        $region148: #{dino_ccg_forward.1} parent=115 // pred_fallthru
          _
        %s1021 = sand.u32 %s56, 1
        %s1022 = scalar_lea.sflag [#allocation17], %s1021
        %s1023 = sand.u32 %s351, 1
        %s1024 = scalar_lea.vmem [#allocation18], %s1023
        // Predicated region
        $region149: #{dino_ccg_forward.1} parent=115 // pred_check
          %p1025 = pneg %p364
        $region150: #{dino_ccg_forward.1} parent=115 // pred_check_branch
          %1027 = sbr.rel (%p1025) target = $region152
        $region151: #{dino_ccg_forward.1} parent=115 // pred_region
          %1028 = dma.done %s1022, 16
        $region152: #{dino_ccg_forward.1} parent=115 // pred_fallthru
          _
        // Predicated region
        $region153: #{dino_ccg_forward.1} parent=115 // pred_check
          %p1029 = pneg %p489
        $region154: #{dino_ccg_forward.1} parent=115 // pred_check_branch
          %1031 = sbr.rel (%p1029) target = $region156
        $region155: #{dino_ccg_forward.1} parent=115 // pred_region
          %1032 = dma.done [#allocation20], 16
        $region156: #{dino_ccg_forward.1} parent=115 // pred_fallthru
          _
        // Predicated region
        $region157: #{dino_ccg_forward.1} parent=115 // pred_check
          %p1033 = pneg %p510
        $region158: #{dino_ccg_forward.1} parent=115 // pred_check_branch
          %1035 = sbr.rel (%p1033) target = $region160
        $region159: #{dino_ccg_forward.1} parent=115 // pred_region
          %1036 = dma.done [#allocation20], 16
        $region160: #{dino_ccg_forward.1} parent=115 // pred_fallthru
          _
        // Predicated region
        $region161: #{dino_ccg_forward.1} parent=115 // pred_check
          %p1037 = pneg %p531
        $region162: #{dino_ccg_forward.1} parent=115 // pred_check_branch
          %1039 = sbr.rel (%p1037) target = $region164
        $region163: #{dino_ccg_forward.1} parent=115 // pred_region
          %1040 = dma.done [#allocation23], 2048
        $region164: #{dino_ccg_forward.1} parent=115 // pred_fallthru
          _
        %p1041 = pneg %p72
        %p1042 = pneg %p69
        %p1043 = pneg %p93
        %p1044 = pneg %p90
        %p1045 = pneg %p114
        %p1046 = pneg %p111
        %p1047 = pneg %p135
        %p1048 = pneg %p132
        %p1049 = pneg %p156
        %p1050 = pneg %p153
        %s1051 = sand.u32 %s56, 1
        %s1052 = scalar_lea.sflag [#allocation11], %s1051
        %s1053 = sand.u32 %s169, 1
        %s1054 = scalar_lea.vmem [#allocation10], %s1053
        %p1055 = pneg %p182
        %p1056 = pneg %p179
        %s1057 = sand.u32 %s56, 1
        %s1058 = scalar_lea.sflag [#allocation11], %s1057
        %s1059 = sand.u32 %s195, 1
        %s1060 = scalar_lea.vmem [#allocation12], %s1059
        %p1061 = pneg %p208
        %p1062 = pneg %p205
        %s1063 = sand.u32 %s56, 1
        %s1064 = scalar_lea.sflag [#allocation14], %s1063
        %s1065 = sand.u32 %s221, 1
        %s1066 = smul.addr %s1065, 192
        %s1067 = scalar_lea.vmem [#allocation13], %s1066
        %p1068 = pneg %p234
        %p1069 = pneg %p231
        %p1070 = scmp.lt.s32.totalorder %s56, 1
        %s1071 = scalar_select %p1070, %s56, 1
        %s1072 = smul.addr %s1071, 3
        %s1073 = scalar_lea.vmem %s8, %s1072
        %p1074 = pneg %p260
        %p1075 = pneg %p257
        %s1076 = sand.u32 %s56, 1
        %s1077 = scalar_lea.sflag [#allocation14], %s1076
        %s1078 = sand.u32 %s273, 1
        %s1079 = smul.addr %s1078, 64
        %s1080 = scalar_lea.vmem [#allocation15], %s1079
        %p1081 = pneg %p286
        %p1082 = pneg %p283
        %p1083 = scmp.lt.s32.totalorder %s56, 1
        %s1084 = scalar_select %p1083, %s56, 1
        %s1085 = scalar_lea.vmem %s10, %s1084
        %p1086 = pneg %p312
        %p1087 = pneg %p309
        %s1088 = sand.u32 %s56, 1
        %s1089 = scalar_lea.sflag [#allocation17], %s1088
        %s1090 = sand.u32 %s325, 1
        %s1091 = scalar_lea.vmem [#allocation16], %s1090
        %p1092 = pneg %p338
        %p1093 = pneg %p335
        %s1094 = sand.u32 %s56, 1
        %s1095 = scalar_lea.sflag [#allocation17], %s1094
        %s1096 = sand.u32 %s351, 1
        %s1097 = scalar_lea.vmem [#allocation18], %s1096
        %p1098 = pneg %p364
        %p1099 = pneg %p361
        %p1100 = scmp.lt.s32.totalorder %s56, 1
        %s1101 = scalar_select %p1100, %s56, 1
        %s1102 = smul.addr %s1101, 64
        %s1103 = smul.addr %s1102, 4
        %s1104 = scalar_lea.vmem %s13, %s1103
        %p1105 = pneg %p390
        %p1106 = pneg %p387
        %p1107 = scmp.lt.s32.totalorder %s56, 1
        %s1108 = scalar_select %p1107, %s56, 1
        %s1109 = smul.addr %s1108, 4
        %s1110 = scalar_lea.vmem %s14, %s1109
        %p1111 = pneg %p416
        %p1112 = pneg %p413
        %p1113 = scmp.lt.s32.totalorder %s56, 1
        %s1114 = scalar_select %p1113, %s56, 1
        %s1115 = smul.addr %s1114, 64
        %s1116 = smul.addr %s1115, 4
        %s1117 = scalar_lea.vmem %s15, %s1116
        %p1118 = pneg %p442
        %p1119 = pneg %p439
        %p1120 = scmp.lt.s32.totalorder %s56, 1
        %s1121 = scalar_select %p1120, %s56, 1
        %s1122 = scalar_lea.vmem %s16, %s1121
        %p1123 = pneg %p468
        %p1124 = pneg %p465
        %p1125 = pneg %p489
        %p1126 = pneg %p486
        %p1127 = pneg %p510
        %p1128 = pneg %p507
        %p1129 = pneg %p531
        %p1130 = pneg %p528
        %p1131 = pneg %p552
        %p1132 = pneg %p549
        %p1133 = pneg %p573
        %p1134 = pneg %p570
        %p1135 = pneg %p594
        %p1136 = pneg %p591
        %p1137 = pneg %p615
        %p1138 = pneg %p612
        %p1139 = pneg %p636
        %p1140 = pneg %p633
        %p1141 = pneg %p657
        %p1142 = pneg %p654
        %p1143 = pneg %p678
        %p1144 = pneg %p675
        %p1145 = pneg %p699
        %p1146 = pneg %p696
        %p1147 = scmp.lt.s32.totalorder %s56, 1
        %s1148 = scalar_select %p1147, %s56, 1
        %s1149 = smul.addr %s1148, 3
        %s1150 = scalar_lea.vmem %s8, %s1149
        %p1151 = scmp.lt.s32.totalorder %s56, 1
        %s1152 = scalar_select %p1151, %s56, 1
        %s1153 = scalar_lea.vmem %s10, %s1152
        %p1154 = scmp.lt.s32.totalorder %s56, 1
        %s1155 = scalar_select %p1154, %s56, 1
        %s1156 = smul.addr %s1155, 64
        %s1157 = smul.addr %s1156, 4
        %s1158 = scalar_lea.vmem %s13, %s1157
        %p1159 = scmp.lt.s32.totalorder %s56, 1
        %s1160 = scalar_select %p1159, %s56, 1
        %s1161 = smul.addr %s1160, 4
        %s1162 = scalar_lea.vmem %s14, %s1161
        %p1163 = scmp.lt.s32.totalorder %s56, 1
        %s1164 = scalar_select %p1163, %s56, 1
        %s1165 = smul.addr %s1164, 64
        %s1166 = smul.addr %s1165, 4
        %s1167 = scalar_lea.vmem %s15, %s1166
        %p1168 = scmp.lt.s32.totalorder %s56, 1
        %s1169 = scalar_select %p1168, %s56, 1
        %s1170 = scalar_lea.vmem %s16, %s1169
        %p1172 = scmp.eq.s32.totalorder %s56, 0
        // Predicated region
        $region165: #{dino_ccg_forward.1} parent=115 // pred_check
          %p1173 = pneg %p1172
        $region166: #{dino_ccg_forward.1} parent=115 // pred_check_branch
          %1175 = sbr.rel (%p1173) target = $region168
        $region167: #{dino_ccg_forward.1} parent=115 // pred_region
          %v1176 = vld [vmem:[%s0] sm:$0xf]
          %v1177 = vld [vmem:[%s0 + $0x4] sm:$0xf]
          %v1178 = vld [vmem:[%s0 + $0x8] sm:$0xf]
          %v1179 = vld [vmem:[%s0 + $0xc] sm:$0xf]
          %v1180 = vld [vmem:[#allocation4] sm:$0xf]
          %v1181 = vld [vmem:[#allocation4 + $0x4] sm:$0xf]
          %v1182 = vld [vmem:[#allocation4 + $0x8] sm:$0xf]
          %v1183 = vld [vmem:[#allocation4 + $0xc] sm:$0xf]
          %v1184 = vld [vmem:[#allocation4 + $0x10] sm:$0xf]
          %v1185 = vld [vmem:[#allocation4 + $0x14] sm:$0xf]
          %v1186 = vld [vmem:[#allocation4 + $0x18] sm:$0xf]
          %v1187 = vld [vmem:[#allocation4 + $0x1c] sm:$0xf]
          %v1188 = vld [vmem:[#allocation4 + $0x20] sm:$0xf]
          %v1189 = vld [vmem:[#allocation4 + $0x24] sm:$0xf]
          %v1190 = vld [vmem:[#allocation4 + $0x28] sm:$0xf]
          %v1191 = vld [vmem:[#allocation4 + $0x2c] sm:$0xf]
          %v1192 = vld [vmem:[#allocation4 + $0x30] sm:$0xf]
          %v1193 = vld [vmem:[#allocation4 + $0x34] sm:$0xf]
          %v1194 = vld [vmem:[#allocation4 + $0x38] sm:$0xf]
          %v1195 = vld [vmem:[#allocation4 + $0x3c] sm:$0xf]
          %v1196 = vld [vmem:[#allocation7] sm:$0x1]
          %v1198 = vlaneseq
          %v1199 = vshrl.u32 %v1198, 7
          %v1200 = vsub.s32 0, %v1199
          %v1201 = vrot.slane %v1196, %v1200
          %v1207 = vunpack.c.l.b16 %v1176
          %v1208 = vunpack.c.l.b16 %v1177
          %v1209 = vunpack.c.l.b16 %v1178
          %v1210 = vunpack.c.l.b16 %v1179
          %v1211 = vpack.c.b16 %v1208, %v1207
          %v1212 = vpack.c.b16 %v1210, %v1209
          %v1231 = vunpack.c.l.b16 %v1180
          %v1232 = vunpack.c.l.b16 %v1181
          %v1233 = vunpack.c.l.b16 %v1182
          %v1234 = vunpack.c.l.b16 %v1183
          %v1235 = vunpack.c.l.b16 %v1184
          %v1236 = vunpack.c.l.b16 %v1185
          %v1237 = vunpack.c.l.b16 %v1186
          %v1238 = vunpack.c.l.b16 %v1187
          %v1239 = vunpack.c.l.b16 %v1188
          %v1240 = vunpack.c.l.b16 %v1189
          %v1241 = vunpack.c.l.b16 %v1190
          %v1242 = vunpack.c.l.b16 %v1191
          %v1243 = vunpack.c.l.b16 %v1192
          %v1244 = vunpack.c.l.b16 %v1193
          %v1245 = vunpack.c.l.b16 %v1194
          %v1246 = vunpack.c.l.b16 %v1195
          %v1247 = vpack.c.b16 %v1232, %v1231
          %v1248 = vpack.c.b16 %v1234, %v1233
          %v1249 = vpack.c.b16 %v1236, %v1235
          %v1250 = vpack.c.b16 %v1238, %v1237
          %v1251 = vpack.c.b16 %v1240, %v1239
          %v1252 = vpack.c.b16 %v1242, %v1241
          %v1253 = vpack.c.b16 %v1244, %v1243
          %v1254 = vpack.c.b16 %v1246, %v1245
          %1263 = vmatprep.subr.bf16.mxu0 0
          %1264 = vmatpush1.bf16.msra.mxu0 %v1247
          %1265 = vmatprep.subr.bf16.mxu0 0
          %1266 = vmatpush1.bf16.msra.mxu0 %v1248
          %1267 = vmatprep.subr.bf16.mxu0 0
          %1268 = vmatpush1.bf16.msra.mxu0 %v1249
          %1269 = vmatprep.subr.bf16.mxu0 0
          %1270 = vmatpush1.bf16.msra.mxu0 %v1250
          %1271 = vmatprep.subr.bf16.mxu0 0
          %1272 = vmatpush1.bf16.msra.mxu0 %v1251
          %1273 = vmatprep.subr.bf16.mxu0 0
          %1274 = vmatpush1.bf16.msra.mxu0 %v1252
          %1275 = vmatprep.subr.bf16.mxu0 0
          %1276 = vmatpush1.bf16.msra.mxu0 %v1253
          %1277 = vmatprep.subr.bf16.mxu0 0
          %1278 = vmatpush1.bf16.msra.mxu0 %v1254
          %1279 = vmatprep.subr.bf16.mxu0 0
          %1280 = vmatpush1.bf16.msra.mxu0 0
          %1281 = vmatprep.subr.bf16.mxu0 0
          %1282 = vmatpush1.bf16.msra.mxu0 0
          %1283 = vmatprep.subr.bf16.mxu0 0
          %1284 = vmatpush1.bf16.msra.mxu0 0
          %1285 = vmatprep.subr.bf16.mxu0 0
          %1286 = vmatpush1.bf16.msra.mxu0 0
          %1287 = vmatprep.subr.bf16.mxu0 0
          %1288 = vmatpush1.bf16.msra.mxu0 0
          %1289 = vmatprep.subr.bf16.mxu0 0
          %1290 = vmatpush1.bf16.msra.mxu0 0
          %1291 = vmatprep.subr.bf16.mxu0 0
          %1292 = vmatpush1.bf16.msra.mxu0 0
          %1293 = vmatprep.subr.bf16.mxu0 0
          %1294 = vmatpush1.bf16.msra.mxu0 0
          %1295 = vmatprep.mubr.bf16.mxu0 0
          %1296 = vmatmul.mubr.bf16.gmra.mrb[0].mxu0 %v1211
          %v1297 = vpop.f32.mrb[0].mxu0
          %v1298 = vadd.f32 %v1201, %v1297
          %v1299 = vpop.f32.mrb[0].mxu0
          %v1300 = vpop.f32.mrb[0].mxu0
          %v1301 = vadd.f32 %v1201, %v1300
          %v1302 = vpop.f32.mrb[0].mxu0
          %1303 = vmatprep.mubr.bf16.mxu0 0
          %1304 = vmatmul.mubr.bf16.gmra.mrb[0].mxu0 %v1212
          %v1305 = vpop.f32.mrb[0].mxu0
          %v1306 = vadd.f32 %v1201, %v1305
          %v1307 = vpop.f32.mrb[0].mxu0
          %v1308 = vpop.f32.mrb[0].mxu0
          %v1309 = vadd.f32 %v1201, %v1308
          %v1310 = vpop.f32.mrb[0].mxu0
          %1311 = vdwg.mxu0
          %v1312 = vld [vmem:[%s3] sm:$0x1]
          %vm1315 = vcmask 1040384
          %v1316 = vrot.slane %v1298, 7
          %v1317 = vrot.slane %v1301, 7
          %v1318 = vsel %vm1315, %v1316, %v1317
          %v1323 = vlaneseq
          %v1324 = vshrl.u32 %v1323, 7
          %v1325 = vsub.s32 0, %v1324
          %v1326 = vrot.slane %v1312, %v1325
          %vm1330 = vcmask 1041408
          %v1331 = vrot.slane %v1306, 6
          %v1332 = vrot.slane %v1309, 6
          %v1333 = vsel %vm1330, %v1331, %v1332
          %v1337 = vsel %vm1315, %v1312, %v1316
          %v1338 = vsel %vm1315, %v1317, %v1326
          %v1339 = vsel %vm1330, %v1338, %v1331
          %v1340 = vld [vmem:[#allocation9] sm:$0xff]
          %v1341 = vld [vmem:[#allocation9 + $0x8] sm:$0xff]
          %v1342 = vld [vmem:[#allocation9 + $0x10] sm:$0x1]
          %v1346 = vrot.slane %v1340, 7
          %v1347 = vrot.slane %v1341, 7
          %v1348 = vsel %vm1315, %v1346, %v1347
          %v1349 = vrot.slane %v1342, 7
          %v1350 = vsel %vm1315, %v1347, %v1349
          %v1354 = vsel %vm1315, %v1342, %v1346
          %v1355 = vadd.f32 %v1337, %v1340
          %v1356 = vadd.f32 %v1318, %v1341
          %v1357 = vadd.f32 %v1339, %v1354
          %v1358 = vadd.f32 %v1333, %v1348
          %v1359 = vadd.f32 %v1332, %v1350
          %1360 = vst [vmem:[#allocation2] sm:$0xff] %v1355
          %1361 = vst [vmem:[#allocation2 + $0x8] sm:$0xff] %v1356
          %1362 = vst [vmem:[#allocation2 + $0x10] sm:$0xff] %v1357
          %1363 = vst [vmem:[#allocation2 + $0x18] sm:$0xff] %v1358
          %1364 = vst [vmem:[#allocation2 + $0x20] sm:$0x3] %v1359
        $region168: #{dino_ccg_forward.1} parent=115 // pred_fallthru
          _
        %v1365 = vld [vmem:[#allocation2] sm:$0xff]
        %v1366 = vld [vmem:[#allocation2 + $0x8] sm:$0xff]
        %v1367 = vld [vmem:[#allocation2 + $0x10] sm:$0xff]
        %v1368 = vld [vmem:[#allocation2 + $0x18] sm:$0xff]
        %v1369 = vld [vmem:[#allocation2 + $0x20] sm:$0x3]
        %v1370 = vld [vmem:[%s982] sm:$0x1]
        %v1371 = vld [vmem:[%s990] sm:$0x1]
        %1372 = vadd.xlane.f32.xlu0 %v1365
        %v1373 = vpop.xlane.xlu0 %1372
        %1374 = vadd.xlane.f32.xlu0 %v1366
        %v1375 = vpop.xlane.xlu0 %1374
        %1376 = vadd.xlane.f32.xlu0 %v1367
        %v1377 = vpop.xlane.xlu0 %1376
        %1378 = vadd.xlane.f32.xlu0 %v1368
        %v1379 = vpop.xlane.xlu0 %1378
        %vm1380 = vcmask 1041408
        %v1381 = vsel %vm1380, %v1369, 0.0
        %1382 = vadd.xlane.f32.xlu0 %v1381
        %v1383 = vpop.xlane.xlu0 %1382
        %v1384 = vrcp.pop 128.0
        %v1385 = vmul.f32 %v1373, %v1384
        %v1386 = vmul.f32 %v1375, %v1384
        %v1387 = vmul.f32 %v1377, %v1384
        %v1388 = vmul.f32 %v1379, %v1384
        %v1389 = vmul.f32 %v1383, %v1384
        %v1390 = vsub.f32 %v1365, %v1385
        %v1391 = vsub.f32 %v1366, %v1386
        %v1392 = vsub.f32 %v1367, %v1387
        %v1393 = vsub.f32 %v1368, %v1388
        %v1394 = vsub.f32 %v1369, %v1389
        %v1395 = vmul.f32 %v1390, %v1390
        %v1396 = vmul.f32 %v1391, %v1391
        %v1397 = vmul.f32 %v1392, %v1392
        %v1398 = vmul.f32 %v1393, %v1393
        %v1399 = vmul.f32 %v1394, %v1394
        %1400 = vadd.xlane.f32.xlu0 %v1395
        %v1401 = vpop.xlane.xlu0 %1400
        %1402 = vadd.xlane.f32.xlu0 %v1396
        %v1403 = vpop.xlane.xlu0 %1402
        %1404 = vadd.xlane.f32.xlu0 %v1397
        %v1405 = vpop.xlane.xlu0 %1404
        %1406 = vadd.xlane.f32.xlu0 %v1398
        %v1407 = vpop.xlane.xlu0 %1406
        %v1408 = vsel %vm1380, %v1399, 0.0
        %1409 = vadd.xlane.f32.xlu0 %v1408
        %v1410 = vpop.xlane.xlu0 %1409
        %v1411 = vmul.f32 %v1401, %v1384
        %v1412 = vmul.f32 %v1403, %v1384
        %v1413 = vmul.f32 %v1405, %v1384
        %v1414 = vmul.f32 %v1407, %v1384
        %v1415 = vmul.f32 %v1410, %v1384
        %v1416 = vadd.f32 %v1411, 1e-06
        %v1417 = vadd.f32 %v1412, 1e-06
        %v1418 = vadd.f32 %v1413, 1e-06
        %v1419 = vadd.f32 %v1414, 1e-06
        %v1420 = vadd.f32 %v1415, 1e-06
        %v1421 = vrsqrt.pop %v1416
        %v1422 = vrsqrt.pop %v1417
        %v1423 = vrsqrt.pop %v1418
        %v1424 = vrsqrt.pop %v1419
        %v1425 = vrsqrt.pop %v1420
        %v1426 = vmul.f32 %v1390, %v1421
        %v1427 = vmul.f32 %v1391, %v1422
        %v1428 = vmul.f32 %v1392, %v1423
        %v1429 = vmul.f32 %v1393, %v1424
        %v1430 = vmul.f32 %v1394, %v1425
        %v1432 = vlaneseq
        %v1433 = vshrl.u32 %v1432, 7
        %v1434 = vsub.s32 0, %v1433
        %v1435 = vrot.slane %v1370, %v1434
        %v1437 = vmul.f32 %v1426, %v1435
        %v1438 = vmul.f32 %v1427, %v1435
        %v1439 = vmul.f32 %v1428, %v1435
        %v1440 = vmul.f32 %v1429, %v1435
        %v1441 = vmul.f32 %v1430, %v1435
        %v1443 = vlaneseq
        %v1444 = vshrl.u32 %v1443, 7
        %v1445 = vsub.s32 0, %v1444
        %v1446 = vrot.slane %v1371, %v1445
        %v1448 = vadd.f32 %v1437, %v1446
        %v1449 = vadd.f32 %v1438, %v1446
        %v1450 = vadd.f32 %v1439, %v1446
        %v1451 = vadd.f32 %v1440, %v1446
        %v1452 = vadd.f32 %v1441, %v1446
        %v1453 = vpack.c.bf16 %v1449, %v1448
        %v1454 = vpack.c.bf16 %v1451, %v1450
        %v1455 = vpack.c.bf16 %v1452, %v1452
        %v1456 = vld [vmem:[%s999] sm:$0xff]
        %v1457 = vld [vmem:[%s999 + $0x8] sm:$0xf]
        %v1458 = vld [vmem:[%s999 + $0xc] sm:$0xff]
        %v1459 = vld [vmem:[%s999 + $0x14] sm:$0xf]
        %v1460 = vld [vmem:[%s999 + $0x18] sm:$0xff]
        %v1461 = vld [vmem:[%s999 + $0x20] sm:$0xf]
        %v1462 = vld [vmem:[%s999 + $0x24] sm:$0xff]
        %v1463 = vld [vmem:[%s999 + $0x2c] sm:$0xf]
        %v1464 = vld [vmem:[%s999 + $0x30] sm:$0xff]
        %v1465 = vld [vmem:[%s999 + $0x38] sm:$0xf]
        %v1466 = vld [vmem:[%s999 + $0x3c] sm:$0xff]
        %v1467 = vld [vmem:[%s999 + $0x44] sm:$0xf]
        %v1468 = vld [vmem:[%s999 + $0x48] sm:$0xff]
        %v1469 = vld [vmem:[%s999 + $0x50] sm:$0xf]
        %v1470 = vld [vmem:[%s999 + $0x54] sm:$0xff]
        %v1471 = vld [vmem:[%s999 + $0x5c] sm:$0xf]
        %v1472 = vld [vmem:[%s999 + $0x60] sm:$0xff]
        %v1473 = vld [vmem:[%s999 + $0x68] sm:$0xf]
        %v1474 = vld [vmem:[%s999 + $0x6c] sm:$0xff]
        %v1475 = vld [vmem:[%s999 + $0x74] sm:$0xf]
        %v1476 = vld [vmem:[%s999 + $0x78] sm:$0xff]
        %v1477 = vld [vmem:[%s999 + $0x80] sm:$0xf]
        %v1478 = vld [vmem:[%s999 + $0x84] sm:$0xff]
        %v1479 = vld [vmem:[%s999 + $0x8c] sm:$0xf]
        %v1480 = vld [vmem:[%s999 + $0x90] sm:$0xff]
        %v1481 = vld [vmem:[%s999 + $0x98] sm:$0xf]
        %v1482 = vld [vmem:[%s999 + $0x9c] sm:$0xff]
        %v1483 = vld [vmem:[%s999 + $0xa4] sm:$0xf]
        %v1484 = vld [vmem:[%s999 + $0xa8] sm:$0xff]
        %v1485 = vld [vmem:[%s999 + $0xb0] sm:$0xf]
        %v1486 = vld [vmem:[%s999 + $0xb4] sm:$0xff]
        %v1487 = vld [vmem:[%s999 + $0xbc] sm:$0xf]
        %v1488 = vld [vmem:[%s1150] sm:$0x7]
        %v1490 = vlaneseq
        %v1491 = vshrl.u32 %v1490, 7
        %v1492 = vsub.s32 0, %v1491
        %v1493 = vrot.slane %v1488, %v1492
        %v1494 = vlaneseq
        %v1495 = vshrl.u32 %v1494, 7
        %v1496 = vsub.s32 1, %v1495
        %v1497 = vrot.slane %v1488, %v1496
        %v1498 = vlaneseq
        %v1499 = vshrl.u32 %v1498, 7
        %v1500 = vsub.s32 2, %v1499
        %v1501 = vrot.slane %v1488, %v1500
        %v1537 = vunpack.c.l.b16 %v1456
        %v1538 = vunpack.c.h.b16 %v1456
        %v1539 = vunpack.c.l.b16 %v1457
        %v1540 = vunpack.c.l.b16 %v1458
        %v1541 = vunpack.c.h.b16 %v1458
        %v1542 = vunpack.c.l.b16 %v1459
        %v1543 = vunpack.c.l.b16 %v1460
        %v1544 = vunpack.c.h.b16 %v1460
        %v1545 = vunpack.c.l.b16 %v1461
        %v1546 = vunpack.c.l.b16 %v1462
        %v1547 = vunpack.c.h.b16 %v1462
        %v1548 = vunpack.c.l.b16 %v1463
        %v1549 = vunpack.c.l.b16 %v1464
        %v1550 = vunpack.c.h.b16 %v1464
        %v1551 = vunpack.c.l.b16 %v1465
        %v1552 = vunpack.c.l.b16 %v1466
        %v1553 = vunpack.c.h.b16 %v1466
        %v1554 = vunpack.c.l.b16 %v1467
        %v1555 = vunpack.c.l.b16 %v1468
        %v1556 = vunpack.c.h.b16 %v1468
        %v1557 = vunpack.c.l.b16 %v1469
        %v1558 = vunpack.c.l.b16 %v1470
        %v1559 = vunpack.c.h.b16 %v1470
        %v1560 = vunpack.c.l.b16 %v1471
        %v1561 = vunpack.c.l.b16 %v1472
        %v1562 = vunpack.c.h.b16 %v1472
        %v1563 = vunpack.c.l.b16 %v1473
        %v1564 = vunpack.c.l.b16 %v1474
        %v1565 = vunpack.c.h.b16 %v1474
        %v1566 = vunpack.c.l.b16 %v1475
        %v1567 = vunpack.c.l.b16 %v1476
        %v1568 = vunpack.c.h.b16 %v1476
        %v1569 = vunpack.c.l.b16 %v1477
        %v1570 = vunpack.c.l.b16 %v1478
        %v1571 = vunpack.c.h.b16 %v1478
        %v1572 = vunpack.c.l.b16 %v1479
        %v1573 = vunpack.c.l.b16 %v1480
        %v1574 = vunpack.c.h.b16 %v1480
        %v1575 = vunpack.c.l.b16 %v1481
        %v1576 = vunpack.c.l.b16 %v1482
        %v1577 = vunpack.c.h.b16 %v1482
        %v1578 = vunpack.c.l.b16 %v1483
        %v1579 = vunpack.c.l.b16 %v1484
        %v1580 = vunpack.c.h.b16 %v1484
        %v1581 = vunpack.c.l.b16 %v1485
        %v1582 = vunpack.c.l.b16 %v1486
        %v1583 = vunpack.c.h.b16 %v1486
        %v1584 = vunpack.c.l.b16 %v1487
        %v1585 = vpack.c.b16 %v1540, %v1537
        %v1586 = vpack.c.b16 %v1541, %v1538
        %v1587 = vpack.c.b16 %v1542, %v1539
        %v1588 = vpack.c.b16 %v1546, %v1543
        %v1589 = vpack.c.b16 %v1547, %v1544
        %v1590 = vpack.c.b16 %v1548, %v1545
        %v1591 = vpack.c.b16 %v1552, %v1549
        %v1592 = vpack.c.b16 %v1553, %v1550
        %v1593 = vpack.c.b16 %v1554, %v1551
        %v1594 = vpack.c.b16 %v1558, %v1555
        %v1595 = vpack.c.b16 %v1559, %v1556
        %v1596 = vpack.c.b16 %v1560, %v1557
        %v1597 = vpack.c.b16 %v1564, %v1561
        %v1598 = vpack.c.b16 %v1565, %v1562
        %v1599 = vpack.c.b16 %v1566, %v1563
        %v1600 = vpack.c.b16 %v1570, %v1567
        %v1601 = vpack.c.b16 %v1571, %v1568
        %v1602 = vpack.c.b16 %v1572, %v1569
        %v1603 = vpack.c.b16 %v1576, %v1573
        %v1604 = vpack.c.b16 %v1577, %v1574
        %v1605 = vpack.c.b16 %v1578, %v1575
        %v1606 = vpack.c.b16 %v1582, %v1579
        %v1607 = vpack.c.b16 %v1583, %v1580
        %v1608 = vpack.c.b16 %v1584, %v1581
        %1633 = vmatprep.subr.bf16.mxu0 %v1586
        %1634 = vmatpush1.bf16.msra.mxu0 %v1585
        %1635 = vmatprep.subr.bf16.mxu0 %v1589
        %1636 = vmatpush1.bf16.msra.mxu0 %v1588
        %1637 = vmatprep.subr.bf16.mxu0 %v1592
        %1638 = vmatpush1.bf16.msra.mxu0 %v1591
        %1639 = vmatprep.subr.bf16.mxu0 %v1595
        %1640 = vmatpush1.bf16.msra.mxu0 %v1594
        %1641 = vmatprep.subr.bf16.mxu0 %v1598
        %1642 = vmatpush1.bf16.msra.mxu0 %v1597
        %1643 = vmatprep.subr.bf16.mxu0 %v1601
        %1644 = vmatpush1.bf16.msra.mxu0 %v1600
        %1645 = vmatprep.subr.bf16.mxu0 %v1604
        %1646 = vmatpush1.bf16.msra.mxu0 %v1603
        %1647 = vmatprep.subr.bf16.mxu0 %v1607
        %1648 = vmatpush1.bf16.msra.mxu0 %v1606
        %1649 = vmatprep.subr.bf16.mxu0 0
        %1650 = vmatpush1.bf16.msra.mxu0 0
        %1651 = vmatprep.subr.bf16.mxu0 0
        %1652 = vmatpush1.bf16.msra.mxu0 0
        %1653 = vmatprep.subr.bf16.mxu0 0
        %1654 = vmatpush1.bf16.msra.mxu0 0
        %1655 = vmatprep.subr.bf16.mxu0 0
        %1656 = vmatpush1.bf16.msra.mxu0 0
        %1657 = vmatprep.subr.bf16.mxu0 0
        %1658 = vmatpush1.bf16.msra.mxu0 0
        %1659 = vmatprep.subr.bf16.mxu0 0
        %1660 = vmatpush1.bf16.msra.mxu0 0
        %1661 = vmatprep.subr.bf16.mxu0 0
        %1662 = vmatpush1.bf16.msra.mxu0 0
        %1663 = vmatprep.subr.bf16.mxu0 0
        %1664 = vmatpush1.bf16.msra.mxu0 0
        %1665 = vmatprep.mubr.bf16.mxu0 0
        %1666 = vmatmul.mubr.bf16.gmra.mrb[0].mxu0 %v1453
        %v1667 = vpop.f32.mrb[0].mxu0
        %v1668 = vadd.f32 %v1493, %v1667
        %v1669 = vpop.f32.mrb[0].mxu0
        %v1670 = vadd.f32 %v1497, %v1669
        %v1671 = vpop.f32.mrb[0].mxu0
        %v1672 = vadd.f32 %v1493, %v1671
        %v1673 = vpop.f32.mrb[0].mxu0
        %v1674 = vadd.f32 %v1497, %v1673
        %1675 = vmatprep.mubr.bf16.mxu0 0
        %1676 = vmatmul.mubr.bf16.gmra.mrb[0].mxu0 %v1454
        %v1677 = vpop.f32.mrb[0].mxu0
        %v1678 = vadd.f32 %v1493, %v1677
        %v1679 = vpop.f32.mrb[0].mxu0
        %v1680 = vadd.f32 %v1497, %v1679
        %v1681 = vpop.f32.mrb[0].mxu0
        %v1682 = vadd.f32 %v1493, %v1681
        %v1683 = vpop.f32.mrb[0].mxu0
        %v1684 = vadd.f32 %v1497, %v1683
        %1685 = vmatprep.mubr.bf16.mxu0 0
        %1686 = vmatmul.mubr.bf16.gmra.mrb[0].mxu0 %v1455
        %v1687 = vpop.f32.mrb[0].mxu0
        %v1688 = vadd.f32 %v1493, %v1687
        %v1689 = vpop.f32.mrb[0].mxu0
        %v1690 = vadd.f32 %v1497, %v1689
        %v1691 = vpop.f32.mrb[0].mxu0
        %v1692 = vpop.f32.mrb[0].mxu0
        %1693 = vdwg.mxu0
        %1694 = vmatprep.subr.bf16.mxu0 0
        %1695 = vmatpush1.bf16.msra.mxu0 %v1587
        %1696 = vmatprep.subr.bf16.mxu0 0
        %1697 = vmatpush1.bf16.msra.mxu0 %v1590
        %1698 = vmatprep.subr.bf16.mxu0 0
        %1699 = vmatpush1.bf16.msra.mxu0 %v1593
        %1700 = vmatprep.subr.bf16.mxu0 0
        %1701 = vmatpush1.bf16.msra.mxu0 %v1596
        %1702 = vmatprep.subr.bf16.mxu0 0
        %1703 = vmatpush1.bf16.msra.mxu0 %v1599
        %1704 = vmatprep.subr.bf16.mxu0 0
        %1705 = vmatpush1.bf16.msra.mxu0 %v1602
        %1706 = vmatprep.subr.bf16.mxu0 0
        %1707 = vmatpush1.bf16.msra.mxu0 %v1605
        %1708 = vmatprep.subr.bf16.mxu0 0
        %1709 = vmatpush1.bf16.msra.mxu0 %v1608
        %1710 = vmatprep.subr.bf16.mxu0 0
        %1711 = vmatpush1.bf16.msra.mxu0 0
        %1712 = vmatprep.subr.bf16.mxu0 0
        %1713 = vmatpush1.bf16.msra.mxu0 0
        %1714 = vmatprep.subr.bf16.mxu0 0
        %1715 = vmatpush1.bf16.msra.mxu0 0
        %1716 = vmatprep.subr.bf16.mxu0 0
        %1717 = vmatpush1.bf16.msra.mxu0 0
        %1718 = vmatprep.subr.bf16.mxu0 0
        %1719 = vmatpush1.bf16.msra.mxu0 0
        %1720 = vmatprep.subr.bf16.mxu0 0
        %1721 = vmatpush1.bf16.msra.mxu0 0
        %1722 = vmatprep.subr.bf16.mxu0 0
        %1723 = vmatpush1.bf16.msra.mxu0 0
        %1724 = vmatprep.subr.bf16.mxu0 0
        %1725 = vmatpush1.bf16.msra.mxu0 0
        %1726 = vmatprep.mubr.bf16.mxu0 0
        %1727 = vmatmul.mubr.bf16.gmra.mrb[0].mxu0 %v1453
        %v1728 = vpop.f32.mrb[0].mxu0
        %v1729 = vadd.f32 %v1501, %v1728
        %v1730 = vpop.f32.mrb[0].mxu0
        %v1731 = vpop.f32.mrb[0].mxu0
        %v1732 = vadd.f32 %v1501, %v1731
        %v1733 = vpop.f32.mrb[0].mxu0
        %1734 = vmatprep.mubr.bf16.mxu0 0
        %1735 = vmatmul.mubr.bf16.gmra.mrb[0].mxu0 %v1454
        %v1736 = vpop.f32.mrb[0].mxu0
        %v1737 = vadd.f32 %v1501, %v1736
        %v1738 = vpop.f32.mrb[0].mxu0
        %v1739 = vpop.f32.mrb[0].mxu0
        %v1740 = vadd.f32 %v1501, %v1739
        %v1741 = vpop.f32.mrb[0].mxu0
        %1742 = vmatprep.mubr.bf16.mxu0 0
        %1743 = vmatmul.mubr.bf16.gmra.mrb[0].mxu0 %v1455
        %v1744 = vpop.f32.mrb[0].mxu0
        %v1745 = vadd.f32 %v1501, %v1744
        %v1746 = vpop.f32.mrb[0].mxu0
        %v1747 = vpop.f32.mrb[0].mxu0
        %v1748 = vpop.f32.mrb[0].mxu0
        %1749 = vdwg.mxu0
        %1753 = vrot.lane.b32.xlu0 %v1668, 96
        %v1754 = vpop.permute.xlu0 %1753
        %1755 = vrot.lane.b32.xlu0 %v1672, 96
        %v1756 = vpop.permute.xlu0 %1755
        %1757 = vrot.lane.b32.xlu0 %v1678, 96
        %v1758 = vpop.permute.xlu0 %1757
        %1759 = vrot.lane.b32.xlu0 %v1668, 64
        %v1760 = vpop.permute.xlu0 %1759
        %1761 = vrot.lane.b32.xlu0 %v1672, 64
        %v1762 = vpop.permute.xlu0 %1761
        %1763 = vrot.lane.b32.xlu0 %v1678, 64
        %v1764 = vpop.permute.xlu0 %1763
        %1765 = vrot.lane.b32.xlu0 %v1668, 32
        %v1766 = vpop.permute.xlu0 %1765
        %1767 = vrot.lane.b32.xlu0 %v1672, 32
        %v1768 = vpop.permute.xlu0 %1767
        %1769 = vrot.lane.b32.xlu0 %v1678, 32
        %v1770 = vpop.permute.xlu0 %1769
        %vm1773 = vcmask 1046528
        %v1774 = vrot.slane %v1678, 1
        %v1775 = vrot.slane %v1682, 1
        %v1776 = vsel %vm1773, %v1774, %v1775
        %v1777 = vrot.slane %v1688, 1
        %v1778 = vsel %vm1773, %v1775, %v1777
        %1779 = vrot.lane.b32.xlu0 %v1776, 96
        %v1780 = vpop.permute.xlu0 %1779
        %1781 = vrot.lane.b32.xlu0 %v1778, 96
        %v1782 = vpop.permute.xlu0 %1781
        %1783 = vrot.lane.b32.xlu0 %v1777, 96
        %v1784 = vpop.permute.xlu0 %1783
        %1785 = vrot.lane.b32.xlu0 %v1776, 64
        %v1786 = vpop.permute.xlu0 %1785
        %1787 = vrot.lane.b32.xlu0 %v1778, 64
        %v1788 = vpop.permute.xlu0 %1787
        %1789 = vrot.lane.b32.xlu0 %v1777, 64
        %v1790 = vpop.permute.xlu0 %1789
        %1791 = vrot.lane.b32.xlu0 %v1776, 32
        %v1792 = vpop.permute.xlu0 %1791
        %1793 = vrot.lane.b32.xlu0 %v1778, 32
        %v1794 = vpop.permute.xlu0 %1793
        %1795 = vrot.lane.b32.xlu0 %v1777, 32
        %v1796 = vpop.permute.xlu0 %1795
        %1800 = vrot.lane.b32.xlu0 %v1670, 96
        %v1801 = vpop.permute.xlu0 %1800
        %1802 = vrot.lane.b32.xlu0 %v1674, 96
        %v1803 = vpop.permute.xlu0 %1802
        %1804 = vrot.lane.b32.xlu0 %v1680, 96
        %v1805 = vpop.permute.xlu0 %1804
        %1806 = vrot.lane.b32.xlu0 %v1670, 64
        %v1807 = vpop.permute.xlu0 %1806
        %1808 = vrot.lane.b32.xlu0 %v1674, 64
        %v1809 = vpop.permute.xlu0 %1808
        %1810 = vrot.lane.b32.xlu0 %v1680, 64
        %v1811 = vpop.permute.xlu0 %1810
        %1812 = vrot.lane.b32.xlu0 %v1670, 32
        %v1813 = vpop.permute.xlu0 %1812
        %1814 = vrot.lane.b32.xlu0 %v1674, 32
        %v1815 = vpop.permute.xlu0 %1814
        %1816 = vrot.lane.b32.xlu0 %v1680, 32
        %v1817 = vpop.permute.xlu0 %1816
        %v1820 = vrot.slane %v1680, 1
        %v1821 = vrot.slane %v1684, 1
        %v1822 = vsel %vm1773, %v1820, %v1821
        %v1823 = vrot.slane %v1690, 1
        %v1824 = vsel %vm1773, %v1821, %v1823
        %1825 = vrot.lane.b32.xlu0 %v1822, 96
        %v1826 = vpop.permute.xlu0 %1825
        %1827 = vrot.lane.b32.xlu0 %v1824, 96
        %v1828 = vpop.permute.xlu0 %1827
        %1829 = vrot.lane.b32.xlu0 %v1823, 96
        %v1830 = vpop.permute.xlu0 %1829
        %1831 = vrot.lane.b32.xlu0 %v1822, 64
        %v1832 = vpop.permute.xlu0 %1831
        %1833 = vrot.lane.b32.xlu0 %v1824, 64
        %v1834 = vpop.permute.xlu0 %1833
        %1835 = vrot.lane.b32.xlu0 %v1823, 64
        %v1836 = vpop.permute.xlu0 %1835
        %1837 = vrot.lane.b32.xlu0 %v1822, 32
        %v1838 = vpop.permute.xlu0 %1837
        %1839 = vrot.lane.b32.xlu0 %v1824, 32
        %v1840 = vpop.permute.xlu0 %1839
        %1841 = vrot.lane.b32.xlu0 %v1823, 32
        %v1842 = vpop.permute.xlu0 %1841
        %1846 = vrot.lane.b32.xlu0 %v1729, 96
        %v1847 = vpop.permute.xlu0 %1846
        %1848 = vrot.lane.b32.xlu0 %v1732, 96
        %v1849 = vpop.permute.xlu0 %1848
        %1850 = vrot.lane.b32.xlu0 %v1737, 96
        %v1851 = vpop.permute.xlu0 %1850
        %1854 = vrot.lane.b32.xlu0 %v1729, 64
        %v1855 = vpop.permute.xlu0 %1854
        %1856 = vrot.lane.b32.xlu0 %v1732, 64
        %v1857 = vpop.permute.xlu0 %1856
        %1858 = vrot.lane.b32.xlu0 %v1737, 64
        %v1859 = vpop.permute.xlu0 %1858
        %1862 = vrot.lane.b32.xlu0 %v1729, 32
        %v1863 = vpop.permute.xlu0 %1862
        %1864 = vrot.lane.b32.xlu0 %v1732, 32
        %v1865 = vpop.permute.xlu0 %1864
        %1866 = vrot.lane.b32.xlu0 %v1737, 32
        %v1867 = vpop.permute.xlu0 %1866
        %v1872 = vrot.slane %v1737, 1
        %v1873 = vrot.slane %v1740, 1
        %v1874 = vsel %vm1773, %v1872, %v1873
        %v1875 = vrot.slane %v1745, 1
        %v1876 = vsel %vm1773, %v1873, %v1875
        %1879 = vrot.lane.b32.xlu0 %v1874, 96
        %v1880 = vpop.permute.xlu0 %1879
        %1881 = vrot.lane.b32.xlu0 %v1876, 96
        %v1882 = vpop.permute.xlu0 %1881
        %1883 = vrot.lane.b32.xlu0 %v1875, 96
        %v1884 = vpop.permute.xlu0 %1883
        %1887 = vrot.lane.b32.xlu0 %v1874, 64
        %v1888 = vpop.permute.xlu0 %1887
        %1889 = vrot.lane.b32.xlu0 %v1876, 64
        %v1890 = vpop.permute.xlu0 %1889
        %1891 = vrot.lane.b32.xlu0 %v1875, 64
        %v1892 = vpop.permute.xlu0 %1891
        %1895 = vrot.lane.b32.xlu0 %v1874, 32
        %v1896 = vpop.permute.xlu0 %1895
        %1897 = vrot.lane.b32.xlu0 %v1876, 32
        %v1898 = vpop.permute.xlu0 %1897
        %1899 = vrot.lane.b32.xlu0 %v1875, 32
        %v1900 = vpop.permute.xlu0 %1899
        %vm1903 = vcmask 261120
        %v1904 = vsel %vm1903, %v1668, 0
        %v1906 = vsel %vm1903, %v1672, 0
        %v1908 = vsel %vm1903, %v1678, 0
        %v1910 = vsel %vm1903, %v1670, 0
        %v1912 = vsel %vm1903, %v1674, 0
        %v1914 = vsel %vm1903, %v1680, 0
        %1916 = vmatprep.subr.mxu0 0.0
        %1917 = vmatpush1.xpose.msra.mxu0 %v1910
        %1918 = vmatprep.subr.mxu0 0.0
        %1919 = vmatpush1.xpose.msra.mxu0 %v1912
        %1920 = vmatprep.subr.mxu0 0.0
        %1921 = vmatpush1.xpose.msra.mxu0 %v1914
        %1922 = vmatprep.subr.mxu0 0.0
        %1923 = vmatpush1.xpose.msra.mxu0 0.0
        %1924 = vmatprep.subr.mxu0 0.0
        %1925 = vmatpush1.xpose.msra.mxu0 0.0
        %1926 = vmatprep.subr.mxu0 0.0
        %1927 = vmatpush1.xpose.msra.mxu0 0.0
        %1928 = vmatprep.subr.mxu0 0.0
        %1929 = vmatpush1.xpose.msra.mxu0 0.0
        %1930 = vmatprep.subr.mxu0 0.0
        %1931 = vmatpush1.xpose.msra.mxu0 0.0
        %1932 = vmatprep.subr.mxu0 0.0
        %1933 = vmatpush1.xpose.msra.mxu0 0.0
        %1934 = vmatprep.subr.mxu0 0.0
        %1935 = vmatpush1.xpose.msra.mxu0 0.0
        %1936 = vmatprep.subr.mxu0 0.0
        %1937 = vmatpush1.xpose.msra.mxu0 0.0
        %1938 = vmatprep.subr.mxu0 0.0
        %1939 = vmatpush1.xpose.msra.mxu0 0.0
        %1940 = vmatprep.subr.mxu0 0.0
        %1941 = vmatpush1.xpose.msra.mxu0 0.0
        %1942 = vmatprep.subr.mxu0 0.0
        %1943 = vmatpush1.xpose.msra.mxu0 0.0
        %1944 = vmatprep.subr.mxu0 0.0
        %1945 = vmatpush1.xpose.msra.mxu0 0.0
        %1946 = vmatprep.subr.mxu0 0.0
        %1947 = vmatpush1.xpose.msra.mxu0 0.0
        %1948 = vmatprep.subr.mxu0 0.0
        %1949 = vmatpush1.xpose.msra.mxu0 0.0
        %1950 = vmatprep.subr.mxu0 0.0
        %1951 = vmatpush1.xpose.msra.mxu0 0.0
        %1952 = vmatprep.subr.mxu0 0.0
        %1953 = vmatpush1.xpose.msra.mxu0 0.0
        %1954 = vmatprep.subr.mxu0 0.0
        %1955 = vmatpush1.xpose.msra.mxu0 0.0
        %1956 = vmatprep.subr.mxu0 0.0
        %1957 = vmatpush1.xpose.msra.mxu0 0.0
        %1958 = vmatprep.subr.mxu0 0.0
        %1959 = vmatpush1.xpose.msra.mxu0 0.0
        %1960 = vmatprep.subr.mxu0 0.0
        %1961 = vmatpush1.xpose.msra.mxu0 0.0
        %1962 = vmatprep.subr.mxu0 0.0
        %1963 = vmatpush1.xpose.msra.mxu0 0.0
        %1964 = vmatprep.subr.mxu0 0.0
        %1965 = vmatpush1.xpose.msra.mxu0 0.0
        %1966 = vmatprep.subr.mxu0 0.0
        %1967 = vmatpush1.xpose.msra.mxu0 0.0
        %1968 = vmatprep.subr.mxu0 0.0
        %1969 = vmatpush1.xpose.msra.mxu0 0.0
        %1970 = vmatprep.subr.mxu0 0.0
        %1971 = vmatpush1.xpose.msra.mxu0 0.0
        %1972 = vmatprep.subr.mxu0 0.0
        %1973 = vmatpush1.xpose.msra.mxu0 0.0
        %1974 = vmatprep.subr.mxu0 0.0
        %1975 = vmatpush1.xpose.msra.mxu0 0.0
        %1976 = vmatprep.subr.mxu0 0.0
        %1977 = vmatpush1.xpose.msra.mxu0 0.0
        %1978 = vmatprep.subr.mxu0 0.0
        %1979 = vmatpush1.xpose.msra.mxu0 0.0
        %1980 = vmatprep.mubr.f32.mxu0 0.0
        %1981 = vmatmul.mubr.f32.gmra.mrb[0].mxu0 %v1904
        %v1982 = vpop.f32.mrb[0].mxu0
        %v1983 = vadd.f32 0.0, %v1982
        %v1984 = vpop.f32.mrb[0].mxu0
        %1985 = vmatprep.mubr.f32.mxu0 0.0
        %1986 = vmatmul.mubr.f32.gmra.mrb[0].mxu0 %v1906
        %v1987 = vpop.f32.mrb[0].mxu0
        %v1988 = vadd.f32 0.0, %v1987
        %v1989 = vpop.f32.mrb[0].mxu0
        %1990 = vmatprep.mubr.f32.mxu0 0.0
        %1991 = vmatmul.mubr.f32.gmra.mrb[0].mxu0 %v1908
        %v1992 = vpop.f32.mrb[0].mxu0
        %v1993 = vadd.f32 0.0, %v1992
        %v1994 = vpop.f32.mrb[0].mxu0
        %1995 = vdwg.mxu0
        %v1996 = vsel %vm1903, %v1754, 0
        %v1998 = vsel %vm1903, %v1756, 0
        %v2000 = vsel %vm1903, %v1758, 0
        %v2002 = vsel %vm1903, %v1801, 0
        %v2004 = vsel %vm1903, %v1803, 0
        %v2006 = vsel %vm1903, %v1805, 0
        %2008 = vmatprep.subr.mxu0 0.0
        %2009 = vmatpush1.xpose.msra.mxu0 %v2002
        %2010 = vmatprep.subr.mxu0 0.0
        %2011 = vmatpush1.xpose.msra.mxu0 %v2004
        %2012 = vmatprep.subr.mxu0 0.0
        %2013 = vmatpush1.xpose.msra.mxu0 %v2006
        %2014 = vmatprep.subr.mxu0 0.0
        %2015 = vmatpush1.xpose.msra.mxu0 0.0
        %2016 = vmatprep.subr.mxu0 0.0
        %2017 = vmatpush1.xpose.msra.mxu0 0.0
        %2018 = vmatprep.subr.mxu0 0.0
        %2019 = vmatpush1.xpose.msra.mxu0 0.0
        %2020 = vmatprep.subr.mxu0 0.0
        %2021 = vmatpush1.xpose.msra.mxu0 0.0
        %2022 = vmatprep.subr.mxu0 0.0
        %2023 = vmatpush1.xpose.msra.mxu0 0.0
        %2024 = vmatprep.subr.mxu0 0.0
        %2025 = vmatpush1.xpose.msra.mxu0 0.0
        %2026 = vmatprep.subr.mxu0 0.0
        %2027 = vmatpush1.xpose.msra.mxu0 0.0
        %2028 = vmatprep.subr.mxu0 0.0
        %2029 = vmatpush1.xpose.msra.mxu0 0.0
        %2030 = vmatprep.subr.mxu0 0.0
        %2031 = vmatpush1.xpose.msra.mxu0 0.0
        %2032 = vmatprep.subr.mxu0 0.0
        %2033 = vmatpush1.xpose.msra.mxu0 0.0
        %2034 = vmatprep.subr.mxu0 0.0
        %2035 = vmatpush1.xpose.msra.mxu0 0.0
        %2036 = vmatprep.subr.mxu0 0.0
        %2037 = vmatpush1.xpose.msra.mxu0 0.0
        %2038 = vmatprep.subr.mxu0 0.0
        %2039 = vmatpush1.xpose.msra.mxu0 0.0
        %2040 = vmatprep.subr.mxu0 0.0
        %2041 = vmatpush1.xpose.msra.mxu0 0.0
        %2042 = vmatprep.subr.mxu0 0.0
        %2043 = vmatpush1.xpose.msra.mxu0 0.0
        %2044 = vmatprep.subr.mxu0 0.0
        %2045 = vmatpush1.xpose.msra.mxu0 0.0
        %2046 = vmatprep.subr.mxu0 0.0
        %2047 = vmatpush1.xpose.msra.mxu0 0.0
        %2048 = vmatprep.subr.mxu0 0.0
        %2049 = vmatpush1.xpose.msra.mxu0 0.0
        %2050 = vmatprep.subr.mxu0 0.0
        %2051 = vmatpush1.xpose.msra.mxu0 0.0
        %2052 = vmatprep.subr.mxu0 0.0
        %2053 = vmatpush1.xpose.msra.mxu0 0.0
        %2054 = vmatprep.subr.mxu0 0.0
        %2055 = vmatpush1.xpose.msra.mxu0 0.0
        %2056 = vmatprep.subr.mxu0 0.0
        %2057 = vmatpush1.xpose.msra.mxu0 0.0
        %2058 = vmatprep.subr.mxu0 0.0
        %2059 = vmatpush1.xpose.msra.mxu0 0.0
        %2060 = vmatprep.subr.mxu0 0.0
        %2061 = vmatpush1.xpose.msra.mxu0 0.0
        %2062 = vmatprep.subr.mxu0 0.0
        %2063 = vmatpush1.xpose.msra.mxu0 0.0
        %2064 = vmatprep.subr.mxu0 0.0
        %2065 = vmatpush1.xpose.msra.mxu0 0.0
        %2066 = vmatprep.subr.mxu0 0.0
        %2067 = vmatpush1.xpose.msra.mxu0 0.0
        %2068 = vmatprep.subr.mxu0 0.0
        %2069 = vmatpush1.xpose.msra.mxu0 0.0
        %2070 = vmatprep.subr.mxu0 0.0
        %2071 = vmatpush1.xpose.msra.mxu0 0.0
        %2072 = vmatprep.mubr.f32.mxu0 0.0
        %2073 = vmatmul.mubr.f32.gmra.mrb[0].mxu0 %v1996
        %v2074 = vpop.f32.mrb[0].mxu0
        %v2075 = vadd.f32 0.0, %v2074
        %v2076 = vpop.f32.mrb[0].mxu0
        %2077 = vmatprep.mubr.f32.mxu0 0.0
        %2078 = vmatmul.mubr.f32.gmra.mrb[0].mxu0 %v1998
        %v2079 = vpop.f32.mrb[0].mxu0
        %v2080 = vadd.f32 0.0, %v2079
        %v2081 = vpop.f32.mrb[0].mxu0
        %2082 = vmatprep.mubr.f32.mxu0 0.0
        %2083 = vmatmul.mubr.f32.gmra.mrb[0].mxu0 %v2000
        %v2084 = vpop.f32.mrb[0].mxu0
        %v2085 = vadd.f32 0.0, %v2084
        %v2086 = vpop.f32.mrb[0].mxu0
        %2087 = vdwg.mxu0
        %v2088 = vsel %vm1903, %v1760, 0
        %v2090 = vsel %vm1903, %v1762, 0
        %v2092 = vsel %vm1903, %v1764, 0
        %v2094 = vsel %vm1903, %v1807, 0
        %v2096 = vsel %vm1903, %v1809, 0
        %v2098 = vsel %vm1903, %v1811, 0
        %2100 = vmatprep.subr.mxu0 0.0
        %2101 = vmatpush1.xpose.msra.mxu0 %v2094
        %2102 = vmatprep.subr.mxu0 0.0
        %2103 = vmatpush1.xpose.msra.mxu0 %v2096
        %2104 = vmatprep.subr.mxu0 0.0
        %2105 = vmatpush1.xpose.msra.mxu0 %v2098
        %2106 = vmatprep.subr.mxu0 0.0
        %2107 = vmatpush1.xpose.msra.mxu0 0.0
        %2108 = vmatprep.subr.mxu0 0.0
        %2109 = vmatpush1.xpose.msra.mxu0 0.0
        %2110 = vmatprep.subr.mxu0 0.0
        %2111 = vmatpush1.xpose.msra.mxu0 0.0
        %2112 = vmatprep.subr.mxu0 0.0
        %2113 = vmatpush1.xpose.msra.mxu0 0.0
        %2114 = vmatprep.subr.mxu0 0.0
        %2115 = vmatpush1.xpose.msra.mxu0 0.0
        %2116 = vmatprep.subr.mxu0 0.0
        %2117 = vmatpush1.xpose.msra.mxu0 0.0
        %2118 = vmatprep.subr.mxu0 0.0
        %2119 = vmatpush1.xpose.msra.mxu0 0.0
        %2120 = vmatprep.subr.mxu0 0.0
        %2121 = vmatpush1.xpose.msra.mxu0 0.0
        %2122 = vmatprep.subr.mxu0 0.0
        %2123 = vmatpush1.xpose.msra.mxu0 0.0
        %2124 = vmatprep.subr.mxu0 0.0
        %2125 = vmatpush1.xpose.msra.mxu0 0.0
        %2126 = vmatprep.subr.mxu0 0.0
        %2127 = vmatpush1.xpose.msra.mxu0 0.0
        %2128 = vmatprep.subr.mxu0 0.0
        %2129 = vmatpush1.xpose.msra.mxu0 0.0
        %2130 = vmatprep.subr.mxu0 0.0
        %2131 = vmatpush1.xpose.msra.mxu0 0.0
        %2132 = vmatprep.subr.mxu0 0.0
        %2133 = vmatpush1.xpose.msra.mxu0 0.0
        %2134 = vmatprep.subr.mxu0 0.0
        %2135 = vmatpush1.xpose.msra.mxu0 0.0
        %2136 = vmatprep.subr.mxu0 0.0
        %2137 = vmatpush1.xpose.msra.mxu0 0.0
        %2138 = vmatprep.subr.mxu0 0.0
        %2139 = vmatpush1.xpose.msra.mxu0 0.0
        %2140 = vmatprep.subr.mxu0 0.0
        %2141 = vmatpush1.xpose.msra.mxu0 0.0
        %2142 = vmatprep.subr.mxu0 0.0
        %2143 = vmatpush1.xpose.msra.mxu0 0.0
        %2144 = vmatprep.subr.mxu0 0.0
        %2145 = vmatpush1.xpose.msra.mxu0 0.0
        %2146 = vmatprep.subr.mxu0 0.0
        %2147 = vmatpush1.xpose.msra.mxu0 0.0
        %2148 = vmatprep.subr.mxu0 0.0
        %2149 = vmatpush1.xpose.msra.mxu0 0.0
        %2150 = vmatprep.subr.mxu0 0.0
        %2151 = vmatpush1.xpose.msra.mxu0 0.0
        %2152 = vmatprep.subr.mxu0 0.0
        %2153 = vmatpush1.xpose.msra.mxu0 0.0
        %2154 = vmatprep.subr.mxu0 0.0
        %2155 = vmatpush1.xpose.msra.mxu0 0.0
        %2156 = vmatprep.subr.mxu0 0.0
        %2157 = vmatpush1.xpose.msra.mxu0 0.0
        %2158 = vmatprep.subr.mxu0 0.0
        %2159 = vmatpush1.xpose.msra.mxu0 0.0
        %2160 = vmatprep.subr.mxu0 0.0
        %2161 = vmatpush1.xpose.msra.mxu0 0.0
        %2162 = vmatprep.subr.mxu0 0.0
        %2163 = vmatpush1.xpose.msra.mxu0 0.0
        %2164 = vmatprep.mubr.f32.mxu0 0.0
        %2165 = vmatmul.mubr.f32.gmra.mrb[0].mxu0 %v2088
        %v2166 = vpop.f32.mrb[0].mxu0
        %v2167 = vadd.f32 0.0, %v2166
        %v2168 = vpop.f32.mrb[0].mxu0
        %2169 = vmatprep.mubr.f32.mxu0 0.0
        %2170 = vmatmul.mubr.f32.gmra.mrb[0].mxu0 %v2090
        %v2171 = vpop.f32.mrb[0].mxu0
        %v2172 = vadd.f32 0.0, %v2171
        %v2173 = vpop.f32.mrb[0].mxu0
        %2174 = vmatprep.mubr.f32.mxu0 0.0
        %2175 = vmatmul.mubr.f32.gmra.mrb[0].mxu0 %v2092
        %v2176 = vpop.f32.mrb[0].mxu0
        %v2177 = vadd.f32 0.0, %v2176
        %v2178 = vpop.f32.mrb[0].mxu0
        %2179 = vdwg.mxu0
        %v2180 = vsel %vm1903, %v1766, 0
        %v2182 = vsel %vm1903, %v1768, 0
        %v2184 = vsel %vm1903, %v1770, 0
        %v2186 = vsel %vm1903, %v1813, 0
        %v2188 = vsel %vm1903, %v1815, 0
        %v2190 = vsel %vm1903, %v1817, 0
        %2192 = vmatprep.subr.mxu0 0.0
        %2193 = vmatpush1.xpose.msra.mxu0 %v2186
        %2194 = vmatprep.subr.mxu0 0.0
        %2195 = vmatpush1.xpose.msra.mxu0 %v2188
        %2196 = vmatprep.subr.mxu0 0.0
        %2197 = vmatpush1.xpose.msra.mxu0 %v2190
        %2198 = vmatprep.subr.mxu0 0.0
        %2199 = vmatpush1.xpose.msra.mxu0 0.0
        %2200 = vmatprep.subr.mxu0 0.0
        %2201 = vmatpush1.xpose.msra.mxu0 0.0
        %2202 = vmatprep.subr.mxu0 0.0
        %2203 = vmatpush1.xpose.msra.mxu0 0.0
        %2204 = vmatprep.subr.mxu0 0.0
        %2205 = vmatpush1.xpose.msra.mxu0 0.0
        %2206 = vmatprep.subr.mxu0 0.0
        %2207 = vmatpush1.xpose.msra.mxu0 0.0
        %2208 = vmatprep.subr.mxu0 0.0
        %2209 = vmatpush1.xpose.msra.mxu0 0.0
        %2210 = vmatprep.subr.mxu0 0.0
        %2211 = vmatpush1.xpose.msra.mxu0 0.0
        %2212 = vmatprep.subr.mxu0 0.0
        %2213 = vmatpush1.xpose.msra.mxu0 0.0
        %2214 = vmatprep.subr.mxu0 0.0
        %2215 = vmatpush1.xpose.msra.mxu0 0.0
        %2216 = vmatprep.subr.mxu0 0.0
        %2217 = vmatpush1.xpose.msra.mxu0 0.0
        %2218 = vmatprep.subr.mxu0 0.0
        %2219 = vmatpush1.xpose.msra.mxu0 0.0
        %2220 = vmatprep.subr.mxu0 0.0
        %2221 = vmatpush1.xpose.msra.mxu0 0.0
        %2222 = vmatprep.subr.mxu0 0.0
        %2223 = vmatpush1.xpose.msra.mxu0 0.0
        %2224 = vmatprep.subr.mxu0 0.0
        %2225 = vmatpush1.xpose.msra.mxu0 0.0
        %2226 = vmatprep.subr.mxu0 0.0
        %2227 = vmatpush1.xpose.msra.mxu0 0.0
        %2228 = vmatprep.subr.mxu0 0.0
        %2229 = vmatpush1.xpose.msra.mxu0 0.0
        %2230 = vmatprep.subr.mxu0 0.0
        %2231 = vmatpush1.xpose.msra.mxu0 0.0
        %2232 = vmatprep.subr.mxu0 0.0
        %2233 = vmatpush1.xpose.msra.mxu0 0.0
        %2234 = vmatprep.subr.mxu0 0.0
        %2235 = vmatpush1.xpose.msra.mxu0 0.0
        %2236 = vmatprep.subr.mxu0 0.0
        %2237 = vmatpush1.xpose.msra.mxu0 0.0
        %2238 = vmatprep.subr.mxu0 0.0
        %2239 = vmatpush1.xpose.msra.mxu0 0.0
        %2240 = vmatprep.subr.mxu0 0.0
        %2241 = vmatpush1.xpose.msra.mxu0 0.0
        %2242 = vmatprep.subr.mxu0 0.0
        %2243 = vmatpush1.xpose.msra.mxu0 0.0
        %2244 = vmatprep.subr.mxu0 0.0
        %2245 = vmatpush1.xpose.msra.mxu0 0.0
        %2246 = vmatprep.subr.mxu0 0.0
        %2247 = vmatpush1.xpose.msra.mxu0 0.0
        %2248 = vmatprep.subr.mxu0 0.0
        %2249 = vmatpush1.xpose.msra.mxu0 0.0
        %2250 = vmatprep.subr.mxu0 0.0
        %2251 = vmatpush1.xpose.msra.mxu0 0.0
        %2252 = vmatprep.subr.mxu0 0.0
        %2253 = vmatpush1.xpose.msra.mxu0 0.0
        %2254 = vmatprep.subr.mxu0 0.0
        %2255 = vmatpush1.xpose.msra.mxu0 0.0
        %2256 = vmatprep.mubr.f32.mxu0 0.0
        %2257 = vmatmul.mubr.f32.gmra.mrb[0].mxu0 %v2180
        %v2258 = vpop.f32.mrb[0].mxu0
        %v2259 = vadd.f32 0.0, %v2258
        %v2260 = vpop.f32.mrb[0].mxu0
        %2261 = vmatprep.mubr.f32.mxu0 0.0
        %2262 = vmatmul.mubr.f32.gmra.mrb[0].mxu0 %v2182
        %v2263 = vpop.f32.mrb[0].mxu0
        %v2264 = vadd.f32 0.0, %v2263
        %v2265 = vpop.f32.mrb[0].mxu0
        %2266 = vmatprep.mubr.f32.mxu0 0.0
        %2267 = vmatmul.mubr.f32.gmra.mrb[0].mxu0 %v2184
        %v2268 = vpop.f32.mrb[0].mxu0
        %v2269 = vadd.f32 0.0, %v2268
        %v2270 = vpop.f32.mrb[0].mxu0
        %2271 = vdwg.mxu0
        %v2272 = vsel %vm1903, %v1776, 0
        %v2274 = vsel %vm1903, %v1778, 0
        %v2276 = vsel %vm1903, %v1777, 0
        %v2278 = vsel %vm1903, %v1822, 0
        %v2280 = vsel %vm1903, %v1824, 0
        %v2282 = vsel %vm1903, %v1823, 0
        %2284 = vmatprep.subr.mxu0 0.0
        %2285 = vmatpush1.xpose.msra.mxu0 %v2278
        %2286 = vmatprep.subr.mxu0 0.0
        %2287 = vmatpush1.xpose.msra.mxu0 %v2280
        %2288 = vmatprep.subr.mxu0 0.0
        %2289 = vmatpush1.xpose.msra.mxu0 %v2282
        %2290 = vmatprep.subr.mxu0 0.0
        %2291 = vmatpush1.xpose.msra.mxu0 0.0
        %2292 = vmatprep.subr.mxu0 0.0
        %2293 = vmatpush1.xpose.msra.mxu0 0.0
        %2294 = vmatprep.subr.mxu0 0.0
        %2295 = vmatpush1.xpose.msra.mxu0 0.0
        %2296 = vmatprep.subr.mxu0 0.0
        %2297 = vmatpush1.xpose.msra.mxu0 0.0
        %2298 = vmatprep.subr.mxu0 0.0
        %2299 = vmatpush1.xpose.msra.mxu0 0.0
        %2300 = vmatprep.subr.mxu0 0.0
        %2301 = vmatpush1.xpose.msra.mxu0 0.0
        %2302 = vmatprep.subr.mxu0 0.0
        %2303 = vmatpush1.xpose.msra.mxu0 0.0
        %2304 = vmatprep.subr.mxu0 0.0
        %2305 = vmatpush1.xpose.msra.mxu0 0.0
        %2306 = vmatprep.subr.mxu0 0.0
        %2307 = vmatpush1.xpose.msra.mxu0 0.0
        %2308 = vmatprep.subr.mxu0 0.0
        %2309 = vmatpush1.xpose.msra.mxu0 0.0
        %2310 = vmatprep.subr.mxu0 0.0
        %2311 = vmatpush1.xpose.msra.mxu0 0.0
        %2312 = vmatprep.subr.mxu0 0.0
        %2313 = vmatpush1.xpose.msra.mxu0 0.0
        %2314 = vmatprep.subr.mxu0 0.0
        %2315 = vmatpush1.xpose.msra.mxu0 0.0
        %2316 = vmatprep.subr.mxu0 0.0
        %2317 = vmatpush1.xpose.msra.mxu0 0.0
        %2318 = vmatprep.subr.mxu0 0.0
        %2319 = vmatpush1.xpose.msra.mxu0 0.0
        %2320 = vmatprep.subr.mxu0 0.0
        %2321 = vmatpush1.xpose.msra.mxu0 0.0
        %2322 = vmatprep.subr.mxu0 0.0
        %2323 = vmatpush1.xpose.msra.mxu0 0.0
        %2324 = vmatprep.subr.mxu0 0.0
        %2325 = vmatpush1.xpose.msra.mxu0 0.0
        %2326 = vmatprep.subr.mxu0 0.0
        %2327 = vmatpush1.xpose.msra.mxu0 0.0
        %2328 = vmatprep.subr.mxu0 0.0
        %2329 = vmatpush1.xpose.msra.mxu0 0.0
        %2330 = vmatprep.subr.mxu0 0.0
        %2331 = vmatpush1.xpose.msra.mxu0 0.0
        %2332 = vmatprep.subr.mxu0 0.0
        %2333 = vmatpush1.xpose.msra.mxu0 0.0
        %2334 = vmatprep.subr.mxu0 0.0
        %2335 = vmatpush1.xpose.msra.mxu0 0.0
        %2336 = vmatprep.subr.mxu0 0.0
        %2337 = vmatpush1.xpose.msra.mxu0 0.0
        %2338 = vmatprep.subr.mxu0 0.0
        %2339 = vmatpush1.xpose.msra.mxu0 0.0
        %2340 = vmatprep.subr.mxu0 0.0
        %2341 = vmatpush1.xpose.msra.mxu0 0.0
        %2342 = vmatprep.subr.mxu0 0.0
        %2343 = vmatpush1.xpose.msra.mxu0 0.0
        %2344 = vmatprep.subr.mxu0 0.0
        %2345 = vmatpush1.xpose.msra.mxu0 0.0
        %2346 = vmatprep.subr.mxu0 0.0
        %2347 = vmatpush1.xpose.msra.mxu0 0.0
        %2348 = vmatprep.mubr.f32.mxu0 0.0
        %2349 = vmatmul.mubr.f32.gmra.mrb[0].mxu0 %v2272
        %v2350 = vpop.f32.mrb[0].mxu0
        %v2351 = vadd.f32 0.0, %v2350
        %v2352 = vpop.f32.mrb[0].mxu0
        %2353 = vmatprep.mubr.f32.mxu0 0.0
        %2354 = vmatmul.mubr.f32.gmra.mrb[0].mxu0 %v2274
        %v2355 = vpop.f32.mrb[0].mxu0
        %v2356 = vadd.f32 0.0, %v2355
        %v2357 = vpop.f32.mrb[0].mxu0
        %2358 = vmatprep.mubr.f32.mxu0 0.0
        %2359 = vmatmul.mubr.f32.gmra.mrb[0].mxu0 %v2276
        %v2360 = vpop.f32.mrb[0].mxu0
        %v2361 = vadd.f32 0.0, %v2360
        %v2362 = vpop.f32.mrb[0].mxu0
        %2363 = vdwg.mxu0
        %v2364 = vsel %vm1903, %v1780, 0
        %v2366 = vsel %vm1903, %v1782, 0
        %v2368 = vsel %vm1903, %v1784, 0
        %v2370 = vsel %vm1903, %v1826, 0
        %v2372 = vsel %vm1903, %v1828, 0
        %v2374 = vsel %vm1903, %v1830, 0
        %2376 = vmatprep.subr.mxu0 0.0
        %2377 = vmatpush1.xpose.msra.mxu0 %v2370
        %2378 = vmatprep.subr.mxu0 0.0
        %2379 = vmatpush1.xpose.msra.mxu0 %v2372
        %2380 = vmatprep.subr.mxu0 0.0
        %2381 = vmatpush1.xpose.msra.mxu0 %v2374
        %2382 = vmatprep.subr.mxu0 0.0
        %2383 = vmatpush1.xpose.msra.mxu0 0.0
        %2384 = vmatprep.subr.mxu0 0.0
        %2385 = vmatpush1.xpose.msra.mxu0 0.0
        %2386 = vmatprep.subr.mxu0 0.0
        %2387 = vmatpush1.xpose.msra.mxu0 0.0
        %2388 = vmatprep.subr.mxu0 0.0
        %2389 = vmatpush1.xpose.msra.mxu0 0.0
        %2390 = vmatprep.subr.mxu0 0.0
        %2391 = vmatpush1.xpose.msra.mxu0 0.0
        %2392 = vmatprep.subr.mxu0 0.0
        %2393 = vmatpush1.xpose.msra.mxu0 0.0
        %2394 = vmatprep.subr.mxu0 0.0
        %2395 = vmatpush1.xpose.msra.mxu0 0.0
        %2396 = vmatprep.subr.mxu0 0.0
        %2397 = vmatpush1.xpose.msra.mxu0 0.0
        %2398 = vmatprep.subr.mxu0 0.0
        %2399 = vmatpush1.xpose.msra.mxu0 0.0
        %2400 = vmatprep.subr.mxu0 0.0
        %2401 = vmatpush1.xpose.msra.mxu0 0.0
        %2402 = vmatprep.subr.mxu0 0.0
        %2403 = vmatpush1.xpose.msra.mxu0 0.0
        %2404 = vmatprep.subr.mxu0 0.0
        %2405 = vmatpush1.xpose.msra.mxu0 0.0
        %2406 = vmatprep.subr.mxu0 0.0
        %2407 = vmatpush1.xpose.msra.mxu0 0.0
        %2408 = vmatprep.subr.mxu0 0.0
        %2409 = vmatpush1.xpose.msra.mxu0 0.0
        %2410 = vmatprep.subr.mxu0 0.0
        %2411 = vmatpush1.xpose.msra.mxu0 0.0
        %2412 = vmatprep.subr.mxu0 0.0
        %2413 = vmatpush1.xpose.msra.mxu0 0.0
        %2414 = vmatprep.subr.mxu0 0.0
        %2415 = vmatpush1.xpose.msra.mxu0 0.0
        %2416 = vmatprep.subr.mxu0 0.0
        %2417 = vmatpush1.xpose.msra.mxu0 0.0
        %2418 = vmatprep.subr.mxu0 0.0
        %2419 = vmatpush1.xpose.msra.mxu0 0.0
        %2420 = vmatprep.subr.mxu0 0.0
        %2421 = vmatpush1.xpose.msra.mxu0 0.0
        %2422 = vmatprep.subr.mxu0 0.0
        %2423 = vmatpush1.xpose.msra.mxu0 0.0
        %2424 = vmatprep.subr.mxu0 0.0
        %2425 = vmatpush1.xpose.msra.mxu0 0.0
        %2426 = vmatprep.subr.mxu0 0.0
        %2427 = vmatpush1.xpose.msra.mxu0 0.0
        %2428 = vmatprep.subr.mxu0 0.0
        %2429 = vmatpush1.xpose.msra.mxu0 0.0
        %2430 = vmatprep.subr.mxu0 0.0
        %2431 = vmatpush1.xpose.msra.mxu0 0.0
        %2432 = vmatprep.subr.mxu0 0.0
        %2433 = vmatpush1.xpose.msra.mxu0 0.0
        %2434 = vmatprep.subr.mxu0 0.0
        %2435 = vmatpush1.xpose.msra.mxu0 0.0
        %2436 = vmatprep.subr.mxu0 0.0
        %2437 = vmatpush1.xpose.msra.mxu0 0.0
        %2438 = vmatprep.subr.mxu0 0.0
        %2439 = vmatpush1.xpose.msra.mxu0 0.0
        %2440 = vmatprep.mubr.f32.mxu0 0.0
        %2441 = vmatmul.mubr.f32.gmra.mrb[0].mxu0 %v2364
        %v2442 = vpop.f32.mrb[0].mxu0
        %v2443 = vadd.f32 0.0, %v2442
        %v2444 = vpop.f32.mrb[0].mxu0
        %2445 = vmatprep.mubr.f32.mxu0 0.0
        %2446 = vmatmul.mubr.f32.gmra.mrb[0].mxu0 %v2366
        %v2447 = vpop.f32.mrb[0].mxu0
        %v2448 = vadd.f32 0.0, %v2447
        %v2449 = vpop.f32.mrb[0].mxu0
        %2450 = vmatprep.mubr.f32.mxu0 0.0
        %2451 = vmatmul.mubr.f32.gmra.mrb[0].mxu0 %v2368
        %v2452 = vpop.f32.mrb[0].mxu0
        %v2453 = vadd.f32 0.0, %v2452
        %v2454 = vpop.f32.mrb[0].mxu0
        %2455 = vdwg.mxu0
        %v2456 = vsel %vm1903, %v1786, 0
        %v2458 = vsel %vm1903, %v1788, 0
        %v2460 = vsel %vm1903, %v1790, 0
        %v2462 = vsel %vm1903, %v1832, 0
        %v2464 = vsel %vm1903, %v1834, 0
        %v2466 = vsel %vm1903, %v1836, 0
        %2468 = vmatprep.subr.mxu0 0.0
        %2469 = vmatpush1.xpose.msra.mxu0 %v2462
        %2470 = vmatprep.subr.mxu0 0.0
        %2471 = vmatpush1.xpose.msra.mxu0 %v2464
        %2472 = vmatprep.subr.mxu0 0.0
        %2473 = vmatpush1.xpose.msra.mxu0 %v2466
        %2474 = vmatprep.subr.mxu0 0.0
        %2475 = vmatpush1.xpose.msra.mxu0 0.0
        %2476 = vmatprep.subr.mxu0 0.0
        %2477 = vmatpush1.xpose.msra.mxu0 0.0
        %2478 = vmatprep.subr.mxu0 0.0
        %2479 = vmatpush1.xpose.msra.mxu0 0.0
        %2480 = vmatprep.subr.mxu0 0.0
        %2481 = vmatpush1.xpose.msra.mxu0 0.0
        %2482 = vmatprep.subr.mxu0 0.0
        %2483 = vmatpush1.xpose.msra.mxu0 0.0
        %2484 = vmatprep.subr.mxu0 0.0
        %2485 = vmatpush1.xpose.msra.mxu0 0.0
        %2486 = vmatprep.subr.mxu0 0.0
        %2487 = vmatpush1.xpose.msra.mxu0 0.0
        %2488 = vmatprep.subr.mxu0 0.0
        %2489 = vmatpush1.xpose.msra.mxu0 0.0
        %2490 = vmatprep.subr.mxu0 0.0
        %2491 = vmatpush1.xpose.msra.mxu0 0.0
        %2492 = vmatprep.subr.mxu0 0.0
        %2493 = vmatpush1.xpose.msra.mxu0 0.0
        %2494 = vmatprep.subr.mxu0 0.0
        %2495 = vmatpush1.xpose.msra.mxu0 0.0
        %2496 = vmatprep.subr.mxu0 0.0
        %2497 = vmatpush1.xpose.msra.mxu0 0.0
        %2498 = vmatprep.subr.mxu0 0.0
        %2499 = vmatpush1.xpose.msra.mxu0 0.0
        %2500 = vmatprep.subr.mxu0 0.0
        %2501 = vmatpush1.xpose.msra.mxu0 0.0
        %2502 = vmatprep.subr.mxu0 0.0
        %2503 = vmatpush1.xpose.msra.mxu0 0.0
        %2504 = vmatprep.subr.mxu0 0.0
        %2505 = vmatpush1.xpose.msra.mxu0 0.0
        %2506 = vmatprep.subr.mxu0 0.0
        %2507 = vmatpush1.xpose.msra.mxu0 0.0
        %2508 = vmatprep.subr.mxu0 0.0
        %2509 = vmatpush1.xpose.msra.mxu0 0.0
        %2510 = vmatprep.subr.mxu0 0.0
        %2511 = vmatpush1.xpose.msra.mxu0 0.0
        %2512 = vmatprep.subr.mxu0 0.0
        %2513 = vmatpush1.xpose.msra.mxu0 0.0
        %2514 = vmatprep.subr.mxu0 0.0
        %2515 = vmatpush1.xpose.msra.mxu0 0.0
        %2516 = vmatprep.subr.mxu0 0.0
        %2517 = vmatpush1.xpose.msra.mxu0 0.0
        %2518 = vmatprep.subr.mxu0 0.0
        %2519 = vmatpush1.xpose.msra.mxu0 0.0
        %2520 = vmatprep.subr.mxu0 0.0
        %2521 = vmatpush1.xpose.msra.mxu0 0.0
        %2522 = vmatprep.subr.mxu0 0.0
        %2523 = vmatpush1.xpose.msra.mxu0 0.0
        %2524 = vmatprep.subr.mxu0 0.0
        %2525 = vmatpush1.xpose.msra.mxu0 0.0
        %2526 = vmatprep.subr.mxu0 0.0
        %2527 = vmatpush1.xpose.msra.mxu0 0.0
        %2528 = vmatprep.subr.mxu0 0.0
        %2529 = vmatpush1.xpose.msra.mxu0 0.0
        %2530 = vmatprep.subr.mxu0 0.0
        %2531 = vmatpush1.xpose.msra.mxu0 0.0
        %2532 = vmatprep.mubr.f32.mxu0 0.0
        %2533 = vmatmul.mubr.f32.gmra.mrb[0].mxu0 %v2456
        %v2534 = vpop.f32.mrb[0].mxu0
        %v2535 = vadd.f32 0.0, %v2534
        %v2536 = vpop.f32.mrb[0].mxu0
        %2537 = vmatprep.mubr.f32.mxu0 0.0
        %2538 = vmatmul.mubr.f32.gmra.mrb[0].mxu0 %v2458
        %v2539 = vpop.f32.mrb[0].mxu0
        %v2540 = vadd.f32 0.0, %v2539
        %v2541 = vpop.f32.mrb[0].mxu0
        %2542 = vmatprep.mubr.f32.mxu0 0.0
        %2543 = vmatmul.mubr.f32.gmra.mrb[0].mxu0 %v2460
        %v2544 = vpop.f32.mrb[0].mxu0
        %v2545 = vadd.f32 0.0, %v2544
        %v2546 = vpop.f32.mrb[0].mxu0
        %2547 = vdwg.mxu0
        %v2548 = vsel %vm1903, %v1792, 0
        %v2550 = vsel %vm1903, %v1794, 0
        %v2552 = vsel %vm1903, %v1796, 0
        %v2554 = vsel %vm1903, %v1838, 0
        %v2556 = vsel %vm1903, %v1840, 0
        %v2558 = vsel %vm1903, %v1842, 0
        %2560 = vmatprep.subr.mxu0 0.0
        %2561 = vmatpush1.xpose.msra.mxu0 %v2554
        %2562 = vmatprep.subr.mxu0 0.0
        %2563 = vmatpush1.xpose.msra.mxu0 %v2556
        %2564 = vmatprep.subr.mxu0 0.0
        %2565 = vmatpush1.xpose.msra.mxu0 %v2558
        %2566 = vmatprep.subr.mxu0 0.0
        %2567 = vmatpush1.xpose.msra.mxu0 0.0
        %2568 = vmatprep.subr.mxu0 0.0
        %2569 = vmatpush1.xpose.msra.mxu0 0.0
        %2570 = vmatprep.subr.mxu0 0.0
        %2571 = vmatpush1.xpose.msra.mxu0 0.0
        %2572 = vmatprep.subr.mxu0 0.0
        %2573 = vmatpush1.xpose.msra.mxu0 0.0
        %2574 = vmatprep.subr.mxu0 0.0
        %2575 = vmatpush1.xpose.msra.mxu0 0.0
        %2576 = vmatprep.subr.mxu0 0.0
        %2577 = vmatpush1.xpose.msra.mxu0 0.0
        %2578 = vmatprep.subr.mxu0 0.0
        %2579 = vmatpush1.xpose.msra.mxu0 0.0
        %2580 = vmatprep.subr.mxu0 0.0
        %2581 = vmatpush1.xpose.msra.mxu0 0.0
        %2582 = vmatprep.subr.mxu0 0.0
        %2583 = vmatpush1.xpose.msra.mxu0 0.0
        %2584 = vmatprep.subr.mxu0 0.0
        %2585 = vmatpush1.xpose.msra.mxu0 0.0
        %2586 = vmatprep.subr.mxu0 0.0
        %2587 = vmatpush1.xpose.msra.mxu0 0.0
        %2588 = vmatprep.subr.mxu0 0.0
        %2589 = vmatpush1.xpose.msra.mxu0 0.0
        %2590 = vmatprep.subr.mxu0 0.0
        %2591 = vmatpush1.xpose.msra.mxu0 0.0
        %2592 = vmatprep.subr.mxu0 0.0
        %2593 = vmatpush1.xpose.msra.mxu0 0.0
        %2594 = vmatprep.subr.mxu0 0.0
        %2595 = vmatpush1.xpose.msra.mxu0 0.0
        %2596 = vmatprep.subr.mxu0 0.0
        %2597 = vmatpush1.xpose.msra.mxu0 0.0
        %2598 = vmatprep.subr.mxu0 0.0
        %2599 = vmatpush1.xpose.msra.mxu0 0.0
        %2600 = vmatprep.subr.mxu0 0.0
        %2601 = vmatpush1.xpose.msra.mxu0 0.0
        %2602 = vmatprep.subr.mxu0 0.0
        %2603 = vmatpush1.xpose.msra.mxu0 0.0
        %2604 = vmatprep.subr.mxu0 0.0
        %2605 = vmatpush1.xpose.msra.mxu0 0.0
        %2606 = vmatprep.subr.mxu0 0.0
        %2607 = vmatpush1.xpose.msra.mxu0 0.0
        %2608 = vmatprep.subr.mxu0 0.0
        %2609 = vmatpush1.xpose.msra.mxu0 0.0
        %2610 = vmatprep.subr.mxu0 0.0
        %2611 = vmatpush1.xpose.msra.mxu0 0.0
        %2612 = vmatprep.subr.mxu0 0.0
        %2613 = vmatpush1.xpose.msra.mxu0 0.0
        %2614 = vmatprep.subr.mxu0 0.0
        %2615 = vmatpush1.xpose.msra.mxu0 0.0
        %2616 = vmatprep.subr.mxu0 0.0
        %2617 = vmatpush1.xpose.msra.mxu0 0.0
        %2618 = vmatprep.subr.mxu0 0.0
        %2619 = vmatpush1.xpose.msra.mxu0 0.0
        %2620 = vmatprep.subr.mxu0 0.0
        %2621 = vmatpush1.xpose.msra.mxu0 0.0
        %2622 = vmatprep.subr.mxu0 0.0
        %2623 = vmatpush1.xpose.msra.mxu0 0.0
        %2624 = vmatprep.mubr.f32.mxu0 0.0
        %2625 = vmatmul.mubr.f32.gmra.mrb[0].mxu0 %v2548
        %v2626 = vpop.f32.mrb[0].mxu0
        %v2627 = vadd.f32 0.0, %v2626
        %v2628 = vpop.f32.mrb[0].mxu0
        %2629 = vmatprep.mubr.f32.mxu0 0.0
        %2630 = vmatmul.mubr.f32.gmra.mrb[0].mxu0 %v2550
        %v2631 = vpop.f32.mrb[0].mxu0
        %v2632 = vadd.f32 0.0, %v2631
        %v2633 = vpop.f32.mrb[0].mxu0
        %2634 = vmatprep.mubr.f32.mxu0 0.0
        %2635 = vmatmul.mubr.f32.gmra.mrb[0].mxu0 %v2552
        %v2636 = vpop.f32.mrb[0].mxu0
        %v2637 = vadd.f32 0.0, %v2636
        %v2638 = vpop.f32.mrb[0].mxu0
        %2639 = vdwg.mxu0
        %v2640 = vmul.f32 %v1983, 0.17677669
        %v2641 = vmul.f32 %v1988, 0.17677669
        %v2642 = vmul.f32 %v1993, 0.17677669
        %v2643 = vmul.f32 %v2075, 0.17677669
        %v2644 = vmul.f32 %v2080, 0.17677669
        %v2645 = vmul.f32 %v2085, 0.17677669
        %v2646 = vmul.f32 %v2167, 0.17677669
        %v2647 = vmul.f32 %v2172, 0.17677669
        %v2648 = vmul.f32 %v2177, 0.17677669
        %v2649 = vmul.f32 %v2259, 0.17677669
        %v2650 = vmul.f32 %v2264, 0.17677669
        %v2651 = vmul.f32 %v2269, 0.17677669
        %v2652 = vmul.f32 %v2351, 0.17677669
        %v2653 = vmul.f32 %v2356, 0.17677669
        %v2654 = vmul.f32 %v2361, 0.17677669
        %v2655 = vmul.f32 %v2443, 0.17677669
        %v2656 = vmul.f32 %v2448, 0.17677669
        %v2657 = vmul.f32 %v2453, 0.17677669
        %v2658 = vmul.f32 %v2535, 0.17677669
        %v2659 = vmul.f32 %v2540, 0.17677669
        %v2660 = vmul.f32 %v2545, 0.17677669
        %v2661 = vmul.f32 %v2627, 0.17677669
        %v2662 = vmul.f32 %v2632, 0.17677669
        %v2663 = vmul.f32 %v2637, 0.17677669
        %vm2664 = vcmask 138240
        %v2665 = vsel %vm2664, %v2640, -inf
        %2666 = vmax.xlane.f32.xlu0 %v2665
        %v2667 = vpop.xlane.xlu0 %2666
        %v2668 = vsel %vm2664, %v2641, -inf
        %2669 = vmax.xlane.f32.xlu0 %v2668
        %v2670 = vpop.xlane.xlu0 %2669
        %vm2671 = vcmask 131072
        %v2672 = vsel %vm2671, %v2642, -inf
        %2673 = vmax.xlane.f32.xlu0 %v2672
        %v2674 = vpop.xlane.xlu0 %2673
        %v2675 = vsel %vm2664, %v2643, -inf
        %2676 = vmax.xlane.f32.xlu0 %v2675
        %v2677 = vpop.xlane.xlu0 %2676
        %v2678 = vsel %vm2664, %v2644, -inf
        %2679 = vmax.xlane.f32.xlu0 %v2678
        %v2680 = vpop.xlane.xlu0 %2679
        %v2681 = vsel %vm2671, %v2645, -inf
        %2682 = vmax.xlane.f32.xlu0 %v2681
        %v2683 = vpop.xlane.xlu0 %2682
        %v2684 = vsel %vm2664, %v2646, -inf
        %2685 = vmax.xlane.f32.xlu0 %v2684
        %v2686 = vpop.xlane.xlu0 %2685
        %v2687 = vsel %vm2664, %v2647, -inf
        %2688 = vmax.xlane.f32.xlu0 %v2687
        %v2689 = vpop.xlane.xlu0 %2688
        %v2690 = vsel %vm2671, %v2648, -inf
        %2691 = vmax.xlane.f32.xlu0 %v2690
        %v2692 = vpop.xlane.xlu0 %2691
        %v2693 = vsel %vm2664, %v2649, -inf
        %2694 = vmax.xlane.f32.xlu0 %v2693
        %v2695 = vpop.xlane.xlu0 %2694
        %v2696 = vsel %vm2664, %v2650, -inf
        %2697 = vmax.xlane.f32.xlu0 %v2696
        %v2698 = vpop.xlane.xlu0 %2697
        %v2699 = vsel %vm2671, %v2651, -inf
        %2700 = vmax.xlane.f32.xlu0 %v2699
        %v2701 = vpop.xlane.xlu0 %2700
        %v2702 = vsel %vm2664, %v2652, -inf
        %2703 = vmax.xlane.f32.xlu0 %v2702
        %v2704 = vpop.xlane.xlu0 %2703
        %v2705 = vsel %vm2664, %v2653, -inf
        %2706 = vmax.xlane.f32.xlu0 %v2705
        %v2707 = vpop.xlane.xlu0 %2706
        %v2708 = vsel %vm2671, %v2654, -inf
        %2709 = vmax.xlane.f32.xlu0 %v2708
        %v2710 = vpop.xlane.xlu0 %2709
        %v2711 = vsel %vm2664, %v2655, -inf
        %2712 = vmax.xlane.f32.xlu0 %v2711
        %v2713 = vpop.xlane.xlu0 %2712
        %v2714 = vsel %vm2664, %v2656, -inf
        %2715 = vmax.xlane.f32.xlu0 %v2714
        %v2716 = vpop.xlane.xlu0 %2715
        %v2717 = vsel %vm2671, %v2657, -inf
        %2718 = vmax.xlane.f32.xlu0 %v2717
        %v2719 = vpop.xlane.xlu0 %2718
        %v2720 = vsel %vm2664, %v2658, -inf
        %2721 = vmax.xlane.f32.xlu0 %v2720
        %v2722 = vpop.xlane.xlu0 %2721
        %v2723 = vsel %vm2664, %v2659, -inf
        %2724 = vmax.xlane.f32.xlu0 %v2723
        %v2725 = vpop.xlane.xlu0 %2724
        %v2726 = vsel %vm2671, %v2660, -inf
        %2727 = vmax.xlane.f32.xlu0 %v2726
        %v2728 = vpop.xlane.xlu0 %2727
        %v2729 = vsel %vm2664, %v2661, -inf
        %2730 = vmax.xlane.f32.xlu0 %v2729
        %v2731 = vpop.xlane.xlu0 %2730
        %v2732 = vsel %vm2664, %v2662, -inf
        %2733 = vmax.xlane.f32.xlu0 %v2732
        %v2734 = vpop.xlane.xlu0 %2733
        %v2735 = vsel %vm2671, %v2663, -inf
        %2736 = vmax.xlane.f32.xlu0 %v2735
        %v2737 = vpop.xlane.xlu0 %2736
        %v2738 = vsub.f32 %v2640, %v2667
        %v2739 = vsub.f32 %v2641, %v2670
        %v2740 = vsub.f32 %v2642, %v2674
        %v2741 = vsub.f32 %v2643, %v2677
        %v2742 = vsub.f32 %v2644, %v2680
        %v2743 = vsub.f32 %v2645, %v2683
        %v2744 = vsub.f32 %v2646, %v2686
        %v2745 = vsub.f32 %v2647, %v2689
        %v2746 = vsub.f32 %v2648, %v2692
        %v2747 = vsub.f32 %v2649, %v2695
        %v2748 = vsub.f32 %v2650, %v2698
        %v2749 = vsub.f32 %v2651, %v2701
        %v2750 = vsub.f32 %v2652, %v2704
        %v2751 = vsub.f32 %v2653, %v2707
        %v2752 = vsub.f32 %v2654, %v2710
        %v2753 = vsub.f32 %v2655, %v2713
        %v2754 = vsub.f32 %v2656, %v2716
        %v2755 = vsub.f32 %v2657, %v2719
        %v2756 = vsub.f32 %v2658, %v2722
        %v2757 = vsub.f32 %v2659, %v2725
        %v2758 = vsub.f32 %v2660, %v2728
        %v2759 = vsub.f32 %v2661, %v2731
        %v2760 = vsub.f32 %v2662, %v2734
        %v2761 = vsub.f32 %v2663, %v2737
        %v2762 = vmul.f32 %v2738, 1.442695
        %v2763 = vpow.pop %v2762
        %v2764 = vmul.f32 %v2739, 1.442695
        %v2765 = vpow.pop %v2764
        %v2766 = vmul.f32 %v2740, 1.442695
        %v2767 = vpow.pop %v2766
        %v2768 = vmul.f32 %v2741, 1.442695
        %v2769 = vpow.pop %v2768
        %v2770 = vmul.f32 %v2742, 1.442695
        %v2771 = vpow.pop %v2770
        %v2772 = vmul.f32 %v2743, 1.442695
        %v2773 = vpow.pop %v2772
        %v2774 = vmul.f32 %v2744, 1.442695
        %v2775 = vpow.pop %v2774
        %v2776 = vmul.f32 %v2745, 1.442695
        %v2777 = vpow.pop %v2776
        %v2778 = vmul.f32 %v2746, 1.442695
        %v2779 = vpow.pop %v2778
        %v2780 = vmul.f32 %v2747, 1.442695
        %v2781 = vpow.pop %v2780
        %v2782 = vmul.f32 %v2748, 1.442695
        %v2783 = vpow.pop %v2782
        %v2784 = vmul.f32 %v2749, 1.442695
        %v2785 = vpow.pop %v2784
        %v2786 = vmul.f32 %v2750, 1.442695
        %v2787 = vpow.pop %v2786
        %v2788 = vmul.f32 %v2751, 1.442695
        %v2789 = vpow.pop %v2788
        %v2790 = vmul.f32 %v2752, 1.442695
        %v2791 = vpow.pop %v2790
        %v2792 = vmul.f32 %v2753, 1.442695
        %v2793 = vpow.pop %v2792
        %v2794 = vmul.f32 %v2754, 1.442695
        %v2795 = vpow.pop %v2794
        %v2796 = vmul.f32 %v2755, 1.442695
        %v2797 = vpow.pop %v2796
        %v2798 = vmul.f32 %v2756, 1.442695
        %v2799 = vpow.pop %v2798
        %v2800 = vmul.f32 %v2757, 1.442695
        %v2801 = vpow.pop %v2800
        %v2802 = vmul.f32 %v2758, 1.442695
        %v2803 = vpow.pop %v2802
        %v2804 = vmul.f32 %v2759, 1.442695
        %v2805 = vpow.pop %v2804
        %v2806 = vmul.f32 %v2760, 1.442695
        %v2807 = vpow.pop %v2806
        %v2808 = vmul.f32 %v2761, 1.442695
        %v2809 = vpow.pop %v2808
        %v2810 = vsel %vm2664, %v2763, 0.0
        %2811 = vadd.xlane.f32.xlu0 %v2810
        %v2812 = vpop.xlane.xlu0 %2811
        %v2813 = vsel %vm2664, %v2765, 0.0
        %2814 = vadd.xlane.f32.xlu0 %v2813
        %v2815 = vpop.xlane.xlu0 %2814
        %v2816 = vsel %vm2671, %v2767, 0.0
        %2817 = vadd.xlane.f32.xlu0 %v2816
        %v2818 = vpop.xlane.xlu0 %2817
        %v2819 = vsel %vm2664, %v2769, 0.0
        %2820 = vadd.xlane.f32.xlu0 %v2819
        %v2821 = vpop.xlane.xlu0 %2820
        %v2822 = vsel %vm2664, %v2771, 0.0
        %2823 = vadd.xlane.f32.xlu0 %v2822
        %v2824 = vpop.xlane.xlu0 %2823
        %v2825 = vsel %vm2671, %v2773, 0.0
        %2826 = vadd.xlane.f32.xlu0 %v2825
        %v2827 = vpop.xlane.xlu0 %2826
        %v2828 = vsel %vm2664, %v2775, 0.0
        %2829 = vadd.xlane.f32.xlu0 %v2828
        %v2830 = vpop.xlane.xlu0 %2829
        %v2831 = vsel %vm2664, %v2777, 0.0
        %2832 = vadd.xlane.f32.xlu0 %v2831
        %v2833 = vpop.xlane.xlu0 %2832
        %v2834 = vsel %vm2671, %v2779, 0.0
        %2835 = vadd.xlane.f32.xlu0 %v2834
        %v2836 = vpop.xlane.xlu0 %2835
        %v2837 = vsel %vm2664, %v2781, 0.0
        %2838 = vadd.xlane.f32.xlu0 %v2837
        %v2839 = vpop.xlane.xlu0 %2838
        %v2840 = vsel %vm2664, %v2783, 0.0
        %2841 = vadd.xlane.f32.xlu0 %v2840
        %v2842 = vpop.xlane.xlu0 %2841
        %v2843 = vsel %vm2671, %v2785, 0.0
        %2844 = vadd.xlane.f32.xlu0 %v2843
        %v2845 = vpop.xlane.xlu0 %2844
        %v2846 = vsel %vm2664, %v2787, 0.0
        %2847 = vadd.xlane.f32.xlu0 %v2846
        %v2848 = vpop.xlane.xlu0 %2847
        %v2849 = vsel %vm2664, %v2789, 0.0
        %2850 = vadd.xlane.f32.xlu0 %v2849
        %v2851 = vpop.xlane.xlu0 %2850
        %v2852 = vsel %vm2671, %v2791, 0.0
        %2853 = vadd.xlane.f32.xlu0 %v2852
        %v2854 = vpop.xlane.xlu0 %2853
        %v2855 = vsel %vm2664, %v2793, 0.0
        %2856 = vadd.xlane.f32.xlu0 %v2855
        %v2857 = vpop.xlane.xlu0 %2856
        %v2858 = vsel %vm2664, %v2795, 0.0
        %2859 = vadd.xlane.f32.xlu0 %v2858
        %v2860 = vpop.xlane.xlu0 %2859
        %v2861 = vsel %vm2671, %v2797, 0.0
        %2862 = vadd.xlane.f32.xlu0 %v2861
        %v2863 = vpop.xlane.xlu0 %2862
        %v2864 = vsel %vm2664, %v2799, 0.0
        %2865 = vadd.xlane.f32.xlu0 %v2864
        %v2866 = vpop.xlane.xlu0 %2865
        %v2867 = vsel %vm2664, %v2801, 0.0
        %2868 = vadd.xlane.f32.xlu0 %v2867
        %v2869 = vpop.xlane.xlu0 %2868
        %v2870 = vsel %vm2671, %v2803, 0.0
        %2871 = vadd.xlane.f32.xlu0 %v2870
        %v2872 = vpop.xlane.xlu0 %2871
        %v2873 = vsel %vm2664, %v2805, 0.0
        %2874 = vadd.xlane.f32.xlu0 %v2873
        %v2875 = vpop.xlane.xlu0 %2874
        %v2876 = vsel %vm2664, %v2807, 0.0
        %2877 = vadd.xlane.f32.xlu0 %v2876
        %v2878 = vpop.xlane.xlu0 %2877
        %v2879 = vsel %vm2671, %v2809, 0.0
        %2880 = vadd.xlane.f32.xlu0 %v2879
        %v2881 = vpop.xlane.xlu0 %2880
        %v2882 = vrcp.pop %v2812
        %v2883 = vrcp.pop %v2815
        %v2884 = vrcp.pop %v2818
        %v2885 = vrcp.pop %v2821
        %v2886 = vrcp.pop %v2824
        %v2887 = vrcp.pop %v2827
        %v2888 = vrcp.pop %v2830
        %v2889 = vrcp.pop %v2833
        %v2890 = vrcp.pop %v2836
        %v2891 = vrcp.pop %v2839
        %v2892 = vrcp.pop %v2842
        %v2893 = vrcp.pop %v2845
        %v2894 = vrcp.pop %v2848
        %v2895 = vrcp.pop %v2851
        %v2896 = vrcp.pop %v2854
        %v2897 = vrcp.pop %v2857
        %v2898 = vrcp.pop %v2860
        %v2899 = vrcp.pop %v2863
        %v2900 = vrcp.pop %v2866
        %v2901 = vrcp.pop %v2869
        %v2902 = vrcp.pop %v2872
        %v2903 = vrcp.pop %v2875
        %v2904 = vrcp.pop %v2878
        %v2905 = vrcp.pop %v2881
        %v2906 = vmul.f32 %v2763, %v2882
        %v2907 = vmul.f32 %v2765, %v2883
        %v2908 = vmul.f32 %v2767, %v2884
        %v2909 = vmul.f32 %v2769, %v2885
        %v2910 = vmul.f32 %v2771, %v2886
        %v2911 = vmul.f32 %v2773, %v2887
        %v2912 = vmul.f32 %v2775, %v2888
        %v2913 = vmul.f32 %v2777, %v2889
        %v2914 = vmul.f32 %v2779, %v2890
        %v2915 = vmul.f32 %v2781, %v2891
        %v2916 = vmul.f32 %v2783, %v2892
        %v2917 = vmul.f32 %v2785, %v2893
        %v2918 = vmul.f32 %v2787, %v2894
        %v2919 = vmul.f32 %v2789, %v2895
        %v2920 = vmul.f32 %v2791, %v2896
        %v2921 = vmul.f32 %v2793, %v2897
        %v2922 = vmul.f32 %v2795, %v2898
        %v2923 = vmul.f32 %v2797, %v2899
        %v2924 = vmul.f32 %v2799, %v2900
        %v2925 = vmul.f32 %v2801, %v2901
        %v2926 = vmul.f32 %v2803, %v2902
        %v2927 = vmul.f32 %v2805, %v2903
        %v2928 = vmul.f32 %v2807, %v2904
        %v2929 = vmul.f32 %v2809, %v2905
        %v2931 = vsel %vm2664, %v2906, 0
        %v2934 = vsel %vm2664, %v2907, 0
        %v2937 = vsel %vm2664, %v2908, 0
        %vm2939 = vcmask 1040384
        %v2940 = vsel %vm2939, %v1737, 0
        %2942 = vmatprep.subr.mxu0 0.0
        %2943 = vmatpush1.msra.mxu0 %v1729
        %2944 = vmatprep.subr.mxu0 0.0
        %2945 = vmatpush1.msra.mxu0 %v1732
        %2946 = vmatprep.subr.mxu0 0.0
        %2947 = vmatpush1.msra.mxu0 %v2940
        %2948 = vmatprep.subr.mxu0 0.0
        %2949 = vmatpush1.msra.mxu0 0.0
        %2950 = vmatprep.subr.mxu0 0.0
        %2951 = vmatpush1.msra.mxu0 0.0
        %2952 = vmatprep.subr.mxu0 0.0
        %2953 = vmatpush1.msra.mxu0 0.0
        %2954 = vmatprep.subr.mxu0 0.0
        %2955 = vmatpush1.msra.mxu0 0.0
        %2956 = vmatprep.subr.mxu0 0.0
        %2957 = vmatpush1.msra.mxu0 0.0
        %2958 = vmatprep.subr.mxu0 0.0
        %2959 = vmatpush1.msra.mxu0 0.0
        %2960 = vmatprep.subr.mxu0 0.0
        %2961 = vmatpush1.msra.mxu0 0.0
        %2962 = vmatprep.subr.mxu0 0.0
        %2963 = vmatpush1.msra.mxu0 0.0
        %2964 = vmatprep.subr.mxu0 0.0
        %2965 = vmatpush1.msra.mxu0 0.0
        %2966 = vmatprep.subr.mxu0 0.0
        %2967 = vmatpush1.msra.mxu0 0.0
        %2968 = vmatprep.subr.mxu0 0.0
        %2969 = vmatpush1.msra.mxu0 0.0
        %2970 = vmatprep.subr.mxu0 0.0
        %2971 = vmatpush1.msra.mxu0 0.0
        %2972 = vmatprep.subr.mxu0 0.0
        %2973 = vmatpush1.msra.mxu0 0.0
        %2974 = vmatprep.subr.mxu0 0.0
        %2975 = vmatpush1.msra.mxu0 0.0
        %2976 = vmatprep.subr.mxu0 0.0
        %2977 = vmatpush1.msra.mxu0 0.0
        %2978 = vmatprep.subr.mxu0 0.0
        %2979 = vmatpush1.msra.mxu0 0.0
        %2980 = vmatprep.subr.mxu0 0.0
        %2981 = vmatpush1.msra.mxu0 0.0
        %2982 = vmatprep.subr.mxu0 0.0
        %2983 = vmatpush1.msra.mxu0 0.0
        %2984 = vmatprep.subr.mxu0 0.0
        %2985 = vmatpush1.msra.mxu0 0.0
        %2986 = vmatprep.subr.mxu0 0.0
        %2987 = vmatpush1.msra.mxu0 0.0
        %2988 = vmatprep.subr.mxu0 0.0
        %2989 = vmatpush1.msra.mxu0 0.0
        %2990 = vmatprep.subr.mxu0 0.0
        %2991 = vmatpush1.msra.mxu0 0.0
        %2992 = vmatprep.subr.mxu0 0.0
        %2993 = vmatpush1.msra.mxu0 0.0
        %2994 = vmatprep.subr.mxu0 0.0
        %2995 = vmatpush1.msra.mxu0 0.0
        %2996 = vmatprep.subr.mxu0 0.0
        %2997 = vmatpush1.msra.mxu0 0.0
        %2998 = vmatprep.subr.mxu0 0.0
        %2999 = vmatpush1.msra.mxu0 0.0
        %3000 = vmatprep.subr.mxu0 0.0
        %3001 = vmatpush1.msra.mxu0 0.0
        %3002 = vmatprep.subr.mxu0 0.0
        %3003 = vmatpush1.msra.mxu0 0.0
        %3004 = vmatprep.subr.mxu0 0.0
        %3005 = vmatpush1.msra.mxu0 0.0
        %3006 = vmatprep.mubr.f32.mxu0 0.0
        %3007 = vmatmul.mubr.f32.gmra.mrb[0].mxu0 %v2931
        %v3008 = vpop.f32.mrb[0].mxu0
        %v3009 = vadd.f32 0.0, %v3008
        %v3010 = vpop.f32.mrb[0].mxu0
        %3011 = vmatprep.mubr.f32.mxu0 0.0
        %3012 = vmatmul.mubr.f32.gmra.mrb[0].mxu0 %v2934
        %v3013 = vpop.f32.mrb[0].mxu0
        %v3014 = vadd.f32 0.0, %v3013
        %v3015 = vpop.f32.mrb[0].mxu0
        %3016 = vmatprep.mubr.f32.mxu0 0.0
        %3017 = vmatmul.mubr.f32.gmra.mrb[0].mxu0 %v2937
        %v3018 = vpop.f32.mrb[0].mxu0
        %v3019 = vadd.f32 0.0, %v3018
        %v3020 = vpop.f32.mrb[0].mxu0
        %3021 = vdwg.mxu0
        %v3023 = vsel %vm2664, %v2909, 0
        %v3026 = vsel %vm2664, %v2910, 0
        %v3029 = vsel %vm2664, %v2911, 0
        %v3031 = vsel %vm2939, %v1851, 0
        %3033 = vmatprep.subr.mxu0 0.0
        %3034 = vmatpush1.msra.mxu0 %v1847
        %3035 = vmatprep.subr.mxu0 0.0
        %3036 = vmatpush1.msra.mxu0 %v1849
        %3037 = vmatprep.subr.mxu0 0.0
        %3038 = vmatpush1.msra.mxu0 %v3031
        %3039 = vmatprep.subr.mxu0 0.0
        %3040 = vmatpush1.msra.mxu0 0.0
        %3041 = vmatprep.subr.mxu0 0.0
        %3042 = vmatpush1.msra.mxu0 0.0
        %3043 = vmatprep.subr.mxu0 0.0
        %3044 = vmatpush1.msra.mxu0 0.0
        %3045 = vmatprep.subr.mxu0 0.0
        %3046 = vmatpush1.msra.mxu0 0.0
        %3047 = vmatprep.subr.mxu0 0.0
        %3048 = vmatpush1.msra.mxu0 0.0
        %3049 = vmatprep.subr.mxu0 0.0
        %3050 = vmatpush1.msra.mxu0 0.0
        %3051 = vmatprep.subr.mxu0 0.0
        %3052 = vmatpush1.msra.mxu0 0.0
        %3053 = vmatprep.subr.mxu0 0.0
        %3054 = vmatpush1.msra.mxu0 0.0
        %3055 = vmatprep.subr.mxu0 0.0
        %3056 = vmatpush1.msra.mxu0 0.0
        %3057 = vmatprep.subr.mxu0 0.0
        %3058 = vmatpush1.msra.mxu0 0.0
        %3059 = vmatprep.subr.mxu0 0.0
        %3060 = vmatpush1.msra.mxu0 0.0
        %3061 = vmatprep.subr.mxu0 0.0
        %3062 = vmatpush1.msra.mxu0 0.0
        %3063 = vmatprep.subr.mxu0 0.0
        %3064 = vmatpush1.msra.mxu0 0.0
        %3065 = vmatprep.subr.mxu0 0.0
        %3066 = vmatpush1.msra.mxu0 0.0
        %3067 = vmatprep.subr.mxu0 0.0
        %3068 = vmatpush1.msra.mxu0 0.0
        %3069 = vmatprep.subr.mxu0 0.0
        %3070 = vmatpush1.msra.mxu0 0.0
        %3071 = vmatprep.subr.mxu0 0.0
        %3072 = vmatpush1.msra.mxu0 0.0
        %3073 = vmatprep.subr.mxu0 0.0
        %3074 = vmatpush1.msra.mxu0 0.0
        %3075 = vmatprep.subr.mxu0 0.0
        %3076 = vmatpush1.msra.mxu0 0.0
        %3077 = vmatprep.subr.mxu0 0.0
        %3078 = vmatpush1.msra.mxu0 0.0
        %3079 = vmatprep.subr.mxu0 0.0
        %3080 = vmatpush1.msra.mxu0 0.0
        %3081 = vmatprep.subr.mxu0 0.0
        %3082 = vmatpush1.msra.mxu0 0.0
        %3083 = vmatprep.subr.mxu0 0.0
        %3084 = vmatpush1.msra.mxu0 0.0
        %3085 = vmatprep.subr.mxu0 0.0
        %3086 = vmatpush1.msra.mxu0 0.0
        %3087 = vmatprep.subr.mxu0 0.0
        %3088 = vmatpush1.msra.mxu0 0.0
        %3089 = vmatprep.subr.mxu0 0.0
        %3090 = vmatpush1.msra.mxu0 0.0
        %3091 = vmatprep.subr.mxu0 0.0
        %3092 = vmatpush1.msra.mxu0 0.0
        %3093 = vmatprep.subr.mxu0 0.0
        %3094 = vmatpush1.msra.mxu0 0.0
        %3095 = vmatprep.subr.mxu0 0.0
        %3096 = vmatpush1.msra.mxu0 0.0
        %3097 = vmatprep.mubr.f32.mxu0 0.0
        %3098 = vmatmul.mubr.f32.gmra.mrb[0].mxu0 %v3023
        %v3099 = vpop.f32.mrb[0].mxu0
        %v3100 = vadd.f32 0.0, %v3099
        %v3101 = vpop.f32.mrb[0].mxu0
        %3102 = vmatprep.mubr.f32.mxu0 0.0
        %3103 = vmatmul.mubr.f32.gmra.mrb[0].mxu0 %v3026
        %v3104 = vpop.f32.mrb[0].mxu0
        %v3105 = vadd.f32 0.0, %v3104
        %v3106 = vpop.f32.mrb[0].mxu0
        %3107 = vmatprep.mubr.f32.mxu0 0.0
        %3108 = vmatmul.mubr.f32.gmra.mrb[0].mxu0 %v3029
        %v3109 = vpop.f32.mrb[0].mxu0
        %v3110 = vadd.f32 0.0, %v3109
        %v3111 = vpop.f32.mrb[0].mxu0
        %3112 = vdwg.mxu0
        %v3114 = vsel %vm2664, %v2912, 0
        %v3117 = vsel %vm2664, %v2913, 0
        %v3120 = vsel %vm2664, %v2914, 0
        %v3122 = vsel %vm2939, %v1859, 0
        %3124 = vmatprep.subr.mxu0 0.0
        %3125 = vmatpush1.msra.mxu0 %v1855
        %3126 = vmatprep.subr.mxu0 0.0
        %3127 = vmatpush1.msra.mxu0 %v1857
        %3128 = vmatprep.subr.mxu0 0.0
        %3129 = vmatpush1.msra.mxu0 %v3122
        %3130 = vmatprep.subr.mxu0 0.0
        %3131 = vmatpush1.msra.mxu0 0.0
        %3132 = vmatprep.subr.mxu0 0.0
        %3133 = vmatpush1.msra.mxu0 0.0
        %3134 = vmatprep.subr.mxu0 0.0
        %3135 = vmatpush1.msra.mxu0 0.0
        %3136 = vmatprep.subr.mxu0 0.0
        %3137 = vmatpush1.msra.mxu0 0.0
        %3138 = vmatprep.subr.mxu0 0.0
        %3139 = vmatpush1.msra.mxu0 0.0
        %3140 = vmatprep.subr.mxu0 0.0
        %3141 = vmatpush1.msra.mxu0 0.0
        %3142 = vmatprep.subr.mxu0 0.0
        %3143 = vmatpush1.msra.mxu0 0.0
        %3144 = vmatprep.subr.mxu0 0.0
        %3145 = vmatpush1.msra.mxu0 0.0
        %3146 = vmatprep.subr.mxu0 0.0
        %3147 = vmatpush1.msra.mxu0 0.0
        %3148 = vmatprep.subr.mxu0 0.0
        %3149 = vmatpush1.msra.mxu0 0.0
        %3150 = vmatprep.subr.mxu0 0.0
        %3151 = vmatpush1.msra.mxu0 0.0
        %3152 = vmatprep.subr.mxu0 0.0
        %3153 = vmatpush1.msra.mxu0 0.0
        %3154 = vmatprep.subr.mxu0 0.0
        %3155 = vmatpush1.msra.mxu0 0.0
        %3156 = vmatprep.subr.mxu0 0.0
        %3157 = vmatpush1.msra.mxu0 0.0
        %3158 = vmatprep.subr.mxu0 0.0
        %3159 = vmatpush1.msra.mxu0 0.0
        %3160 = vmatprep.subr.mxu0 0.0
        %3161 = vmatpush1.msra.mxu0 0.0
        %3162 = vmatprep.subr.mxu0 0.0
        %3163 = vmatpush1.msra.mxu0 0.0
        %3164 = vmatprep.subr.mxu0 0.0
        %3165 = vmatpush1.msra.mxu0 0.0
        %3166 = vmatprep.subr.mxu0 0.0
        %3167 = vmatpush1.msra.mxu0 0.0
        %3168 = vmatprep.subr.mxu0 0.0
        %3169 = vmatpush1.msra.mxu0 0.0
        %3170 = vmatprep.subr.mxu0 0.0
        %3171 = vmatpush1.msra.mxu0 0.0
        %3172 = vmatprep.subr.mxu0 0.0
        %3173 = vmatpush1.msra.mxu0 0.0
        %3174 = vmatprep.subr.mxu0 0.0
        %3175 = vmatpush1.msra.mxu0 0.0
        %3176 = vmatprep.subr.mxu0 0.0
        %3177 = vmatpush1.msra.mxu0 0.0
        %3178 = vmatprep.subr.mxu0 0.0
        %3179 = vmatpush1.msra.mxu0 0.0
        %3180 = vmatprep.subr.mxu0 0.0
        %3181 = vmatpush1.msra.mxu0 0.0
        %3182 = vmatprep.subr.mxu0 0.0
        %3183 = vmatpush1.msra.mxu0 0.0
        %3184 = vmatprep.subr.mxu0 0.0
        %3185 = vmatpush1.msra.mxu0 0.0
        %3186 = vmatprep.subr.mxu0 0.0
        %3187 = vmatpush1.msra.mxu0 0.0
        %3188 = vmatprep.mubr.f32.mxu0 0.0
        %3189 = vmatmul.mubr.f32.gmra.mrb[0].mxu0 %v3114
        %v3190 = vpop.f32.mrb[0].mxu0
        %v3191 = vadd.f32 0.0, %v3190
        %v3192 = vpop.f32.mrb[0].mxu0
        %3193 = vmatprep.mubr.f32.mxu0 0.0
        %3194 = vmatmul.mubr.f32.gmra.mrb[0].mxu0 %v3117
        %v3195 = vpop.f32.mrb[0].mxu0
        %v3196 = vadd.f32 0.0, %v3195
        %v3197 = vpop.f32.mrb[0].mxu0
        %3198 = vmatprep.mubr.f32.mxu0 0.0
        %3199 = vmatmul.mubr.f32.gmra.mrb[0].mxu0 %v3120
        %v3200 = vpop.f32.mrb[0].mxu0
        %v3201 = vadd.f32 0.0, %v3200
        %v3202 = vpop.f32.mrb[0].mxu0
        %3203 = vdwg.mxu0
        %v3205 = vsel %vm2664, %v2915, 0
        %v3208 = vsel %vm2664, %v2916, 0
        %v3211 = vsel %vm2664, %v2917, 0
        %v3213 = vsel %vm2939, %v1867, 0
        %3215 = vmatprep.subr.mxu0 0.0
        %3216 = vmatpush1.msra.mxu0 %v1863
        %3217 = vmatprep.subr.mxu0 0.0
        %3218 = vmatpush1.msra.mxu0 %v1865
        %3219 = vmatprep.subr.mxu0 0.0
        %3220 = vmatpush1.msra.mxu0 %v3213
        %3221 = vmatprep.subr.mxu0 0.0
        %3222 = vmatpush1.msra.mxu0 0.0
        %3223 = vmatprep.subr.mxu0 0.0
        %3224 = vmatpush1.msra.mxu0 0.0
        %3225 = vmatprep.subr.mxu0 0.0
        %3226 = vmatpush1.msra.mxu0 0.0
        %3227 = vmatprep.subr.mxu0 0.0
        %3228 = vmatpush1.msra.mxu0 0.0
        %3229 = vmatprep.subr.mxu0 0.0
        %3230 = vmatpush1.msra.mxu0 0.0
        %3231 = vmatprep.subr.mxu0 0.0
        %3232 = vmatpush1.msra.mxu0 0.0
        %3233 = vmatprep.subr.mxu0 0.0
        %3234 = vmatpush1.msra.mxu0 0.0
        %3235 = vmatprep.subr.mxu0 0.0
        %3236 = vmatpush1.msra.mxu0 0.0
        %3237 = vmatprep.subr.mxu0 0.0
        %3238 = vmatpush1.msra.mxu0 0.0
        %3239 = vmatprep.subr.mxu0 0.0
        %3240 = vmatpush1.msra.mxu0 0.0
        %3241 = vmatprep.subr.mxu0 0.0
        %3242 = vmatpush1.msra.mxu0 0.0
        %3243 = vmatprep.subr.mxu0 0.0
        %3244 = vmatpush1.msra.mxu0 0.0
        %3245 = vmatprep.subr.mxu0 0.0
        %3246 = vmatpush1.msra.mxu0 0.0
        %3247 = vmatprep.subr.mxu0 0.0
        %3248 = vmatpush1.msra.mxu0 0.0
        %3249 = vmatprep.subr.mxu0 0.0
        %3250 = vmatpush1.msra.mxu0 0.0
        %3251 = vmatprep.subr.mxu0 0.0
        %3252 = vmatpush1.msra.mxu0 0.0
        %3253 = vmatprep.subr.mxu0 0.0
        %3254 = vmatpush1.msra.mxu0 0.0
        %3255 = vmatprep.subr.mxu0 0.0
        %3256 = vmatpush1.msra.mxu0 0.0
        %3257 = vmatprep.subr.mxu0 0.0
        %3258 = vmatpush1.msra.mxu0 0.0
        %3259 = vmatprep.subr.mxu0 0.0
        %3260 = vmatpush1.msra.mxu0 0.0
        %3261 = vmatprep.subr.mxu0 0.0
        %3262 = vmatpush1.msra.mxu0 0.0
        %3263 = vmatprep.subr.mxu0 0.0
        %3264 = vmatpush1.msra.mxu0 0.0
        %3265 = vmatprep.subr.mxu0 0.0
        %3266 = vmatpush1.msra.mxu0 0.0
        %3267 = vmatprep.subr.mxu0 0.0
        %3268 = vmatpush1.msra.mxu0 0.0
        %3269 = vmatprep.subr.mxu0 0.0
        %3270 = vmatpush1.msra.mxu0 0.0
        %3271 = vmatprep.subr.mxu0 0.0
        %3272 = vmatpush1.msra.mxu0 0.0
        %3273 = vmatprep.subr.mxu0 0.0
        %3274 = vmatpush1.msra.mxu0 0.0
        %3275 = vmatprep.subr.mxu0 0.0
        %3276 = vmatpush1.msra.mxu0 0.0
        %3277 = vmatprep.subr.mxu0 0.0
        %3278 = vmatpush1.msra.mxu0 0.0
        %3279 = vmatprep.mubr.f32.mxu0 0.0
        %3280 = vmatmul.mubr.f32.gmra.mrb[0].mxu0 %v3205
        %v3281 = vpop.f32.mrb[0].mxu0
        %v3282 = vadd.f32 0.0, %v3281
        %v3283 = vpop.f32.mrb[0].mxu0
        %3284 = vmatprep.mubr.f32.mxu0 0.0
        %3285 = vmatmul.mubr.f32.gmra.mrb[0].mxu0 %v3208
        %v3286 = vpop.f32.mrb[0].mxu0
        %v3287 = vadd.f32 0.0, %v3286
        %v3288 = vpop.f32.mrb[0].mxu0
        %3289 = vmatprep.mubr.f32.mxu0 0.0
        %3290 = vmatmul.mubr.f32.gmra.mrb[0].mxu0 %v3211
        %v3291 = vpop.f32.mrb[0].mxu0
        %v3292 = vadd.f32 0.0, %v3291
        %v3293 = vpop.f32.mrb[0].mxu0
        %3294 = vdwg.mxu0
        %v3296 = vsel %vm2664, %v2918, 0
        %v3299 = vsel %vm2664, %v2919, 0
        %v3302 = vsel %vm2664, %v2920, 0
        %v3304 = vsel %vm2939, %v1875, 0
        %3306 = vmatprep.subr.mxu0 0.0
        %3307 = vmatpush1.msra.mxu0 %v1874
        %3308 = vmatprep.subr.mxu0 0.0
        %3309 = vmatpush1.msra.mxu0 %v1876
        %3310 = vmatprep.subr.mxu0 0.0
        %3311 = vmatpush1.msra.mxu0 %v3304
        %3312 = vmatprep.subr.mxu0 0.0
        %3313 = vmatpush1.msra.mxu0 0.0
        %3314 = vmatprep.subr.mxu0 0.0
        %3315 = vmatpush1.msra.mxu0 0.0
        %3316 = vmatprep.subr.mxu0 0.0
        %3317 = vmatpush1.msra.mxu0 0.0
        %3318 = vmatprep.subr.mxu0 0.0
        %3319 = vmatpush1.msra.mxu0 0.0
        %3320 = vmatprep.subr.mxu0 0.0
        %3321 = vmatpush1.msra.mxu0 0.0
        %3322 = vmatprep.subr.mxu0 0.0
        %3323 = vmatpush1.msra.mxu0 0.0
        %3324 = vmatprep.subr.mxu0 0.0
        %3325 = vmatpush1.msra.mxu0 0.0
        %3326 = vmatprep.subr.mxu0 0.0
        %3327 = vmatpush1.msra.mxu0 0.0
        %3328 = vmatprep.subr.mxu0 0.0
        %3329 = vmatpush1.msra.mxu0 0.0
        %3330 = vmatprep.subr.mxu0 0.0
        %3331 = vmatpush1.msra.mxu0 0.0
        %3332 = vmatprep.subr.mxu0 0.0
        %3333 = vmatpush1.msra.mxu0 0.0
        %3334 = vmatprep.subr.mxu0 0.0
        %3335 = vmatpush1.msra.mxu0 0.0
        %3336 = vmatprep.subr.mxu0 0.0
        %3337 = vmatpush1.msra.mxu0 0.0
        %3338 = vmatprep.subr.mxu0 0.0
        %3339 = vmatpush1.msra.mxu0 0.0
        %3340 = vmatprep.subr.mxu0 0.0
        %3341 = vmatpush1.msra.mxu0 0.0
        %3342 = vmatprep.subr.mxu0 0.0
        %3343 = vmatpush1.msra.mxu0 0.0
        %3344 = vmatprep.subr.mxu0 0.0
        %3345 = vmatpush1.msra.mxu0 0.0
        %3346 = vmatprep.subr.mxu0 0.0
        %3347 = vmatpush1.msra.mxu0 0.0
        %3348 = vmatprep.subr.mxu0 0.0
        %3349 = vmatpush1.msra.mxu0 0.0
        %3350 = vmatprep.subr.mxu0 0.0
        %3351 = vmatpush1.msra.mxu0 0.0
        %3352 = vmatprep.subr.mxu0 0.0
        %3353 = vmatpush1.msra.mxu0 0.0
        %3354 = vmatprep.subr.mxu0 0.0
        %3355 = vmatpush1.msra.mxu0 0.0
        %3356 = vmatprep.subr.mxu0 0.0
        %3357 = vmatpush1.msra.mxu0 0.0
        %3358 = vmatprep.subr.mxu0 0.0
        %3359 = vmatpush1.msra.mxu0 0.0
        %3360 = vmatprep.subr.mxu0 0.0
        %3361 = vmatpush1.msra.mxu0 0.0
        %3362 = vmatprep.subr.mxu0 0.0
        %3363 = vmatpush1.msra.mxu0 0.0
        %3364 = vmatprep.subr.mxu0 0.0
        %3365 = vmatpush1.msra.mxu0 0.0
        %3366 = vmatprep.subr.mxu0 0.0
        %3367 = vmatpush1.msra.mxu0 0.0
        %3368 = vmatprep.subr.mxu0 0.0
        %3369 = vmatpush1.msra.mxu0 0.0
        %3370 = vmatprep.mubr.f32.mxu0 0.0
        %3371 = vmatmul.mubr.f32.gmra.mrb[0].mxu0 %v3296
        %v3372 = vpop.f32.mrb[0].mxu0
        %v3373 = vadd.f32 0.0, %v3372
        %v3374 = vpop.f32.mrb[0].mxu0
        %3375 = vmatprep.mubr.f32.mxu0 0.0
        %3376 = vmatmul.mubr.f32.gmra.mrb[0].mxu0 %v3299
        %v3377 = vpop.f32.mrb[0].mxu0
        %v3378 = vadd.f32 0.0, %v3377
        %v3379 = vpop.f32.mrb[0].mxu0
        %3380 = vmatprep.mubr.f32.mxu0 0.0
        %3381 = vmatmul.mubr.f32.gmra.mrb[0].mxu0 %v3302
        %v3382 = vpop.f32.mrb[0].mxu0
        %v3383 = vadd.f32 0.0, %v3382
        %v3384 = vpop.f32.mrb[0].mxu0
        %3385 = vdwg.mxu0
        %v3387 = vsel %vm2664, %v2921, 0
        %v3390 = vsel %vm2664, %v2922, 0
        %v3393 = vsel %vm2664, %v2923, 0
        %v3395 = vsel %vm2939, %v1884, 0
        %3397 = vmatprep.subr.mxu0 0.0
        %3398 = vmatpush1.msra.mxu0 %v1880
        %3399 = vmatprep.subr.mxu0 0.0
        %3400 = vmatpush1.msra.mxu0 %v1882
        %3401 = vmatprep.subr.mxu0 0.0
        %3402 = vmatpush1.msra.mxu0 %v3395
        %3403 = vmatprep.subr.mxu0 0.0
        %3404 = vmatpush1.msra.mxu0 0.0
        %3405 = vmatprep.subr.mxu0 0.0
        %3406 = vmatpush1.msra.mxu0 0.0
        %3407 = vmatprep.subr.mxu0 0.0
        %3408 = vmatpush1.msra.mxu0 0.0
        %3409 = vmatprep.subr.mxu0 0.0
        %3410 = vmatpush1.msra.mxu0 0.0
        %3411 = vmatprep.subr.mxu0 0.0
        %3412 = vmatpush1.msra.mxu0 0.0
        %3413 = vmatprep.subr.mxu0 0.0
        %3414 = vmatpush1.msra.mxu0 0.0
        %3415 = vmatprep.subr.mxu0 0.0
        %3416 = vmatpush1.msra.mxu0 0.0
        %3417 = vmatprep.subr.mxu0 0.0
        %3418 = vmatpush1.msra.mxu0 0.0
        %3419 = vmatprep.subr.mxu0 0.0
        %3420 = vmatpush1.msra.mxu0 0.0
        %3421 = vmatprep.subr.mxu0 0.0
        %3422 = vmatpush1.msra.mxu0 0.0
        %3423 = vmatprep.subr.mxu0 0.0
        %3424 = vmatpush1.msra.mxu0 0.0
        %3425 = vmatprep.subr.mxu0 0.0
        %3426 = vmatpush1.msra.mxu0 0.0
        %3427 = vmatprep.subr.mxu0 0.0
        %3428 = vmatpush1.msra.mxu0 0.0
        %3429 = vmatprep.subr.mxu0 0.0
        %3430 = vmatpush1.msra.mxu0 0.0
        %3431 = vmatprep.subr.mxu0 0.0
        %3432 = vmatpush1.msra.mxu0 0.0
        %3433 = vmatprep.subr.mxu0 0.0
        %3434 = vmatpush1.msra.mxu0 0.0
        %3435 = vmatprep.subr.mxu0 0.0
        %3436 = vmatpush1.msra.mxu0 0.0
        %3437 = vmatprep.subr.mxu0 0.0
        %3438 = vmatpush1.msra.mxu0 0.0
        %3439 = vmatprep.subr.mxu0 0.0
        %3440 = vmatpush1.msra.mxu0 0.0
        %3441 = vmatprep.subr.mxu0 0.0
        %3442 = vmatpush1.msra.mxu0 0.0
        %3443 = vmatprep.subr.mxu0 0.0
        %3444 = vmatpush1.msra.mxu0 0.0
        %3445 = vmatprep.subr.mxu0 0.0
        %3446 = vmatpush1.msra.mxu0 0.0
        %3447 = vmatprep.subr.mxu0 0.0
        %3448 = vmatpush1.msra.mxu0 0.0
        %3449 = vmatprep.subr.mxu0 0.0
        %3450 = vmatpush1.msra.mxu0 0.0
        %3451 = vmatprep.subr.mxu0 0.0
        %3452 = vmatpush1.msra.mxu0 0.0
        %3453 = vmatprep.subr.mxu0 0.0
        %3454 = vmatpush1.msra.mxu0 0.0
        %3455 = vmatprep.subr.mxu0 0.0
        %3456 = vmatpush1.msra.mxu0 0.0
        %3457 = vmatprep.subr.mxu0 0.0
        %3458 = vmatpush1.msra.mxu0 0.0
        %3459 = vmatprep.subr.mxu0 0.0
        %3460 = vmatpush1.msra.mxu0 0.0
        %3461 = vmatprep.mubr.f32.mxu0 0.0
        %3462 = vmatmul.mubr.f32.gmra.mrb[0].mxu0 %v3387
        %v3463 = vpop.f32.mrb[0].mxu0
        %v3464 = vadd.f32 0.0, %v3463
        %v3465 = vpop.f32.mrb[0].mxu0
        %3466 = vmatprep.mubr.f32.mxu0 0.0
        %3467 = vmatmul.mubr.f32.gmra.mrb[0].mxu0 %v3390
        %v3468 = vpop.f32.mrb[0].mxu0
        %v3469 = vadd.f32 0.0, %v3468
        %v3470 = vpop.f32.mrb[0].mxu0
        %3471 = vmatprep.mubr.f32.mxu0 0.0
        %3472 = vmatmul.mubr.f32.gmra.mrb[0].mxu0 %v3393
        %v3473 = vpop.f32.mrb[0].mxu0
        %v3474 = vadd.f32 0.0, %v3473
        %v3475 = vpop.f32.mrb[0].mxu0
        %3476 = vdwg.mxu0
        %v3478 = vsel %vm2664, %v2924, 0
        %v3481 = vsel %vm2664, %v2925, 0
        %v3484 = vsel %vm2664, %v2926, 0
        %v3486 = vsel %vm2939, %v1892, 0
        %3488 = vmatprep.subr.mxu0 0.0
        %3489 = vmatpush1.msra.mxu0 %v1888
        %3490 = vmatprep.subr.mxu0 0.0
        %3491 = vmatpush1.msra.mxu0 %v1890
        %3492 = vmatprep.subr.mxu0 0.0
        %3493 = vmatpush1.msra.mxu0 %v3486
        %3494 = vmatprep.subr.mxu0 0.0
        %3495 = vmatpush1.msra.mxu0 0.0
        %3496 = vmatprep.subr.mxu0 0.0
        %3497 = vmatpush1.msra.mxu0 0.0
        %3498 = vmatprep.subr.mxu0 0.0
        %3499 = vmatpush1.msra.mxu0 0.0
        %3500 = vmatprep.subr.mxu0 0.0
        %3501 = vmatpush1.msra.mxu0 0.0
        %3502 = vmatprep.subr.mxu0 0.0
        %3503 = vmatpush1.msra.mxu0 0.0
        %3504 = vmatprep.subr.mxu0 0.0
        %3505 = vmatpush1.msra.mxu0 0.0
        %3506 = vmatprep.subr.mxu0 0.0
        %3507 = vmatpush1.msra.mxu0 0.0
        %3508 = vmatprep.subr.mxu0 0.0
        %3509 = vmatpush1.msra.mxu0 0.0
        %3510 = vmatprep.subr.mxu0 0.0
        %3511 = vmatpush1.msra.mxu0 0.0
        %3512 = vmatprep.subr.mxu0 0.0
        %3513 = vmatpush1.msra.mxu0 0.0
        %3514 = vmatprep.subr.mxu0 0.0
        %3515 = vmatpush1.msra.mxu0 0.0
        %3516 = vmatprep.subr.mxu0 0.0
        %3517 = vmatpush1.msra.mxu0 0.0
        %3518 = vmatprep.subr.mxu0 0.0
        %3519 = vmatpush1.msra.mxu0 0.0
        %3520 = vmatprep.subr.mxu0 0.0
        %3521 = vmatpush1.msra.mxu0 0.0
        %3522 = vmatprep.subr.mxu0 0.0
        %3523 = vmatpush1.msra.mxu0 0.0
        %3524 = vmatprep.subr.mxu0 0.0
        %3525 = vmatpush1.msra.mxu0 0.0
        %3526 = vmatprep.subr.mxu0 0.0
        %3527 = vmatpush1.msra.mxu0 0.0
        %3528 = vmatprep.subr.mxu0 0.0
        %3529 = vmatpush1.msra.mxu0 0.0
        %3530 = vmatprep.subr.mxu0 0.0
        %3531 = vmatpush1.msra.mxu0 0.0
        %3532 = vmatprep.subr.mxu0 0.0
        %3533 = vmatpush1.msra.mxu0 0.0
        %3534 = vmatprep.subr.mxu0 0.0
        %3535 = vmatpush1.msra.mxu0 0.0
        %3536 = vmatprep.subr.mxu0 0.0
        %3537 = vmatpush1.msra.mxu0 0.0
        %3538 = vmatprep.subr.mxu0 0.0
        %3539 = vmatpush1.msra.mxu0 0.0
        %3540 = vmatprep.subr.mxu0 0.0
        %3541 = vmatpush1.msra.mxu0 0.0
        %3542 = vmatprep.subr.mxu0 0.0
        %3543 = vmatpush1.msra.mxu0 0.0
        %3544 = vmatprep.subr.mxu0 0.0
        %3545 = vmatpush1.msra.mxu0 0.0
        %3546 = vmatprep.subr.mxu0 0.0
        %3547 = vmatpush1.msra.mxu0 0.0
        %3548 = vmatprep.subr.mxu0 0.0
        %3549 = vmatpush1.msra.mxu0 0.0
        %3550 = vmatprep.subr.mxu0 0.0
        %3551 = vmatpush1.msra.mxu0 0.0
        %3552 = vmatprep.mubr.f32.mxu0 0.0
        %3553 = vmatmul.mubr.f32.gmra.mrb[0].mxu0 %v3478
        %v3554 = vpop.f32.mrb[0].mxu0
        %v3555 = vadd.f32 0.0, %v3554
        %v3556 = vpop.f32.mrb[0].mxu0
        %3557 = vmatprep.mubr.f32.mxu0 0.0
        %3558 = vmatmul.mubr.f32.gmra.mrb[0].mxu0 %v3481
        %v3559 = vpop.f32.mrb[0].mxu0
        %v3560 = vadd.f32 0.0, %v3559
        %v3561 = vpop.f32.mrb[0].mxu0
        %3562 = vmatprep.mubr.f32.mxu0 0.0
        %3563 = vmatmul.mubr.f32.gmra.mrb[0].mxu0 %v3484
        %v3564 = vpop.f32.mrb[0].mxu0
        %v3565 = vadd.f32 0.0, %v3564
        %v3566 = vpop.f32.mrb[0].mxu0
        %3567 = vdwg.mxu0
        %v3569 = vsel %vm2664, %v2927, 0
        %v3572 = vsel %vm2664, %v2928, 0
        %v3575 = vsel %vm2664, %v2929, 0
        %v3577 = vsel %vm2939, %v1900, 0
        %3579 = vmatprep.subr.mxu0 0.0
        %3580 = vmatpush1.msra.mxu0 %v1896
        %3581 = vmatprep.subr.mxu0 0.0
        %3582 = vmatpush1.msra.mxu0 %v1898
        %3583 = vmatprep.subr.mxu0 0.0
        %3584 = vmatpush1.msra.mxu0 %v3577
        %3585 = vmatprep.subr.mxu0 0.0
        %3586 = vmatpush1.msra.mxu0 0.0
        %3587 = vmatprep.subr.mxu0 0.0
        %3588 = vmatpush1.msra.mxu0 0.0
        %3589 = vmatprep.subr.mxu0 0.0
        %3590 = vmatpush1.msra.mxu0 0.0
        %3591 = vmatprep.subr.mxu0 0.0
        %3592 = vmatpush1.msra.mxu0 0.0
        %3593 = vmatprep.subr.mxu0 0.0
        %3594 = vmatpush1.msra.mxu0 0.0
        %3595 = vmatprep.subr.mxu0 0.0
        %3596 = vmatpush1.msra.mxu0 0.0
        %3597 = vmatprep.subr.mxu0 0.0
        %3598 = vmatpush1.msra.mxu0 0.0
        %3599 = vmatprep.subr.mxu0 0.0
        %3600 = vmatpush1.msra.mxu0 0.0
        %3601 = vmatprep.subr.mxu0 0.0
        %3602 = vmatpush1.msra.mxu0 0.0
        %3603 = vmatprep.subr.mxu0 0.0
        %3604 = vmatpush1.msra.mxu0 0.0
        %3605 = vmatprep.subr.mxu0 0.0
        %3606 = vmatpush1.msra.mxu0 0.0
        %3607 = vmatprep.subr.mxu0 0.0
        %3608 = vmatpush1.msra.mxu0 0.0
        %3609 = vmatprep.subr.mxu0 0.0
        %3610 = vmatpush1.msra.mxu0 0.0
        %3611 = vmatprep.subr.mxu0 0.0
        %3612 = vmatpush1.msra.mxu0 0.0
        %3613 = vmatprep.subr.mxu0 0.0
        %3614 = vmatpush1.msra.mxu0 0.0
        %3615 = vmatprep.subr.mxu0 0.0
        %3616 = vmatpush1.msra.mxu0 0.0
        %3617 = vmatprep.subr.mxu0 0.0
        %3618 = vmatpush1.msra.mxu0 0.0
        %3619 = vmatprep.subr.mxu0 0.0
        %3620 = vmatpush1.msra.mxu0 0.0
        %3621 = vmatprep.subr.mxu0 0.0
        %3622 = vmatpush1.msra.mxu0 0.0
        %3623 = vmatprep.subr.mxu0 0.0
        %3624 = vmatpush1.msra.mxu0 0.0
        %3625 = vmatprep.subr.mxu0 0.0
        %3626 = vmatpush1.msra.mxu0 0.0
        %3627 = vmatprep.subr.mxu0 0.0
        %3628 = vmatpush1.msra.mxu0 0.0
        %3629 = vmatprep.subr.mxu0 0.0
        %3630 = vmatpush1.msra.mxu0 0.0
        %3631 = vmatprep.subr.mxu0 0.0
        %3632 = vmatpush1.msra.mxu0 0.0
        %3633 = vmatprep.subr.mxu0 0.0
        %3634 = vmatpush1.msra.mxu0 0.0
        %3635 = vmatprep.subr.mxu0 0.0
        %3636 = vmatpush1.msra.mxu0 0.0
        %3637 = vmatprep.subr.mxu0 0.0
        %3638 = vmatpush1.msra.mxu0 0.0
        %3639 = vmatprep.subr.mxu0 0.0
        %3640 = vmatpush1.msra.mxu0 0.0
        %3641 = vmatprep.subr.mxu0 0.0
        %3642 = vmatpush1.msra.mxu0 0.0
        %3643 = vmatprep.mubr.f32.mxu0 0.0
        %3644 = vmatmul.mubr.f32.gmra.mrb[0].mxu0 %v3569
        %v3645 = vpop.f32.mrb[0].mxu0
        %v3646 = vadd.f32 0.0, %v3645
        %v3647 = vpop.f32.mrb[0].mxu0
        %3648 = vmatprep.mubr.f32.mxu0 0.0
        %3649 = vmatmul.mubr.f32.gmra.mrb[0].mxu0 %v3572
        %v3650 = vpop.f32.mrb[0].mxu0
        %v3651 = vadd.f32 0.0, %v3650
        %v3652 = vpop.f32.mrb[0].mxu0
        %3653 = vmatprep.mubr.f32.mxu0 0.0
        %3654 = vmatmul.mubr.f32.gmra.mrb[0].mxu0 %v3575
        %v3655 = vpop.f32.mrb[0].mxu0
        %v3656 = vadd.f32 0.0, %v3655
        %v3657 = vpop.f32.mrb[0].mxu0
        %3658 = vdwg.mxu0
        %3662 = vrot.lane.b32.xlu0 %v3100, 32
        %v3663 = vpop.permute.xlu0 %3662
        %3664 = vrot.lane.b32.xlu0 %v3105, 32
        %v3665 = vpop.permute.xlu0 %3664
        %3666 = vrot.lane.b32.xlu0 %v3110, 32
        %v3667 = vpop.permute.xlu0 %3666
        %3674 = vrot.lane.b32.xlu0 %v3191, 64
        %v3675 = vpop.permute.xlu0 %3674
        %3676 = vrot.lane.b32.xlu0 %v3196, 64
        %v3677 = vpop.permute.xlu0 %3676
        %3678 = vrot.lane.b32.xlu0 %v3201, 64
        %v3679 = vpop.permute.xlu0 %3678
        %3686 = vrot.lane.b32.xlu0 %v3282, 96
        %v3687 = vpop.permute.xlu0 %3686
        %3688 = vrot.lane.b32.xlu0 %v3287, 96
        %v3689 = vpop.permute.xlu0 %3688
        %3690 = vrot.lane.b32.xlu0 %v3292, 96
        %v3691 = vpop.permute.xlu0 %3690
        %v3695 = vsel %vm1903, %v3009, %v3663
        %v3696 = vsel %vm1903, %v3014, %v3665
        %v3697 = vsel %vm1903, %v3019, %v3667
        %vm3698 = vcmask 523264
        %v3699 = vsel %vm3698, %v3695, %v3675
        %v3700 = vsel %vm3698, %v3696, %v3677
        %v3701 = vsel %vm3698, %v3697, %v3679
        %vm3702 = vcmask 785408
        %v3703 = vsel %vm3702, %v3699, %v3687
        %v3704 = vsel %vm3702, %v3700, %v3689
        %v3705 = vsel %vm3702, %v3701, %v3691
        %3709 = vrot.lane.b32.xlu0 %v3464, 32
        %v3710 = vpop.permute.xlu0 %3709
        %3711 = vrot.lane.b32.xlu0 %v3469, 32
        %v3712 = vpop.permute.xlu0 %3711
        %3713 = vrot.lane.b32.xlu0 %v3474, 32
        %v3714 = vpop.permute.xlu0 %3713
        %3721 = vrot.lane.b32.xlu0 %v3555, 64
        %v3722 = vpop.permute.xlu0 %3721
        %3723 = vrot.lane.b32.xlu0 %v3560, 64
        %v3724 = vpop.permute.xlu0 %3723
        %3725 = vrot.lane.b32.xlu0 %v3565, 64
        %v3726 = vpop.permute.xlu0 %3725
        %3733 = vrot.lane.b32.xlu0 %v3646, 96
        %v3734 = vpop.permute.xlu0 %3733
        %3735 = vrot.lane.b32.xlu0 %v3651, 96
        %v3736 = vpop.permute.xlu0 %3735
        %3737 = vrot.lane.b32.xlu0 %v3656, 96
        %v3738 = vpop.permute.xlu0 %3737
        %v3742 = vsel %vm1903, %v3373, %v3710
        %v3743 = vsel %vm1903, %v3378, %v3712
        %v3744 = vsel %vm1903, %v3383, %v3714
        %v3745 = vsel %vm3698, %v3742, %v3722
        %v3746 = vsel %vm3698, %v3743, %v3724
        %v3747 = vsel %vm3698, %v3744, %v3726
        %v3748 = vsel %vm3702, %v3745, %v3734
        %v3749 = vsel %vm3702, %v3746, %v3736
        %v3750 = vsel %vm3702, %v3747, %v3738
        %v3754 = vrot.slane %v3748, 7
        %v3755 = vrot.slane %v3749, 7
        %v3756 = vsel %vm2939, %v3754, %v3755
        %v3757 = vrot.slane %v3750, 7
        %v3758 = vsel %vm2939, %v3755, %v3757
        %v3762 = vsel %vm2939, %v3705, %v3754
        %v3763 = vpack.c.bf16 %v3704, %v3703
        %v3764 = vpack.c.bf16 %v3756, %v3762
        %v3765 = vpack.c.bf16 %v3758, %v3758
        %v3766 = vld [vmem:[%s1008] sm:$0xf]
        %v3767 = vld [vmem:[%s1008 + $0x4] sm:$0xf]
        %v3768 = vld [vmem:[%s1008 + $0x8] sm:$0xf]
        %v3769 = vld [vmem:[%s1008 + $0xc] sm:$0xf]
        %v3770 = vld [vmem:[%s1008 + $0x10] sm:$0xf]
        %v3771 = vld [vmem:[%s1008 + $0x14] sm:$0xf]
        %v3772 = vld [vmem:[%s1008 + $0x18] sm:$0xf]
        %v3773 = vld [vmem:[%s1008 + $0x1c] sm:$0xf]
        %v3774 = vld [vmem:[%s1008 + $0x20] sm:$0xf]
        %v3775 = vld [vmem:[%s1008 + $0x24] sm:$0xf]
        %v3776 = vld [vmem:[%s1008 + $0x28] sm:$0xf]
        %v3777 = vld [vmem:[%s1008 + $0x2c] sm:$0xf]
        %v3778 = vld [vmem:[%s1008 + $0x30] sm:$0xf]
        %v3779 = vld [vmem:[%s1008 + $0x34] sm:$0xf]
        %v3780 = vld [vmem:[%s1008 + $0x38] sm:$0xf]
        %v3781 = vld [vmem:[%s1008 + $0x3c] sm:$0xf]
        %v3798 = vunpack.c.l.b16 %v3766
        %v3799 = vunpack.c.l.b16 %v3767
        %v3800 = vunpack.c.l.b16 %v3768
        %v3801 = vunpack.c.l.b16 %v3769
        %v3802 = vunpack.c.l.b16 %v3770
        %v3803 = vunpack.c.l.b16 %v3771
        %v3804 = vunpack.c.l.b16 %v3772
        %v3805 = vunpack.c.l.b16 %v3773
        %v3806 = vunpack.c.l.b16 %v3774
        %v3807 = vunpack.c.l.b16 %v3775
        %v3808 = vunpack.c.l.b16 %v3776
        %v3809 = vunpack.c.l.b16 %v3777
        %v3810 = vunpack.c.l.b16 %v3778
        %v3811 = vunpack.c.l.b16 %v3779
        %v3812 = vunpack.c.l.b16 %v3780
        %v3813 = vunpack.c.l.b16 %v3781
        %v3814 = vpack.c.b16 %v3799, %v3798
        %v3815 = vpack.c.b16 %v3801, %v3800
        %v3816 = vpack.c.b16 %v3803, %v3802
        %v3817 = vpack.c.b16 %v3805, %v3804
        %v3818 = vpack.c.b16 %v3807, %v3806
        %v3819 = vpack.c.b16 %v3809, %v3808
        %v3820 = vpack.c.b16 %v3811, %v3810
        %v3821 = vpack.c.b16 %v3813, %v3812
        %3830 = vmatprep.subr.bf16.mxu0 0
        %3831 = vmatpush1.bf16.msra.mxu0 %v3814
        %3832 = vmatprep.subr.bf16.mxu0 0
        %3833 = vmatpush1.bf16.msra.mxu0 %v3815
        %3834 = vmatprep.subr.bf16.mxu0 0
        %3835 = vmatpush1.bf16.msra.mxu0 %v3816
        %3836 = vmatprep.subr.bf16.mxu0 0
        %3837 = vmatpush1.bf16.msra.mxu0 %v3817
        %3838 = vmatprep.subr.bf16.mxu0 0
        %3839 = vmatpush1.bf16.msra.mxu0 %v3818
        %3840 = vmatprep.subr.bf16.mxu0 0
        %3841 = vmatpush1.bf16.msra.mxu0 %v3819
        %3842 = vmatprep.subr.bf16.mxu0 0
        %3843 = vmatpush1.bf16.msra.mxu0 %v3820
        %3844 = vmatprep.subr.bf16.mxu0 0
        %3845 = vmatpush1.bf16.msra.mxu0 %v3821
        %3846 = vmatprep.subr.bf16.mxu0 0
        %3847 = vmatpush1.bf16.msra.mxu0 0
        %3848 = vmatprep.subr.bf16.mxu0 0
        %3849 = vmatpush1.bf16.msra.mxu0 0
        %3850 = vmatprep.subr.bf16.mxu0 0
        %3851 = vmatpush1.bf16.msra.mxu0 0
        %3852 = vmatprep.subr.bf16.mxu0 0
        %3853 = vmatpush1.bf16.msra.mxu0 0
        %3854 = vmatprep.subr.bf16.mxu0 0
        %3855 = vmatpush1.bf16.msra.mxu0 0
        %3856 = vmatprep.subr.bf16.mxu0 0
        %3857 = vmatpush1.bf16.msra.mxu0 0
        %3858 = vmatprep.subr.bf16.mxu0 0
        %3859 = vmatpush1.bf16.msra.mxu0 0
        %3860 = vmatprep.subr.bf16.mxu0 0
        %3861 = vmatpush1.bf16.msra.mxu0 0
        %3862 = vmatprep.mubr.bf16.mxu0 0
        %3863 = vmatmul.mubr.bf16.gmra.mrb[0].mxu0 %v3763
        %v3864 = vpop.f32.mrb[0].mxu0
        %v3865 = vadd.f32 0.0, %v3864
        %v3866 = vpop.f32.mrb[0].mxu0
        %v3867 = vpop.f32.mrb[0].mxu0
        %v3868 = vadd.f32 0.0, %v3867
        %v3869 = vpop.f32.mrb[0].mxu0
        %3870 = vmatprep.mubr.bf16.mxu0 0
        %3871 = vmatmul.mubr.bf16.gmra.mrb[0].mxu0 %v3764
        %v3872 = vpop.f32.mrb[0].mxu0
        %v3873 = vadd.f32 0.0, %v3872
        %v3874 = vpop.f32.mrb[0].mxu0
        %v3875 = vpop.f32.mrb[0].mxu0
        %v3876 = vadd.f32 0.0, %v3875
        %v3877 = vpop.f32.mrb[0].mxu0
        %3878 = vmatprep.mubr.bf16.mxu0 0
        %3879 = vmatmul.mubr.bf16.gmra.mrb[0].mxu0 %v3765
        %v3880 = vpop.f32.mrb[0].mxu0
        %v3881 = vadd.f32 0.0, %v3880
        %v3882 = vpop.f32.mrb[0].mxu0
        %v3883 = vpop.f32.mrb[0].mxu0
        %v3884 = vpop.f32.mrb[0].mxu0
        %3885 = vdwg.mxu0
        %v3886 = vadd.f32 %v1365, %v3865
        %v3887 = vadd.f32 %v1366, %v3868
        %v3888 = vadd.f32 %v1367, %v3873
        %v3889 = vadd.f32 %v1368, %v3876
        %v3890 = vadd.f32 %v1369, %v3881
        %v3891 = vld [vmem:[%s1153] sm:$0x1]
        %v3893 = vlaneseq
        %v3894 = vshrl.u32 %v3893, 7
        %v3895 = vsub.s32 0, %v3894
        %v3896 = vrot.slane %v3891, %v3895
        %v3898 = vadd.f32 %v3886, %v3896
        %v3899 = vadd.f32 %v3887, %v3896
        %v3900 = vadd.f32 %v3888, %v3896
        %v3901 = vadd.f32 %v3889, %v3896
        %v3902 = vadd.f32 %v3890, %v3896
        %v3903 = vld [vmem:[%s1016] sm:$0x1]
        %v3904 = vld [vmem:[%s1024] sm:$0x1]
        %3905 = vadd.xlane.f32.xlu0 %v3898
        %v3906 = vpop.xlane.xlu0 %3905
        %3907 = vadd.xlane.f32.xlu0 %v3899
        %v3908 = vpop.xlane.xlu0 %3907
        %3909 = vadd.xlane.f32.xlu0 %v3900
        %v3910 = vpop.xlane.xlu0 %3909
        %3911 = vadd.xlane.f32.xlu0 %v3901
        %v3912 = vpop.xlane.xlu0 %3911
        %v3913 = vsel %vm1380, %v3902, 0.0
        %3914 = vadd.xlane.f32.xlu0 %v3913
        %v3915 = vpop.xlane.xlu0 %3914
        %v3916 = vmul.f32 %v3906, %v1384
        %v3917 = vmul.f32 %v3908, %v1384
        %v3918 = vmul.f32 %v3910, %v1384
        %v3919 = vmul.f32 %v3912, %v1384
        %v3920 = vmul.f32 %v3915, %v1384
        %v3921 = vsub.f32 %v3898, %v3916
        %v3922 = vsub.f32 %v3899, %v3917
        %v3923 = vsub.f32 %v3900, %v3918
        %v3924 = vsub.f32 %v3901, %v3919
        %v3925 = vsub.f32 %v3902, %v3920
        %v3926 = vmul.f32 %v3921, %v3921
        %v3927 = vmul.f32 %v3922, %v3922
        %v3928 = vmul.f32 %v3923, %v3923
        %v3929 = vmul.f32 %v3924, %v3924
        %v3930 = vmul.f32 %v3925, %v3925
        %3931 = vadd.xlane.f32.xlu0 %v3926
        %v3932 = vpop.xlane.xlu0 %3931
        %3933 = vadd.xlane.f32.xlu0 %v3927
        %v3934 = vpop.xlane.xlu0 %3933
        %3935 = vadd.xlane.f32.xlu0 %v3928
        %v3936 = vpop.xlane.xlu0 %3935
        %3937 = vadd.xlane.f32.xlu0 %v3929
        %v3938 = vpop.xlane.xlu0 %3937
        %v3939 = vsel %vm1380, %v3930, 0.0
        %3940 = vadd.xlane.f32.xlu0 %v3939
        %v3941 = vpop.xlane.xlu0 %3940
        %v3942 = vmul.f32 %v3932, %v1384
        %v3943 = vmul.f32 %v3934, %v1384
        %v3944 = vmul.f32 %v3936, %v1384
        %v3945 = vmul.f32 %v3938, %v1384
        %v3946 = vmul.f32 %v3941, %v1384
        %v3947 = vadd.f32 %v3942, 1e-06
        %v3948 = vadd.f32 %v3943, 1e-06
        %v3949 = vadd.f32 %v3944, 1e-06
        %v3950 = vadd.f32 %v3945, 1e-06
        %v3951 = vadd.f32 %v3946, 1e-06
        %v3952 = vrsqrt.pop %v3947
        %v3953 = vrsqrt.pop %v3948
        %v3954 = vrsqrt.pop %v3949
        %v3955 = vrsqrt.pop %v3950
        %v3956 = vrsqrt.pop %v3951
        %v3957 = vmul.f32 %v3921, %v3952
        %v3958 = vmul.f32 %v3922, %v3953
        %v3959 = vmul.f32 %v3923, %v3954
        %v3960 = vmul.f32 %v3924, %v3955
        %v3961 = vmul.f32 %v3925, %v3956
        %v3963 = vlaneseq
        %v3964 = vshrl.u32 %v3963, 7
        %v3965 = vsub.s32 0, %v3964
        %v3966 = vrot.slane %v3903, %v3965
        %v3968 = vmul.f32 %v3957, %v3966
        %v3969 = vmul.f32 %v3958, %v3966
        %v3970 = vmul.f32 %v3959, %v3966
        %v3971 = vmul.f32 %v3960, %v3966
        %v3972 = vmul.f32 %v3961, %v3966
        %v3974 = vlaneseq
        %v3975 = vshrl.u32 %v3974, 7
        %v3976 = vsub.s32 0, %v3975
        %v3977 = vrot.slane %v3904, %v3976
        %v3979 = vadd.f32 %v3968, %v3977
        %v3980 = vadd.f32 %v3969, %v3977
        %v3981 = vadd.f32 %v3970, %v3977
        %v3982 = vadd.f32 %v3971, %v3977
        %v3983 = vadd.f32 %v3972, %v3977
        %v3984 = vpack.c.bf16 %v3980, %v3979
        %v3985 = vpack.c.bf16 %v3982, %v3981
        %v3986 = vpack.c.bf16 %v3983, %v3983
        %v3987 = vld [vmem:[%s1158] sm:$0xff]
        %v3988 = vld [vmem:[%s1158 + $0x8] sm:$0xff]
        %v3989 = vld [vmem:[%s1158 + $0x10] sm:$0xff]
        %v3990 = vld [vmem:[%s1158 + $0x18] sm:$0xff]
        %v3991 = vld [vmem:[%s1158 + $0x20] sm:$0xff]
        %v3992 = vld [vmem:[%s1158 + $0x28] sm:$0xff]
        %v3993 = vld [vmem:[%s1158 + $0x30] sm:$0xff]
        %v3994 = vld [vmem:[%s1158 + $0x38] sm:$0xff]
        %v3995 = vld [vmem:[%s1158 + $0x40] sm:$0xff]
        %v3996 = vld [vmem:[%s1158 + $0x48] sm:$0xff]
        %v3997 = vld [vmem:[%s1158 + $0x50] sm:$0xff]
        %v3998 = vld [vmem:[%s1158 + $0x58] sm:$0xff]
        %v3999 = vld [vmem:[%s1158 + $0x60] sm:$0xff]
        %v4000 = vld [vmem:[%s1158 + $0x68] sm:$0xff]
        %v4001 = vld [vmem:[%s1158 + $0x70] sm:$0xff]
        %v4002 = vld [vmem:[%s1158 + $0x78] sm:$0xff]
        %v4003 = vld [vmem:[%s1158 + $0x80] sm:$0xff]
        %v4004 = vld [vmem:[%s1158 + $0x88] sm:$0xff]
        %v4005 = vld [vmem:[%s1158 + $0x90] sm:$0xff]
        %v4006 = vld [vmem:[%s1158 + $0x98] sm:$0xff]
        %v4007 = vld [vmem:[%s1158 + $0xa0] sm:$0xff]
        %v4008 = vld [vmem:[%s1158 + $0xa8] sm:$0xff]
        %v4009 = vld [vmem:[%s1158 + $0xb0] sm:$0xff]
        %v4010 = vld [vmem:[%s1158 + $0xb8] sm:$0xff]
        %v4011 = vld [vmem:[%s1158 + $0xc0] sm:$0xff]
        %v4012 = vld [vmem:[%s1158 + $0xc8] sm:$0xff]
        %v4013 = vld [vmem:[%s1158 + $0xd0] sm:$0xff]
        %v4014 = vld [vmem:[%s1158 + $0xd8] sm:$0xff]
        %v4015 = vld [vmem:[%s1158 + $0xe0] sm:$0xff]
        %v4016 = vld [vmem:[%s1158 + $0xe8] sm:$0xff]
        %v4017 = vld [vmem:[%s1158 + $0xf0] sm:$0xff]
        %v4018 = vld [vmem:[%s1158 + $0xf8] sm:$0xff]
        %v4019 = vld [vmem:[%s1162] sm:$0xf]
        %v4021 = vlaneseq
        %v4022 = vshrl.u32 %v4021, 7
        %v4023 = vsub.s32 0, %v4022
        %v4024 = vrot.slane %v4019, %v4023
        %v4025 = vlaneseq
        %v4026 = vshrl.u32 %v4025, 7
        %v4027 = vsub.s32 1, %v4026
        %v4028 = vrot.slane %v4019, %v4027
        %v4029 = vlaneseq
        %v4030 = vshrl.u32 %v4029, 7
        %v4031 = vsub.s32 2, %v4030
        %v4032 = vrot.slane %v4019, %v4031
        %v4033 = vlaneseq
        %v4034 = vshrl.u32 %v4033, 7
        %v4035 = vsub.s32 3, %v4034
        %v4036 = vrot.slane %v4019, %v4035
        %v4073 = vunpack.c.l.b16 %v3987
        %v4074 = vunpack.c.h.b16 %v3987
        %v4075 = vunpack.c.l.b16 %v3988
        %v4076 = vunpack.c.h.b16 %v3988
        %v4077 = vunpack.c.l.b16 %v3989
        %v4078 = vunpack.c.h.b16 %v3989
        %v4079 = vunpack.c.l.b16 %v3990
        %v4080 = vunpack.c.h.b16 %v3990
        %v4081 = vunpack.c.l.b16 %v3991
        %v4082 = vunpack.c.h.b16 %v3991
        %v4083 = vunpack.c.l.b16 %v3992
        %v4084 = vunpack.c.h.b16 %v3992
        %v4085 = vunpack.c.l.b16 %v3993
        %v4086 = vunpack.c.h.b16 %v3993
        %v4087 = vunpack.c.l.b16 %v3994
        %v4088 = vunpack.c.h.b16 %v3994
        %v4089 = vunpack.c.l.b16 %v3995
        %v4090 = vunpack.c.h.b16 %v3995
        %v4091 = vunpack.c.l.b16 %v3996
        %v4092 = vunpack.c.h.b16 %v3996
        %v4093 = vunpack.c.l.b16 %v3997
        %v4094 = vunpack.c.h.b16 %v3997
        %v4095 = vunpack.c.l.b16 %v3998
        %v4096 = vunpack.c.h.b16 %v3998
        %v4097 = vunpack.c.l.b16 %v3999
        %v4098 = vunpack.c.h.b16 %v3999
        %v4099 = vunpack.c.l.b16 %v4000
        %v4100 = vunpack.c.h.b16 %v4000
        %v4101 = vunpack.c.l.b16 %v4001
        %v4102 = vunpack.c.h.b16 %v4001
        %v4103 = vunpack.c.l.b16 %v4002
        %v4104 = vunpack.c.h.b16 %v4002
        %v4105 = vunpack.c.l.b16 %v4003
        %v4106 = vunpack.c.h.b16 %v4003
        %v4107 = vunpack.c.l.b16 %v4004
        %v4108 = vunpack.c.h.b16 %v4004
        %v4109 = vunpack.c.l.b16 %v4005
        %v4110 = vunpack.c.h.b16 %v4005
        %v4111 = vunpack.c.l.b16 %v4006
        %v4112 = vunpack.c.h.b16 %v4006
        %v4113 = vunpack.c.l.b16 %v4007
        %v4114 = vunpack.c.h.b16 %v4007
        %v4115 = vunpack.c.l.b16 %v4008
        %v4116 = vunpack.c.h.b16 %v4008
        %v4117 = vunpack.c.l.b16 %v4009
        %v4118 = vunpack.c.h.b16 %v4009
        %v4119 = vunpack.c.l.b16 %v4010
        %v4120 = vunpack.c.h.b16 %v4010
        %v4121 = vunpack.c.l.b16 %v4011
        %v4122 = vunpack.c.h.b16 %v4011
        %v4123 = vunpack.c.l.b16 %v4012
        %v4124 = vunpack.c.h.b16 %v4012
        %v4125 = vunpack.c.l.b16 %v4013
        %v4126 = vunpack.c.h.b16 %v4013
        %v4127 = vunpack.c.l.b16 %v4014
        %v4128 = vunpack.c.h.b16 %v4014
        %v4129 = vunpack.c.l.b16 %v4015
        %v4130 = vunpack.c.h.b16 %v4015
        %v4131 = vunpack.c.l.b16 %v4016
        %v4132 = vunpack.c.h.b16 %v4016
        %v4133 = vunpack.c.l.b16 %v4017
        %v4134 = vunpack.c.h.b16 %v4017
        %v4135 = vunpack.c.l.b16 %v4018
        %v4136 = vunpack.c.h.b16 %v4018
        %v4137 = vpack.c.b16 %v4077, %v4073
        %v4138 = vpack.c.b16 %v4078, %v4074
        %v4139 = vpack.c.b16 %v4079, %v4075
        %v4140 = vpack.c.b16 %v4080, %v4076
        %v4141 = vpack.c.b16 %v4085, %v4081
        %v4142 = vpack.c.b16 %v4086, %v4082
        %v4143 = vpack.c.b16 %v4087, %v4083
        %v4144 = vpack.c.b16 %v4088, %v4084
        %v4145 = vpack.c.b16 %v4093, %v4089
        %v4146 = vpack.c.b16 %v4094, %v4090
        %v4147 = vpack.c.b16 %v4095, %v4091
        %v4148 = vpack.c.b16 %v4096, %v4092
        %v4149 = vpack.c.b16 %v4101, %v4097
        %v4150 = vpack.c.b16 %v4102, %v4098
        %v4151 = vpack.c.b16 %v4103, %v4099
        %v4152 = vpack.c.b16 %v4104, %v4100
        %v4153 = vpack.c.b16 %v4109, %v4105
        %v4154 = vpack.c.b16 %v4110, %v4106
        %v4155 = vpack.c.b16 %v4111, %v4107
        %v4156 = vpack.c.b16 %v4112, %v4108
        %v4157 = vpack.c.b16 %v4117, %v4113
        %v4158 = vpack.c.b16 %v4118, %v4114
        %v4159 = vpack.c.b16 %v4119, %v4115
        %v4160 = vpack.c.b16 %v4120, %v4116
        %v4161 = vpack.c.b16 %v4125, %v4121
        %v4162 = vpack.c.b16 %v4126, %v4122
        %v4163 = vpack.c.b16 %v4127, %v4123
        %v4164 = vpack.c.b16 %v4128, %v4124
        %v4165 = vpack.c.b16 %v4133, %v4129
        %v4166 = vpack.c.b16 %v4134, %v4130
        %v4167 = vpack.c.b16 %v4135, %v4131
        %v4168 = vpack.c.b16 %v4136, %v4132
        %4201 = vmatprep.subr.bf16.mxu0 %v4138
        %4202 = vmatpush1.bf16.msra.mxu0 %v4137
        %4203 = vmatprep.subr.bf16.mxu0 %v4142
        %4204 = vmatpush1.bf16.msra.mxu0 %v4141
        %4205 = vmatprep.subr.bf16.mxu0 %v4146
        %4206 = vmatpush1.bf16.msra.mxu0 %v4145
        %4207 = vmatprep.subr.bf16.mxu0 %v4150
        %4208 = vmatpush1.bf16.msra.mxu0 %v4149
        %4209 = vmatprep.subr.bf16.mxu0 %v4154
        %4210 = vmatpush1.bf16.msra.mxu0 %v4153
        %4211 = vmatprep.subr.bf16.mxu0 %v4158
        %4212 = vmatpush1.bf16.msra.mxu0 %v4157
        %4213 = vmatprep.subr.bf16.mxu0 %v4162
        %4214 = vmatpush1.bf16.msra.mxu0 %v4161
        %4215 = vmatprep.subr.bf16.mxu0 %v4166
        %4216 = vmatpush1.bf16.msra.mxu0 %v4165
        %4217 = vmatprep.subr.bf16.mxu0 0
        %4218 = vmatpush1.bf16.msra.mxu0 0
        %4219 = vmatprep.subr.bf16.mxu0 0
        %4220 = vmatpush1.bf16.msra.mxu0 0
        %4221 = vmatprep.subr.bf16.mxu0 0
        %4222 = vmatpush1.bf16.msra.mxu0 0
        %4223 = vmatprep.subr.bf16.mxu0 0
        %4224 = vmatpush1.bf16.msra.mxu0 0
        %4225 = vmatprep.subr.bf16.mxu0 0
        %4226 = vmatpush1.bf16.msra.mxu0 0
        %4227 = vmatprep.subr.bf16.mxu0 0
        %4228 = vmatpush1.bf16.msra.mxu0 0
        %4229 = vmatprep.subr.bf16.mxu0 0
        %4230 = vmatpush1.bf16.msra.mxu0 0
        %4231 = vmatprep.subr.bf16.mxu0 0
        %4232 = vmatpush1.bf16.msra.mxu0 0
        %4233 = vmatprep.mubr.bf16.mxu0 0
        %4234 = vmatmul.mubr.bf16.gmra.mrb[0].mxu0 %v3984
        %v4235 = vpop.f32.mrb[0].mxu0
        %v4236 = vadd.f32 %v4024, %v4235
        %v4237 = vpop.f32.mrb[0].mxu0
        %v4238 = vadd.f32 %v4028, %v4237
        %v4239 = vpop.f32.mrb[0].mxu0
        %v4240 = vadd.f32 %v4024, %v4239
        %v4241 = vpop.f32.mrb[0].mxu0
        %v4242 = vadd.f32 %v4028, %v4241
        %4243 = vmatprep.mubr.bf16.mxu0 0
        %4244 = vmatmul.mubr.bf16.gmra.mrb[0].mxu0 %v3985
        %v4245 = vpop.f32.mrb[0].mxu0
        %v4246 = vadd.f32 %v4024, %v4245
        %v4247 = vpop.f32.mrb[0].mxu0
        %v4248 = vadd.f32 %v4028, %v4247
        %v4249 = vpop.f32.mrb[0].mxu0
        %v4250 = vadd.f32 %v4024, %v4249
        %v4251 = vpop.f32.mrb[0].mxu0
        %v4252 = vadd.f32 %v4028, %v4251
        %4253 = vmatprep.mubr.bf16.mxu0 0
        %4254 = vmatmul.mubr.bf16.gmra.mrb[0].mxu0 %v3986
        %v4255 = vpop.f32.mrb[0].mxu0
        %v4256 = vadd.f32 %v4024, %v4255
        %v4257 = vpop.f32.mrb[0].mxu0
        %v4258 = vadd.f32 %v4028, %v4257
        %v4259 = vpop.f32.mrb[0].mxu0
        %v4260 = vpop.f32.mrb[0].mxu0
        %4261 = vdwg.mxu0
        %4262 = vmatprep.subr.bf16.mxu0 %v4140
        %4263 = vmatpush1.bf16.msra.mxu0 %v4139
        %4264 = vmatprep.subr.bf16.mxu0 %v4144
        %4265 = vmatpush1.bf16.msra.mxu0 %v4143
        %4266 = vmatprep.subr.bf16.mxu0 %v4148
        %4267 = vmatpush1.bf16.msra.mxu0 %v4147
        %4268 = vmatprep.subr.bf16.mxu0 %v4152
        %4269 = vmatpush1.bf16.msra.mxu0 %v4151
        %4270 = vmatprep.subr.bf16.mxu0 %v4156
        %4271 = vmatpush1.bf16.msra.mxu0 %v4155
        %4272 = vmatprep.subr.bf16.mxu0 %v4160
        %4273 = vmatpush1.bf16.msra.mxu0 %v4159
        %4274 = vmatprep.subr.bf16.mxu0 %v4164
        %4275 = vmatpush1.bf16.msra.mxu0 %v4163
        %4276 = vmatprep.subr.bf16.mxu0 %v4168
        %4277 = vmatpush1.bf16.msra.mxu0 %v4167
        %4278 = vmatprep.subr.bf16.mxu0 0
        %4279 = vmatpush1.bf16.msra.mxu0 0
        %4280 = vmatprep.subr.bf16.mxu0 0
        %4281 = vmatpush1.bf16.msra.mxu0 0
        %4282 = vmatprep.subr.bf16.mxu0 0
        %4283 = vmatpush1.bf16.msra.mxu0 0
        %4284 = vmatprep.subr.bf16.mxu0 0
        %4285 = vmatpush1.bf16.msra.mxu0 0
        %4286 = vmatprep.subr.bf16.mxu0 0
        %4287 = vmatpush1.bf16.msra.mxu0 0
        %4288 = vmatprep.subr.bf16.mxu0 0
        %4289 = vmatpush1.bf16.msra.mxu0 0
        %4290 = vmatprep.subr.bf16.mxu0 0
        %4291 = vmatpush1.bf16.msra.mxu0 0
        %4292 = vmatprep.subr.bf16.mxu0 0
        %4293 = vmatpush1.bf16.msra.mxu0 0
        %4294 = vmatprep.mubr.bf16.mxu0 0
        %4295 = vmatmul.mubr.bf16.gmra.mrb[0].mxu0 %v3984
        %v4296 = vpop.f32.mrb[0].mxu0
        %v4297 = vadd.f32 %v4032, %v4296
        %v4298 = vpop.f32.mrb[0].mxu0
        %v4299 = vadd.f32 %v4036, %v4298
        %v4300 = vpop.f32.mrb[0].mxu0
        %v4301 = vadd.f32 %v4032, %v4300
        %v4302 = vpop.f32.mrb[0].mxu0
        %v4303 = vadd.f32 %v4036, %v4302
        %4304 = vmatprep.mubr.bf16.mxu0 0
        %4305 = vmatmul.mubr.bf16.gmra.mrb[0].mxu0 %v3985
        %v4306 = vpop.f32.mrb[0].mxu0
        %v4307 = vadd.f32 %v4032, %v4306
        %v4308 = vpop.f32.mrb[0].mxu0
        %v4309 = vadd.f32 %v4036, %v4308
        %v4310 = vpop.f32.mrb[0].mxu0
        %v4311 = vadd.f32 %v4032, %v4310
        %v4312 = vpop.f32.mrb[0].mxu0
        %v4313 = vadd.f32 %v4036, %v4312
        %4314 = vmatprep.mubr.bf16.mxu0 0
        %4315 = vmatmul.mubr.bf16.gmra.mrb[0].mxu0 %v3986
        %v4316 = vpop.f32.mrb[0].mxu0
        %v4317 = vadd.f32 %v4032, %v4316
        %v4318 = vpop.f32.mrb[0].mxu0
        %v4319 = vadd.f32 %v4036, %v4318
        %v4320 = vpop.f32.mrb[0].mxu0
        %v4321 = vpop.f32.mrb[0].mxu0
        %4322 = vdwg.mxu0
        %v4323 = vmul.f32 %v4236, 0.5
        %v4324 = vmul.f32 %v4238, 0.5
        %v4325 = vmul.f32 %v4297, 0.5
        %v4326 = vmul.f32 %v4299, 0.5
        %v4327 = vmul.f32 %v4240, 0.5
        %v4328 = vmul.f32 %v4242, 0.5
        %v4329 = vmul.f32 %v4301, 0.5
        %v4330 = vmul.f32 %v4303, 0.5
        %v4331 = vmul.f32 %v4246, 0.5
        %v4332 = vmul.f32 %v4248, 0.5
        %v4333 = vmul.f32 %v4307, 0.5
        %v4334 = vmul.f32 %v4309, 0.5
        %v4335 = vmul.f32 %v4250, 0.5
        %v4336 = vmul.f32 %v4252, 0.5
        %v4337 = vmul.f32 %v4311, 0.5
        %v4338 = vmul.f32 %v4313, 0.5
        %v4339 = vmul.f32 %v4256, 0.5
        %v4340 = vmul.f32 %v4258, 0.5
        %v4341 = vmul.f32 %v4317, 0.5
        %v4342 = vmul.f32 %v4319, 0.5
        %v4343 = vmul.f32 %v4236, 0.044715
        %v4344 = vmul.f32 %v4238, 0.044715
        %v4345 = vmul.f32 %v4297, 0.044715
        %v4346 = vmul.f32 %v4299, 0.044715
        %v4347 = vmul.f32 %v4240, 0.044715
        %v4348 = vmul.f32 %v4242, 0.044715
        %v4349 = vmul.f32 %v4301, 0.044715
        %v4350 = vmul.f32 %v4303, 0.044715
        %v4351 = vmul.f32 %v4246, 0.044715
        %v4352 = vmul.f32 %v4248, 0.044715
        %v4353 = vmul.f32 %v4307, 0.044715
        %v4354 = vmul.f32 %v4309, 0.044715
        %v4355 = vmul.f32 %v4250, 0.044715
        %v4356 = vmul.f32 %v4252, 0.044715
        %v4357 = vmul.f32 %v4311, 0.044715
        %v4358 = vmul.f32 %v4313, 0.044715
        %v4359 = vmul.f32 %v4256, 0.044715
        %v4360 = vmul.f32 %v4258, 0.044715
        %v4361 = vmul.f32 %v4317, 0.044715
        %v4362 = vmul.f32 %v4319, 0.044715
        %v4363 = vmul.f32 %v4343, %v4236
        %v4364 = vmul.f32 %v4344, %v4238
        %v4365 = vmul.f32 %v4345, %v4297
        %v4366 = vmul.f32 %v4346, %v4299
        %v4367 = vmul.f32 %v4347, %v4240
        %v4368 = vmul.f32 %v4348, %v4242
        %v4369 = vmul.f32 %v4349, %v4301
        %v4370 = vmul.f32 %v4350, %v4303
        %v4371 = vmul.f32 %v4351, %v4246
        %v4372 = vmul.f32 %v4352, %v4248
        %v4373 = vmul.f32 %v4353, %v4307
        %v4374 = vmul.f32 %v4354, %v4309
        %v4375 = vmul.f32 %v4355, %v4250
        %v4376 = vmul.f32 %v4356, %v4252
        %v4377 = vmul.f32 %v4357, %v4311
        %v4378 = vmul.f32 %v4358, %v4313
        %v4379 = vmul.f32 %v4359, %v4256
        %v4380 = vmul.f32 %v4360, %v4258
        %v4381 = vmul.f32 %v4361, %v4317
        %v4382 = vmul.f32 %v4362, %v4319
        %v4383 = vmul.f32 %v4363, %v4236
        %v4384 = vmul.f32 %v4364, %v4238
        %v4385 = vmul.f32 %v4365, %v4297
        %v4386 = vmul.f32 %v4366, %v4299
        %v4387 = vmul.f32 %v4367, %v4240
        %v4388 = vmul.f32 %v4368, %v4242
        %v4389 = vmul.f32 %v4369, %v4301
        %v4390 = vmul.f32 %v4370, %v4303
        %v4391 = vmul.f32 %v4371, %v4246
        %v4392 = vmul.f32 %v4372, %v4248
        %v4393 = vmul.f32 %v4373, %v4307
        %v4394 = vmul.f32 %v4374, %v4309
        %v4395 = vmul.f32 %v4375, %v4250
        %v4396 = vmul.f32 %v4376, %v4252
        %v4397 = vmul.f32 %v4377, %v4311
        %v4398 = vmul.f32 %v4378, %v4313
        %v4399 = vmul.f32 %v4379, %v4256
        %v4400 = vmul.f32 %v4380, %v4258
        %v4401 = vmul.f32 %v4381, %v4317
        %v4402 = vmul.f32 %v4382, %v4319
        %v4403 = vadd.f32 %v4236, %v4383
        %v4404 = vadd.f32 %v4238, %v4384
        %v4405 = vadd.f32 %v4297, %v4385
        %v4406 = vadd.f32 %v4299, %v4386
        %v4407 = vadd.f32 %v4240, %v4387
        %v4408 = vadd.f32 %v4242, %v4388
        %v4409 = vadd.f32 %v4301, %v4389
        %v4410 = vadd.f32 %v4303, %v4390
        %v4411 = vadd.f32 %v4246, %v4391
        %v4412 = vadd.f32 %v4248, %v4392
        %v4413 = vadd.f32 %v4307, %v4393
        %v4414 = vadd.f32 %v4309, %v4394
        %v4415 = vadd.f32 %v4250, %v4395
        %v4416 = vadd.f32 %v4252, %v4396
        %v4417 = vadd.f32 %v4311, %v4397
        %v4418 = vadd.f32 %v4313, %v4398
        %v4419 = vadd.f32 %v4256, %v4399
        %v4420 = vadd.f32 %v4258, %v4400
        %v4421 = vadd.f32 %v4317, %v4401
        %v4422 = vadd.f32 %v4319, %v4402
        %v4423 = vmul.f32 %v4403, 0.7978846
        %v4424 = vmul.f32 %v4404, 0.7978846
        %v4425 = vmul.f32 %v4405, 0.7978846
        %v4426 = vmul.f32 %v4406, 0.7978846
        %v4427 = vmul.f32 %v4407, 0.7978846
        %v4428 = vmul.f32 %v4408, 0.7978846
        %v4429 = vmul.f32 %v4409, 0.7978846
        %v4430 = vmul.f32 %v4410, 0.7978846
        %v4431 = vmul.f32 %v4411, 0.7978846
        %v4432 = vmul.f32 %v4412, 0.7978846
        %v4433 = vmul.f32 %v4413, 0.7978846
        %v4434 = vmul.f32 %v4414, 0.7978846
        %v4435 = vmul.f32 %v4415, 0.7978846
        %v4436 = vmul.f32 %v4416, 0.7978846
        %v4437 = vmul.f32 %v4417, 0.7978846
        %v4438 = vmul.f32 %v4418, 0.7978846
        %v4439 = vmul.f32 %v4419, 0.7978846
        %v4440 = vmul.f32 %v4420, 0.7978846
        %v4441 = vmul.f32 %v4421, 0.7978846
        %v4442 = vmul.f32 %v4422, 0.7978846
        %v4443 = vtanh.pop %v4423
        %v4444 = vtanh.pop %v4424
        %v4445 = vtanh.pop %v4425
        %v4446 = vtanh.pop %v4426
        %v4447 = vtanh.pop %v4427
        %v4448 = vtanh.pop %v4428
        %v4449 = vtanh.pop %v4429
        %v4450 = vtanh.pop %v4430
        %v4451 = vtanh.pop %v4431
        %v4452 = vtanh.pop %v4432
        %v4453 = vtanh.pop %v4433
        %v4454 = vtanh.pop %v4434
        %v4455 = vtanh.pop %v4435
        %v4456 = vtanh.pop %v4436
        %v4457 = vtanh.pop %v4437
        %v4458 = vtanh.pop %v4438
        %v4459 = vtanh.pop %v4439
        %v4460 = vtanh.pop %v4440
        %v4461 = vtanh.pop %v4441
        %v4462 = vtanh.pop %v4442
        %v4463 = vadd.f32 %v4443, 1.0
        %v4464 = vadd.f32 %v4444, 1.0
        %v4465 = vadd.f32 %v4445, 1.0
        %v4466 = vadd.f32 %v4446, 1.0
        %v4467 = vadd.f32 %v4447, 1.0
        %v4468 = vadd.f32 %v4448, 1.0
        %v4469 = vadd.f32 %v4449, 1.0
        %v4470 = vadd.f32 %v4450, 1.0
        %v4471 = vadd.f32 %v4451, 1.0
        %v4472 = vadd.f32 %v4452, 1.0
        %v4473 = vadd.f32 %v4453, 1.0
        %v4474 = vadd.f32 %v4454, 1.0
        %v4475 = vadd.f32 %v4455, 1.0
        %v4476 = vadd.f32 %v4456, 1.0
        %v4477 = vadd.f32 %v4457, 1.0
        %v4478 = vadd.f32 %v4458, 1.0
        %v4479 = vadd.f32 %v4459, 1.0
        %v4480 = vadd.f32 %v4460, 1.0
        %v4481 = vadd.f32 %v4461, 1.0
        %v4482 = vadd.f32 %v4462, 1.0
        %v4483 = vmul.f32 %v4323, %v4463
        %v4484 = vmul.f32 %v4324, %v4464
        %v4485 = vmul.f32 %v4325, %v4465
        %v4486 = vmul.f32 %v4326, %v4466
        %v4487 = vmul.f32 %v4327, %v4467
        %v4488 = vmul.f32 %v4328, %v4468
        %v4489 = vmul.f32 %v4329, %v4469
        %v4490 = vmul.f32 %v4330, %v4470
        %v4491 = vmul.f32 %v4331, %v4471
        %v4492 = vmul.f32 %v4332, %v4472
        %v4493 = vmul.f32 %v4333, %v4473
        %v4494 = vmul.f32 %v4334, %v4474
        %v4495 = vmul.f32 %v4335, %v4475
        %v4496 = vmul.f32 %v4336, %v4476
        %v4497 = vmul.f32 %v4337, %v4477
        %v4498 = vmul.f32 %v4338, %v4478
        %v4499 = vmul.f32 %v4339, %v4479
        %v4500 = vmul.f32 %v4340, %v4480
        %v4501 = vmul.f32 %v4341, %v4481
        %v4502 = vmul.f32 %v4342, %v4482
        %v4503 = vpack.c.bf16 %v4487, %v4483
        %v4504 = vpack.c.bf16 %v4488, %v4484
        %v4505 = vpack.c.bf16 %v4489, %v4485
        %v4506 = vpack.c.bf16 %v4490, %v4486
        %v4507 = vpack.c.bf16 %v4495, %v4491
        %v4508 = vpack.c.bf16 %v4496, %v4492
        %v4509 = vpack.c.bf16 %v4497, %v4493
        %v4510 = vpack.c.bf16 %v4498, %v4494
        %v4511 = vpack.c.bf16 %v4499, %v4499
        %v4512 = vpack.c.bf16 %v4500, %v4500
        %v4513 = vpack.c.bf16 %v4501, %v4501
        %v4514 = vpack.c.bf16 %v4502, %v4502
        %v4515 = vld [vmem:[%s1167] sm:$0xf]
        %v4516 = vld [vmem:[%s1167 + $0x4] sm:$0xf]
        %v4517 = vld [vmem:[%s1167 + $0x8] sm:$0xf]
        %v4518 = vld [vmem:[%s1167 + $0xc] sm:$0xf]
        %v4519 = vld [vmem:[%s1167 + $0x10] sm:$0xf]
        %v4520 = vld [vmem:[%s1167 + $0x14] sm:$0xf]
        %v4521 = vld [vmem:[%s1167 + $0x18] sm:$0xf]
        %v4522 = vld [vmem:[%s1167 + $0x1c] sm:$0xf]
        %v4523 = vld [vmem:[%s1167 + $0x20] sm:$0xf]
        %v4524 = vld [vmem:[%s1167 + $0x24] sm:$0xf]
        %v4525 = vld [vmem:[%s1167 + $0x28] sm:$0xf]
        %v4526 = vld [vmem:[%s1167 + $0x2c] sm:$0xf]
        %v4527 = vld [vmem:[%s1167 + $0x30] sm:$0xf]
        %v4528 = vld [vmem:[%s1167 + $0x34] sm:$0xf]
        %v4529 = vld [vmem:[%s1167 + $0x38] sm:$0xf]
        %v4530 = vld [vmem:[%s1167 + $0x3c] sm:$0xf]
        %v4531 = vld [vmem:[%s1167 + $0x40] sm:$0xf]
        %v4532 = vld [vmem:[%s1167 + $0x44] sm:$0xf]
        %v4533 = vld [vmem:[%s1167 + $0x48] sm:$0xf]
        %v4534 = vld [vmem:[%s1167 + $0x4c] sm:$0xf]
        %v4535 = vld [vmem:[%s1167 + $0x50] sm:$0xf]
        %v4536 = vld [vmem:[%s1167 + $0x54] sm:$0xf]
        %v4537 = vld [vmem:[%s1167 + $0x58] sm:$0xf]
        %v4538 = vld [vmem:[%s1167 + $0x5c] sm:$0xf]
        %v4539 = vld [vmem:[%s1167 + $0x60] sm:$0xf]
        %v4540 = vld [vmem:[%s1167 + $0x64] sm:$0xf]
        %v4541 = vld [vmem:[%s1167 + $0x68] sm:$0xf]
        %v4542 = vld [vmem:[%s1167 + $0x6c] sm:$0xf]
        %v4543 = vld [vmem:[%s1167 + $0x70] sm:$0xf]
        %v4544 = vld [vmem:[%s1167 + $0x74] sm:$0xf]
        %v4545 = vld [vmem:[%s1167 + $0x78] sm:$0xf]
        %v4546 = vld [vmem:[%s1167 + $0x7c] sm:$0xf]
        %v4547 = vld [vmem:[%s1167 + $0x80] sm:$0xf]
        %v4548 = vld [vmem:[%s1167 + $0x84] sm:$0xf]
        %v4549 = vld [vmem:[%s1167 + $0x88] sm:$0xf]
        %v4550 = vld [vmem:[%s1167 + $0x8c] sm:$0xf]
        %v4551 = vld [vmem:[%s1167 + $0x90] sm:$0xf]
        %v4552 = vld [vmem:[%s1167 + $0x94] sm:$0xf]
        %v4553 = vld [vmem:[%s1167 + $0x98] sm:$0xf]
        %v4554 = vld [vmem:[%s1167 + $0x9c] sm:$0xf]
        %v4555 = vld [vmem:[%s1167 + $0xa0] sm:$0xf]
        %v4556 = vld [vmem:[%s1167 + $0xa4] sm:$0xf]
        %v4557 = vld [vmem:[%s1167 + $0xa8] sm:$0xf]
        %v4558 = vld [vmem:[%s1167 + $0xac] sm:$0xf]
        %v4559 = vld [vmem:[%s1167 + $0xb0] sm:$0xf]
        %v4560 = vld [vmem:[%s1167 + $0xb4] sm:$0xf]
        %v4561 = vld [vmem:[%s1167 + $0xb8] sm:$0xf]
        %v4562 = vld [vmem:[%s1167 + $0xbc] sm:$0xf]
        %v4563 = vld [vmem:[%s1167 + $0xc0] sm:$0xf]
        %v4564 = vld [vmem:[%s1167 + $0xc4] sm:$0xf]
        %v4565 = vld [vmem:[%s1167 + $0xc8] sm:$0xf]
        %v4566 = vld [vmem:[%s1167 + $0xcc] sm:$0xf]
        %v4567 = vld [vmem:[%s1167 + $0xd0] sm:$0xf]
        %v4568 = vld [vmem:[%s1167 + $0xd4] sm:$0xf]
        %v4569 = vld [vmem:[%s1167 + $0xd8] sm:$0xf]
        %v4570 = vld [vmem:[%s1167 + $0xdc] sm:$0xf]
        %v4571 = vld [vmem:[%s1167 + $0xe0] sm:$0xf]
        %v4572 = vld [vmem:[%s1167 + $0xe4] sm:$0xf]
        %v4573 = vld [vmem:[%s1167 + $0xe8] sm:$0xf]
        %v4574 = vld [vmem:[%s1167 + $0xec] sm:$0xf]
        %v4575 = vld [vmem:[%s1167 + $0xf0] sm:$0xf]
        %v4576 = vld [vmem:[%s1167 + $0xf4] sm:$0xf]
        %v4577 = vld [vmem:[%s1167 + $0xf8] sm:$0xf]
        %v4578 = vld [vmem:[%s1167 + $0xfc] sm:$0xf]
        %v4643 = vunpack.c.l.b16 %v4515
        %v4644 = vunpack.c.l.b16 %v4516
        %v4645 = vunpack.c.l.b16 %v4517
        %v4646 = vunpack.c.l.b16 %v4518
        %v4647 = vunpack.c.l.b16 %v4519
        %v4648 = vunpack.c.l.b16 %v4520
        %v4649 = vunpack.c.l.b16 %v4521
        %v4650 = vunpack.c.l.b16 %v4522
        %v4651 = vunpack.c.l.b16 %v4523
        %v4652 = vunpack.c.l.b16 %v4524
        %v4653 = vunpack.c.l.b16 %v4525
        %v4654 = vunpack.c.l.b16 %v4526
        %v4655 = vunpack.c.l.b16 %v4527
        %v4656 = vunpack.c.l.b16 %v4528
        %v4657 = vunpack.c.l.b16 %v4529
        %v4658 = vunpack.c.l.b16 %v4530
        %v4659 = vunpack.c.l.b16 %v4531
        %v4660 = vunpack.c.l.b16 %v4532
        %v4661 = vunpack.c.l.b16 %v4533
        %v4662 = vunpack.c.l.b16 %v4534
        %v4663 = vunpack.c.l.b16 %v4535
        %v4664 = vunpack.c.l.b16 %v4536
        %v4665 = vunpack.c.l.b16 %v4537
        %v4666 = vunpack.c.l.b16 %v4538
        %v4667 = vunpack.c.l.b16 %v4539
        %v4668 = vunpack.c.l.b16 %v4540
        %v4669 = vunpack.c.l.b16 %v4541
        %v4670 = vunpack.c.l.b16 %v4542
        %v4671 = vunpack.c.l.b16 %v4543
        %v4672 = vunpack.c.l.b16 %v4544
        %v4673 = vunpack.c.l.b16 %v4545
        %v4674 = vunpack.c.l.b16 %v4546
        %v4675 = vunpack.c.l.b16 %v4547
        %v4676 = vunpack.c.l.b16 %v4548
        %v4677 = vunpack.c.l.b16 %v4549
        %v4678 = vunpack.c.l.b16 %v4550
        %v4679 = vunpack.c.l.b16 %v4551
        %v4680 = vunpack.c.l.b16 %v4552
        %v4681 = vunpack.c.l.b16 %v4553
        %v4682 = vunpack.c.l.b16 %v4554
        %v4683 = vunpack.c.l.b16 %v4555
        %v4684 = vunpack.c.l.b16 %v4556
        %v4685 = vunpack.c.l.b16 %v4557
        %v4686 = vunpack.c.l.b16 %v4558
        %v4687 = vunpack.c.l.b16 %v4559
        %v4688 = vunpack.c.l.b16 %v4560
        %v4689 = vunpack.c.l.b16 %v4561
        %v4690 = vunpack.c.l.b16 %v4562
        %v4691 = vunpack.c.l.b16 %v4563
        %v4692 = vunpack.c.l.b16 %v4564
        %v4693 = vunpack.c.l.b16 %v4565
        %v4694 = vunpack.c.l.b16 %v4566
        %v4695 = vunpack.c.l.b16 %v4567
        %v4696 = vunpack.c.l.b16 %v4568
        %v4697 = vunpack.c.l.b16 %v4569
        %v4698 = vunpack.c.l.b16 %v4570
        %v4699 = vunpack.c.l.b16 %v4571
        %v4700 = vunpack.c.l.b16 %v4572
        %v4701 = vunpack.c.l.b16 %v4573
        %v4702 = vunpack.c.l.b16 %v4574
        %v4703 = vunpack.c.l.b16 %v4575
        %v4704 = vunpack.c.l.b16 %v4576
        %v4705 = vunpack.c.l.b16 %v4577
        %v4706 = vunpack.c.l.b16 %v4578
        %v4707 = vpack.c.b16 %v4644, %v4643
        %v4708 = vpack.c.b16 %v4646, %v4645
        %v4709 = vpack.c.b16 %v4648, %v4647
        %v4710 = vpack.c.b16 %v4650, %v4649
        %v4711 = vpack.c.b16 %v4652, %v4651
        %v4712 = vpack.c.b16 %v4654, %v4653
        %v4713 = vpack.c.b16 %v4656, %v4655
        %v4714 = vpack.c.b16 %v4658, %v4657
        %v4715 = vpack.c.b16 %v4660, %v4659
        %v4716 = vpack.c.b16 %v4662, %v4661
        %v4717 = vpack.c.b16 %v4664, %v4663
        %v4718 = vpack.c.b16 %v4666, %v4665
        %v4719 = vpack.c.b16 %v4668, %v4667
        %v4720 = vpack.c.b16 %v4670, %v4669
        %v4721 = vpack.c.b16 %v4672, %v4671
        %v4722 = vpack.c.b16 %v4674, %v4673
        %v4723 = vpack.c.b16 %v4676, %v4675
        %v4724 = vpack.c.b16 %v4678, %v4677
        %v4725 = vpack.c.b16 %v4680, %v4679
        %v4726 = vpack.c.b16 %v4682, %v4681
        %v4727 = vpack.c.b16 %v4684, %v4683
        %v4728 = vpack.c.b16 %v4686, %v4685
        %v4729 = vpack.c.b16 %v4688, %v4687
        %v4730 = vpack.c.b16 %v4690, %v4689
        %v4731 = vpack.c.b16 %v4692, %v4691
        %v4732 = vpack.c.b16 %v4694, %v4693
        %v4733 = vpack.c.b16 %v4696, %v4695
        %v4734 = vpack.c.b16 %v4698, %v4697
        %v4735 = vpack.c.b16 %v4700, %v4699
        %v4736 = vpack.c.b16 %v4702, %v4701
        %v4737 = vpack.c.b16 %v4704, %v4703
        %v4738 = vpack.c.b16 %v4706, %v4705
        %4771 = vmatprep.subr.bf16.mxu0 0
        %4772 = vmatpush1.bf16.msra.mxu0 %v4707
        %4773 = vmatprep.subr.bf16.mxu0 0
        %4774 = vmatpush1.bf16.msra.mxu0 %v4708
        %4775 = vmatprep.subr.bf16.mxu0 0
        %4776 = vmatpush1.bf16.msra.mxu0 %v4709
        %4777 = vmatprep.subr.bf16.mxu0 0
        %4778 = vmatpush1.bf16.msra.mxu0 %v4710
        %4779 = vmatprep.subr.bf16.mxu0 0
        %4780 = vmatpush1.bf16.msra.mxu0 %v4711
        %4781 = vmatprep.subr.bf16.mxu0 0
        %4782 = vmatpush1.bf16.msra.mxu0 %v4712
        %4783 = vmatprep.subr.bf16.mxu0 0
        %4784 = vmatpush1.bf16.msra.mxu0 %v4713
        %4785 = vmatprep.subr.bf16.mxu0 0
        %4786 = vmatpush1.bf16.msra.mxu0 %v4714
        %4787 = vmatprep.subr.bf16.mxu0 0
        %4788 = vmatpush1.bf16.msra.mxu0 %v4715
        %4789 = vmatprep.subr.bf16.mxu0 0
        %4790 = vmatpush1.bf16.msra.mxu0 %v4716
        %4791 = vmatprep.subr.bf16.mxu0 0
        %4792 = vmatpush1.bf16.msra.mxu0 %v4717
        %4793 = vmatprep.subr.bf16.mxu0 0
        %4794 = vmatpush1.bf16.msra.mxu0 %v4718
        %4795 = vmatprep.subr.bf16.mxu0 0
        %4796 = vmatpush1.bf16.msra.mxu0 %v4719
        %4797 = vmatprep.subr.bf16.mxu0 0
        %4798 = vmatpush1.bf16.msra.mxu0 %v4720
        %4799 = vmatprep.subr.bf16.mxu0 0
        %4800 = vmatpush1.bf16.msra.mxu0 %v4721
        %4801 = vmatprep.subr.bf16.mxu0 0
        %4802 = vmatpush1.bf16.msra.mxu0 %v4722
        %4803 = vmatprep.mubr.bf16.mxu0 %v4504
        %4804 = vmatmul.mubr.bf16.gmra.mrb[0].mxu0 %v4503
        %v4805 = vpop.f32.mrb[0].mxu0
        %v4806 = vadd.f32 0.0, %v4805
        %v4807 = vpop.f32.mrb[0].mxu0
        %v4808 = vpop.f32.mrb[0].mxu0
        %v4809 = vadd.f32 0.0, %v4808
        %v4810 = vpop.f32.mrb[0].mxu0
        %4811 = vmatprep.mubr.bf16.mxu0 %v4508
        %4812 = vmatmul.mubr.bf16.gmra.mrb[0].mxu0 %v4507
        %v4813 = vpop.f32.mrb[0].mxu0
        %v4814 = vadd.f32 0.0, %v4813
        %v4815 = vpop.f32.mrb[0].mxu0
        %v4816 = vpop.f32.mrb[0].mxu0
        %v4817 = vadd.f32 0.0, %v4816
        %v4818 = vpop.f32.mrb[0].mxu0
        %4819 = vmatprep.mubr.bf16.mxu0 %v4512
        %4820 = vmatmul.mubr.bf16.gmra.mrb[0].mxu0 %v4511
        %v4821 = vpop.f32.mrb[0].mxu0
        %v4822 = vadd.f32 0.0, %v4821
        %v4823 = vpop.f32.mrb[0].mxu0
        %v4824 = vpop.f32.mrb[0].mxu0
        %v4825 = vpop.f32.mrb[0].mxu0
        %4826 = vdwg.mxu0
        %4827 = vmatprep.subr.bf16.mxu0 0
        %4828 = vmatpush1.bf16.msra.mxu0 %v4723
        %4829 = vmatprep.subr.bf16.mxu0 0
        %4830 = vmatpush1.bf16.msra.mxu0 %v4724
        %4831 = vmatprep.subr.bf16.mxu0 0
        %4832 = vmatpush1.bf16.msra.mxu0 %v4725
        %4833 = vmatprep.subr.bf16.mxu0 0
        %4834 = vmatpush1.bf16.msra.mxu0 %v4726
        %4835 = vmatprep.subr.bf16.mxu0 0
        %4836 = vmatpush1.bf16.msra.mxu0 %v4727
        %4837 = vmatprep.subr.bf16.mxu0 0
        %4838 = vmatpush1.bf16.msra.mxu0 %v4728
        %4839 = vmatprep.subr.bf16.mxu0 0
        %4840 = vmatpush1.bf16.msra.mxu0 %v4729
        %4841 = vmatprep.subr.bf16.mxu0 0
        %4842 = vmatpush1.bf16.msra.mxu0 %v4730
        %4843 = vmatprep.subr.bf16.mxu0 0
        %4844 = vmatpush1.bf16.msra.mxu0 %v4731
        %4845 = vmatprep.subr.bf16.mxu0 0
        %4846 = vmatpush1.bf16.msra.mxu0 %v4732
        %4847 = vmatprep.subr.bf16.mxu0 0
        %4848 = vmatpush1.bf16.msra.mxu0 %v4733
        %4849 = vmatprep.subr.bf16.mxu0 0
        %4850 = vmatpush1.bf16.msra.mxu0 %v4734
        %4851 = vmatprep.subr.bf16.mxu0 0
        %4852 = vmatpush1.bf16.msra.mxu0 %v4735
        %4853 = vmatprep.subr.bf16.mxu0 0
        %4854 = vmatpush1.bf16.msra.mxu0 %v4736
        %4855 = vmatprep.subr.bf16.mxu0 0
        %4856 = vmatpush1.bf16.msra.mxu0 %v4737
        %4857 = vmatprep.subr.bf16.mxu0 0
        %4858 = vmatpush1.bf16.msra.mxu0 %v4738
        %4859 = vmatprep.mubr.bf16.mxu0 %v4506
        %4860 = vmatmul.mubr.bf16.gmra.mrb[0].mxu0 %v4505
        %v4861 = vpop.f32.mrb[0].mxu0
        %v4862 = vadd.f32 %v4806, %v4861
        %v4863 = vpop.f32.mrb[0].mxu0
        %v4864 = vpop.f32.mrb[0].mxu0
        %v4865 = vadd.f32 %v4809, %v4864
        %v4866 = vpop.f32.mrb[0].mxu0
        %4867 = vmatprep.mubr.bf16.mxu0 %v4510
        %4868 = vmatmul.mubr.bf16.gmra.mrb[0].mxu0 %v4509
        %v4869 = vpop.f32.mrb[0].mxu0
        %v4870 = vadd.f32 %v4814, %v4869
        %v4871 = vpop.f32.mrb[0].mxu0
        %v4872 = vpop.f32.mrb[0].mxu0
        %v4873 = vadd.f32 %v4817, %v4872
        %v4874 = vpop.f32.mrb[0].mxu0
        %4875 = vmatprep.mubr.bf16.mxu0 %v4514
        %4876 = vmatmul.mubr.bf16.gmra.mrb[0].mxu0 %v4513
        %v4877 = vpop.f32.mrb[0].mxu0
        %v4878 = vadd.f32 %v4822, %v4877
        %v4879 = vpop.f32.mrb[0].mxu0
        %v4880 = vpop.f32.mrb[0].mxu0
        %v4881 = vpop.f32.mrb[0].mxu0
        %4882 = vdwg.mxu0
        %v4883 = vadd.f32 %v3898, %v4862
        %v4884 = vadd.f32 %v3899, %v4865
        %v4885 = vadd.f32 %v3900, %v4870
        %v4886 = vadd.f32 %v3901, %v4873
        %v4887 = vadd.f32 %v3902, %v4878
        %v4888 = vld [vmem:[%s1170] sm:$0x1]
        %v4890 = vlaneseq
        %v4891 = vshrl.u32 %v4890, 7
        %v4892 = vsub.s32 0, %v4891
        %v4893 = vrot.slane %v4888, %v4892
        %v4895 = vadd.f32 %v4883, %v4893
        %v4896 = vadd.f32 %v4884, %v4893
        %v4897 = vadd.f32 %v4885, %v4893
        %v4898 = vadd.f32 %v4886, %v4893
        %v4899 = vadd.f32 %v4887, %v4893
        %4900 = vst [vmem:[#allocation2] sm:$0xff] %v4895
        %4901 = vst [vmem:[#allocation2 + $0x8] sm:$0xff] %v4896
        %4902 = vst [vmem:[#allocation2 + $0x10] sm:$0xff] %v4897
        %4903 = vst [vmem:[#allocation2 + $0x18] sm:$0xff] %v4898
        %4904 = vst [vmem:[#allocation2 + $0x20] sm:$0x3] %v4899
        %p4905 = scmp.eq.s32.totalorder %s56, 1
        // Predicated region
        $region169: #{dino_ccg_forward.1} parent=115 // pred_check
          %p4906 = pneg %p4905
        $region170: #{dino_ccg_forward.1} parent=115 // pred_check_branch
          %4908 = sbr.rel (%p4906) target = $region172
        $region171: #{dino_ccg_forward.1} parent=115 // pred_region
          %v4909 = vsel %vm2939, %v4895, %v4897
          %v4910 = vld [vmem:[#allocation19] sm:$0x1]
          %v4911 = vld [vmem:[#allocation21] sm:$0x1]
          %v4912 = vsel %vm1380, %v4909, 0.0
          %4913 = vadd.xlane.f32.xlu0 %v4912
          %v4914 = vpop.xlane.xlu0 %4913
          %v4915 = vmul.f32 %v4914, %v1384
          %v4916 = vsub.f32 %v4909, %v4915
          %v4917 = vmul.f32 %v4916, %v4916
          %v4918 = vsel %vm1380, %v4917, 0.0
          %4919 = vadd.xlane.f32.xlu0 %v4918
          %v4920 = vpop.xlane.xlu0 %4919
          %v4921 = vmul.f32 %v4920, %v1384
          %v4922 = vadd.f32 %v4921, 1e-06
          %v4923 = vrsqrt.pop %v4922
          %v4924 = vmul.f32 %v4916, %v4923
          %v4926 = vlaneseq
          %v4927 = vshrl.u32 %v4926, 7
          %v4928 = vsub.s32 0, %v4927
          %v4929 = vrot.slane %v4910, %v4928
          %v4931 = vmul.f32 %v4924, %v4929
          %v4933 = vlaneseq
          %v4934 = vshrl.u32 %v4933, 7
          %v4935 = vsub.s32 0, %v4934
          %v4936 = vrot.slane %v4911, %v4935
          %v4938 = vadd.f32 %v4931, %v4936
          %v4939 = vmul.f32 %v4938, %v4938
          %v4940 = vsel %vm1380, %v4939, 0.0
          %4941 = vadd.xlane.f32.xlu0 %v4940
          %v4942 = vpop.xlane.xlu0 %4941
          %v4943 = vrsqrt.pop %v4942
          %v4944 = vmul.f32 %v4942, %v4943
          %vm4945 = vcmp.eq.f32.partialorder %v4942, inf
          %v4946 = vsel %vm4945, %v4942, %v4944
          %vm4947 = vcmp.eq.f32.partialorder %v4942, 0.0
          %v4948 = vand.u32 %v4942, 2147483648
          %v4949 = vsel %vm4947, %v4948, %v4946
          %v4950 = vmul.f32 %v4938, 16.0
          %v4951 = vmax.f32 %v4949, 1e-12
          %v4952 = vrcp.pop %v4951
          %v4953 = vmul.f32 %v4950, %v4952
          %4954 = vst [vmem:[#allocation25] sm:$0x3] %v4953
          %v4955 = vld [vmem:[#allocation22] sm:$0xff]
          %v4956 = vld [vmem:[#allocation22 + $0x8] sm:$0xff]
          %v4957 = vld [vmem:[#allocation22 + $0x10] sm:$0xff]
          %v4958 = vld [vmem:[#allocation22 + $0x18] sm:$0xff]
          %v4959 = vld [vmem:[#allocation22 + $0x20] sm:$0xff]
          %v4960 = vld [vmem:[#allocation22 + $0x28] sm:$0xff]
          %v4961 = vld [vmem:[#allocation22 + $0x30] sm:$0xff]
          %v4962 = vld [vmem:[#allocation22 + $0x38] sm:$0xff]
          %v4963 = vld [vmem:[#allocation22 + $0x40] sm:$0xff]
          %v4964 = vld [vmem:[#allocation22 + $0x48] sm:$0xff]
          %v4965 = vld [vmem:[#allocation22 + $0x50] sm:$0xff]
          %v4966 = vld [vmem:[#allocation22 + $0x58] sm:$0xff]
          %v4967 = vld [vmem:[#allocation22 + $0x60] sm:$0xff]
          %v4968 = vld [vmem:[#allocation22 + $0x68] sm:$0xff]
          %v4969 = vld [vmem:[#allocation22 + $0x70] sm:$0xff]
          %v4970 = vld [vmem:[#allocation22 + $0x78] sm:$0xff]
          %v4971 = vld [vmem:[%s20] sm:$0x1]
          %v4973 = vlaneseq
          %v4974 = vshrl.u32 %v4973, 7
          %v4975 = vsub.s32 0, %v4974
          %v4976 = vrot.slane %v4971, %v4975
          %4978 = vmatprep.subr.mxu0 0.0
          %4979 = vmatpush1.msra.mxu0 %v4955
          %4980 = vmatprep.subr.mxu0 0.0
          %4981 = vmatpush1.msra.mxu0 %v4956
          %4982 = vmatprep.subr.mxu0 0.0
          %4983 = vmatpush1.msra.mxu0 %v4957
          %4984 = vmatprep.subr.mxu0 0.0
          %4985 = vmatpush1.msra.mxu0 %v4958
          %4986 = vmatprep.subr.mxu0 0.0
          %4987 = vmatpush1.msra.mxu0 %v4959
          %4988 = vmatprep.subr.mxu0 0.0
          %4989 = vmatpush1.msra.mxu0 %v4960
          %4990 = vmatprep.subr.mxu0 0.0
          %4991 = vmatpush1.msra.mxu0 %v4961
          %4992 = vmatprep.subr.mxu0 0.0
          %4993 = vmatpush1.msra.mxu0 %v4962
          %4994 = vmatprep.subr.mxu0 0.0
          %4995 = vmatpush1.msra.mxu0 %v4963
          %4996 = vmatprep.subr.mxu0 0.0
          %4997 = vmatpush1.msra.mxu0 %v4964
          %4998 = vmatprep.subr.mxu0 0.0
          %4999 = vmatpush1.msra.mxu0 %v4965
          %5000 = vmatprep.subr.mxu0 0.0
          %5001 = vmatpush1.msra.mxu0 %v4966
          %5002 = vmatprep.subr.mxu0 0.0
          %5003 = vmatpush1.msra.mxu0 %v4967
          %5004 = vmatprep.subr.mxu0 0.0
          %5005 = vmatpush1.msra.mxu0 %v4968
          %5006 = vmatprep.subr.mxu0 0.0
          %5007 = vmatpush1.msra.mxu0 %v4969
          %5008 = vmatprep.subr.mxu0 0.0
          %5009 = vmatpush1.msra.mxu0 %v4970
          %5010 = vmatprep.subr.mxu0 0.0
          %5011 = vmatpush1.msra.mxu0 0.0
          %5012 = vmatprep.subr.mxu0 0.0
          %5013 = vmatpush1.msra.mxu0 0.0
          %5014 = vmatprep.subr.mxu0 0.0
          %5015 = vmatpush1.msra.mxu0 0.0
          %5016 = vmatprep.subr.mxu0 0.0
          %5017 = vmatpush1.msra.mxu0 0.0
          %5018 = vmatprep.subr.mxu0 0.0
          %5019 = vmatpush1.msra.mxu0 0.0
          %5020 = vmatprep.subr.mxu0 0.0
          %5021 = vmatpush1.msra.mxu0 0.0
          %5022 = vmatprep.subr.mxu0 0.0
          %5023 = vmatpush1.msra.mxu0 0.0
          %5024 = vmatprep.subr.mxu0 0.0
          %5025 = vmatpush1.msra.mxu0 0.0
          %5026 = vmatprep.subr.mxu0 0.0
          %5027 = vmatpush1.msra.mxu0 0.0
          %5028 = vmatprep.subr.mxu0 0.0
          %5029 = vmatpush1.msra.mxu0 0.0
          %5030 = vmatprep.subr.mxu0 0.0
          %5031 = vmatpush1.msra.mxu0 0.0
          %5032 = vmatprep.subr.mxu0 0.0
          %5033 = vmatpush1.msra.mxu0 0.0
          %5034 = vmatprep.subr.mxu0 0.0
          %5035 = vmatpush1.msra.mxu0 0.0
          %5036 = vmatprep.subr.mxu0 0.0
          %5037 = vmatpush1.msra.mxu0 0.0
          %5038 = vmatprep.subr.mxu0 0.0
          %5039 = vmatpush1.msra.mxu0 0.0
          %5040 = vmatprep.subr.mxu0 0.0
          %5041 = vmatpush1.msra.mxu0 0.0
          %5042 = vmatprep.mubr.f32.mxu0 0.0
          %5043 = vmatmul.mubr.f32.gmra.mrb[0].mxu0 %v4953
          %v5044 = vpop.f32.mrb[0].mxu0
          %v5045 = vadd.f32 %v4976, %v5044
          %v5046 = vpop.f32.mrb[0].mxu0
          %5047 = vdwg.mxu0
          %5048 = vst [vmem:[#allocation24] sm:$0x3] %v5045
          %s5049 = sld [smem:[#allocation3]]
          %v5050 = vld [vmem:[%s22] sm:$0x1]
          %v5051 = vstv %s5049
          %v5052 = vadd.f32 %v5051, %v5050
          %v5053 = vmul.f32 %v5052, %v5052
          %v5054 = vadd.f32 %v5053, 0.1
          %5055 = vst [vmem:[#allocation28] sm:$0x1] %v5054
          %v5056 = vld [vmem:[%s21] sm:$0xff]
          %v5057 = vld [vmem:[%s21 + $0x8] sm:$0x3]
          %v5059 = vlaneseq
          %v5060 = vshrl.u32 %v5059, 7
          %v5061 = vsub.s32 0, %v5060
          %v5062 = vrot.slane %v5054, %v5061
          %v5064 = vmul.f32 %v5056, %v5062
          %v5065 = vmul.f32 %v5057, %v5062
          %5066 = vst [vmem:[#allocation27] sm:$0xff] %v5064
          %5067 = vst [vmem:[#allocation27 + $0x8] sm:$0x3] %v5065
        $region172: #{dino_ccg_forward.1} parent=115 // pred_fallthru
          _
        // Predicated region
        $region173: #{dino_ccg_forward.1} parent=115 // pred_check
          %p5068 = pneg %p633
        $region174: #{dino_ccg_forward.1} parent=115 // pred_check_branch
          %5070 = sbr.rel (%p5068) target = $region176
        $region175: #{dino_ccg_forward.1} parent=115 // pred_region
          %s5072 = ssub.s32 32, 32
          %5073 = vsyncadd [#allocation6], %s5072
          %s5075 = sshll.u32 [#allocation24], 4
          %s5076 = int_to_ptr.vmem [resolvable:$true] %s5075
          %5078 = dma.vmem_to_hbm [thread:$0]  %s5076, 32, %s24, [#allocation6]
        $region176: #{dino_ccg_forward.1} parent=115 // pred_fallthru
          _
        // Predicated region
        $region177: #{dino_ccg_forward.1} parent=115 // pred_check
          %p5079 = pneg %p654
        $region178: #{dino_ccg_forward.1} parent=115 // pred_check_branch
          %5081 = sbr.rel (%p5079) target = $region180
        $region179: #{dino_ccg_forward.1} parent=115 // pred_region
          %s5083 = ssub.s32 32, 32
          %5084 = vsyncadd [#allocation26], %s5083
          %s5086 = sshll.u32 [#allocation25], 4
          %s5087 = int_to_ptr.vmem [resolvable:$true] %s5086
          %5089 = dma.vmem_to_hbm [thread:$0]  %s5087, 32, %s25, [#allocation26]
        $region180: #{dino_ccg_forward.1} parent=115 // pred_fallthru
          _
        // Predicated region
        $region181: #{dino_ccg_forward.1} parent=115 // pred_check
          %p5090 = pneg %p675
        $region182: #{dino_ccg_forward.1} parent=115 // pred_check_branch
          %5092 = sbr.rel (%p5090) target = $region184
        $region183: #{dino_ccg_forward.1} parent=115 // pred_region
          %s5094 = ssub.s32 256, 256
          %5095 = vsyncadd [#allocation26], %s5094
          %s5096 = sshll.u32 [#allocation27], 4
          %s5097 = int_to_ptr.vmem [resolvable:$true] %s5096
          %5102 = dma.vmem_to_hbm [thread:$0]  %s5097, 256, %s26, [#allocation26], 128, 128, 8
        $region184: #{dino_ccg_forward.1} parent=115 // pred_fallthru
          _
        // Predicated region
        $region185: #{dino_ccg_forward.1} parent=115 // pred_check
          %p5103 = pneg %p696
        $region186: #{dino_ccg_forward.1} parent=115 // pred_check_branch
          %5105 = sbr.rel (%p5103) target = $region188
        $region187: #{dino_ccg_forward.1} parent=115 // pred_region
          %s5107 = ssub.s32 16, 16
          %5108 = vsyncadd [#allocation29], %s5107
          %s5110 = sshll.u32 [#allocation28], 4
          %s5111 = int_to_ptr.vmem [resolvable:$true] %s5110
          %5113 = dma.vmem_to_hbm [thread:$0]  %s5111, 16, %s27, [#allocation29]
        $region188: #{dino_ccg_forward.1} parent=115 // pred_fallthru
          _
        // Predicated region
        $region189: #{dino_ccg_forward.1} parent=115 // pred_check
          %p5114 = pneg %p633
        $region190: #{dino_ccg_forward.1} parent=115 // pred_check_branch
          %5116 = sbr.rel (%p5114) target = $region192
        $region191: #{dino_ccg_forward.1} parent=115 // pred_region
          %5117 = dma.done [#allocation6], 32
        $region192: #{dino_ccg_forward.1} parent=115 // pred_fallthru
          _
        // Predicated region
        $region193: #{dino_ccg_forward.1} parent=115 // pred_check
          %p5118 = pneg %p654
        $region194: #{dino_ccg_forward.1} parent=115 // pred_check_branch
          %5120 = sbr.rel (%p5118) target = $region196
        $region195: #{dino_ccg_forward.1} parent=115 // pred_region
          %5121 = dma.done [#allocation26], 32
        $region196: #{dino_ccg_forward.1} parent=115 // pred_fallthru
          _
        // Predicated region
        $region197: #{dino_ccg_forward.1} parent=115 // pred_check
          %p5122 = pneg %p675
        $region198: #{dino_ccg_forward.1} parent=115 // pred_check_branch
          %5124 = sbr.rel (%p5122) target = $region200
        $region199: #{dino_ccg_forward.1} parent=115 // pred_region
          %5125 = dma.done [#allocation26], 256
        $region200: #{dino_ccg_forward.1} parent=115 // pred_fallthru
          _
        // Predicated region
        $region201: #{dino_ccg_forward.1} parent=115 // pred_check
          %p5126 = pneg %p696
        $region202: #{dino_ccg_forward.1} parent=115 // pred_check_branch
          %5128 = sbr.rel (%p5126) target = $region204
        $region203: #{dino_ccg_forward.1} parent=115 // pred_region
          %5129 = dma.done [#allocation29], 16
        $region204: #{dino_ccg_forward.1} parent=115 // pred_fallthru
          _
      $region116: #{dino_ccg_forward.1} parent=5 // pred_fallthru
        _
      %p5130 = scmp.le.s32.totalorder 2, %s51
      // Predicated region
      $region205: #{dino_ccg_forward.1} parent=5 // pred_check
        %p5131 = pneg %p5130
      $region206: #{dino_ccg_forward.1} parent=5 // pred_check_branch
        %5133 = sbr.rel (%p5131) target = $region208
      $region207: #{dino_ccg_forward.1} parent=5 // pred_region
        %s5134 = ssub.s32 %s51, 2
      $region208: #{dino_ccg_forward.1} parent=5 // pred_fallthru
        _
    $region6: #{dino_ccg_forward.1} parent=1 // loop_footer
      %s55 = sadd.s32 1, %s51
    $region7: #{dino_ccg_forward.1} parent=1 // loop_footer_branch
      %50 = sbr.rel target = $region3
    $region8: #{dino_ccg_forward.1} parent=1 // loop_exit
      _
    %5135 = vsyncpa [#allocation5], 1
    %s5136 = scalar_lea.sflag [#allocation5], 1
    %5137 = vsyncpa %s5136, 1
    %5138 = vsyncpa [#allocation8], 1
    %5139 = vsyncpa [#allocation11], 1
    %s5140 = scalar_lea.sflag [#allocation11], 1
    %5141 = vsyncpa %s5140, 1
    %5142 = vsyncpa [#allocation14], 1
    %s5143 = scalar_lea.sflag [#allocation14], 1
    %5144 = vsyncpa %s5143, 1
    %5145 = vsyncpa [#allocation17], 1
    %s5146 = scalar_lea.sflag [#allocation17], 1
    %5147 = vsyncpa %s5146, 1
    %5148 = vsyncpa [#allocation20], 1
    %5149 = vsyncpa [#allocation23], 1
    %5150 = vsyncpa [#allocation6], 1
    %s5151 = scalar_lea.sflag [#allocation6], 1
    %5152 = vsyncpa %s5151, 1
    %5153 = vsyncpa [#allocation26], 1
    %5154 = vsyncpa [#allocation29], 1

</llo_original>
